<compile_context>
chip_gen: v6e
topology: v6e:2x2x1
jax: 0.10.0
libtpu: 0.0.40
codegen_flags: <defaults>
</compile_context>

<pallas_src>
import functools
import math

import jax
import jax.numpy as jnp
from jax import lax
from jax.experimental import pallas as pl
from jax.experimental.pallas import tpu as pltpu

EPS = 1e-5  # LayerNorm eps (module default layernorm_eps=1e-05)


# ---------------------------------------------------------------- helpers ---
def _ln(x, w, b):
    """torch.nn.LayerNorm over the last dim (biased variance)."""
    mu = jnp.mean(x, axis=-1, keepdims=True)
    var = jnp.mean((x - mu) ** 2, axis=-1, keepdims=True)
    return (x - mu) * lax.rsqrt(var + EPS) * w + b


def _gelu(x):
    """Exact GELU (torch nn.GELU default, erf-based)."""
    return 0.5 * x * (1.0 + lax.erf(x / math.sqrt(2.0)))


# ----------------------------------------------------------------- kernel ---
def vit_kernel(patches_ref, convw_ref, addend_ref, lnpre_w, lnpre_b,
               ln1w, ln1b, wqkv, bqkv, wo, bo,
               ln2w, ln2b, wfc, bfc, wpr, bpr,
               lnpost_w, lnpost_b, proj_ref,
               o_ref, tok, attn_sc, *, n_head, s_real):
    """One (batch-block, layer) grid step of the fully fused ViT.

    tok (VMEM scratch, f32 [Bb, S_pad, D]) carries activations across the
    'arbitrary' layer axis.  attn_sc (bf16 [Bb, S_pad, D]) collects per-head
    PV results at 128-aligned lane offsets.  All MXU inputs are bf16 with
    f32 accumulation.
    """
    l = pl.program_id(1)
    bb, s_pad, d = tok.shape
    hd = d // n_head

    # ---- fused patch-embed + cls/pos addend + ln_pre at the first step ----
    @pl.when(l == 0)
    def _():
        pe = jnp.dot(patches_ref[...].reshape(bb * s_pad, -1), convw_ref[...],
                     preferred_element_type=jnp.float32)
        pe = pe.reshape(bb, s_pad, d) + addend_ref[...]
        tok[...] = _ln(pe, lnpre_w[...], lnpre_b[...])

    x3 = tok[...]                              # (Bb, S_pad, D) f32
    xf = x3.reshape(bb * s_pad, d)             # leading-dim merge (layout free)

    # -------- attention branch: x + out_proj(MHA(ln_1(x))) -----------------
    h1 = _ln(xf, ln1w[0], ln1b[0]).astype(jnp.bfloat16)
    # single lane-dense QKV projection; 1/sqrt(hd) folded into the Q weight
    # columns (and Q bias third) at init time.
    qkv = jnp.dot(h1, wqkv[0], preferred_element_type=jnp.float32) + bqkv[0]
    qkv = qkv.reshape(bb, s_pad, 3 * d)

    if s_real < s_pad:                         # static: mask padded key cols
        kmask = lax.broadcasted_iota(jnp.int32, (1, s_pad, s_pad), 2) < s_real
    else:
        kmask = None

    # Per-head loop; each head's PV result is written into a 128-aligned lane
    # slab of the bf16 scratch so only one head's vregs stay live.
    # TODO(synk): for head_dim not a multiple of 128, pre-permute w_qkv
    #             heads-major at init and use one batched dot_general instead.
    for h in range(n_head):
        q = qkv[:, :, h * hd:(h + 1) * hd].astype(jnp.bfloat16)
        k = qkv[:, :, d + h * hd:d + (h + 1) * hd].astype(jnp.bfloat16)
        v = qkv[:, :, 2 * d + h * hd:2 * d + (h + 1) * hd].astype(jnp.bfloat16)
        s = jnp.einsum('bqd,bkd->bqk', q, k,
                       preferred_element_type=jnp.float32)     # (Bb, S, S)
        if kmask is not None:
            s = jnp.where(kmask, s, -1e30)
        s = s - jnp.max(s, axis=-1, keepdims=True)
        p = jnp.exp(s)
        p = p * pl.reciprocal(jnp.sum(p, axis=-1, keepdims=True), approx=True)
        pv = jnp.einsum('bqk,bkd->bqd', p.astype(jnp.bfloat16), v,
                        preferred_element_type=jnp.float32)    # (Bb, S, hd)
        attn_sc[:, :, h * hd:(h + 1) * hd] = pv.astype(jnp.bfloat16)

    attn = attn_sc[...].reshape(bb * s_pad, d)  # lane-dense (M, D) bf16
    xf = xf + jnp.dot(attn, wo[0], preferred_element_type=jnp.float32) + bo[0]

    # -------- MLP branch: x + c_proj(gelu(c_fc(ln_2(x)))) ------------------
    h2 = _ln(xf, ln2w[0], ln2b[0]).astype(jnp.bfloat16)
    m = jnp.dot(h2, wfc[0], preferred_element_type=jnp.float32) + bfc[0]
    m = _gelu(m).astype(jnp.bfloat16)
    xf = xf + jnp.dot(m, wpr[0], preferred_element_type=jnp.float32) + bpr[0]
    tok[...] = xf.reshape(bb, s_pad, d)

    # -------- head: ln_post + proj of CLS token (last layer only) ----------
    @pl.when(l == pl.num_programs(1) - 1)
    def _():
        cls = xf.reshape(bb, s_pad, d)[:, 0, :]                 # (Bb, D)
        cls = _ln(cls, lnpost_w[...], lnpost_b[...]).astype(jnp.bfloat16)
        o_ref[...] = jnp.dot(cls, proj_ref[...],
                             preferred_element_type=jnp.float32
                             ).reshape(bb, 1, -1)


# --------------------------------------------------------------- wrappers ---
def _nbytes(shape, dtype):
    return int(math.prod(shape)) * jnp.dtype(dtype).itemsize


def fused_vit(patches_aug, addend, params, *, n_head, s_real, batch_block):
    B_pad, S_pad, Kp = patches_aug.shape
    D = params["conv_w"].shape[1]
    lp = params["layers"]
    L = lp["w_qkv"].shape[0]
    d_mlp = lp["w_fc"].shape[2]
    O = params["proj"].shape[1]
    Bb = batch_block

    layer3 = lambda shape: pl.BlockSpec(shape, lambda b, l: (l, 0, 0))
    const2 = lambda shape: pl.BlockSpec(shape, lambda b, l: (0, 0))

    block_list = [
        ((Bb, S_pad, Kp), jnp.bfloat16),              # patches (per batch block)
        ((Kp, D), jnp.bfloat16), ((S_pad, D), jnp.float32),
        ((1, D), jnp.float32), ((1, D), jnp.float32),
        ((1, 1, D), jnp.float32), ((1, 1, D), jnp.float32),
        ((1, D, 3 * D), jnp.bfloat16), ((1, 1, 3 * D), jnp.float32),
        ((1, D, D), jnp.bfloat16), ((1, 1, D), jnp.float32),
        ((1, 1, D), jnp.float32), ((1, 1, D), jnp.float32),
        ((1, D, d_mlp), jnp.bfloat16), ((1, 1, d_mlp), jnp.float32),
        ((1, d_mlp, D), jnp.bfloat16), ((1, 1, D), jnp.float32),
        ((1, D), jnp.float32), ((1, D), jnp.float32),
        ((D, O), jnp.bfloat16),
        ((Bb, 1, O), jnp.float32),                    # output block
    ]
    scratch_list = [((Bb, S_pad, D), jnp.float32), ((Bb, S_pad, D), jnp.bfloat16)]
    # double-buffered pipeline blocks + resident scratch + headroom; capped so
    # the same tiling fits v7x's 64 MiB/TC VMEM.
    vmem_limit = (2 * sum(_nbytes(s, d) for s, d in block_list)
                  + sum(_nbytes(s, d) for s, d in scratch_list))
    vmem_limit = min(max(int(vmem_limit * 1.5) + (8 << 20), 16 << 20), 56 << 20)

    flops = (B_pad * L * S_pad * (8 * D * D + 4 * S_pad * D + 4 * D * d_mlp)
             + B_pad * S_pad * 2 * Kp * D + B_pad * 2 * D * O)
    transcendentals = B_pad * L * (n_head * S_pad * S_pad + S_pad * d_mlp)
    bytes_accessed = ((B_pad // Bb) * L * 2 * (4 * D * D + 2 * D * d_mlp)
                      + B_pad * S_pad * Kp * 2 + B_pad * O * 4
                      + S_pad * D * 4 + 2 * Kp * D)

    in_specs = [
        pl.BlockSpec((Bb, S_pad, Kp), lambda b, l: (b, 0, 0)),   # patches
        const2((Kp, D)),                                         # conv1 weight
        const2((S_pad, D)),                                      # cls+pos addend
        const2((1, D)), const2((1, D)),                          # ln_pre
        layer3((1, 1, D)), layer3((1, 1, D)),                    # ln_1
        layer3((1, D, 3 * D)), layer3((1, 1, 3 * D)),            # in_proj
        layer3((1, D, D)), layer3((1, 1, D)),                    # out_proj
        layer3((1, 1, D)), layer3((1, 1, D)),                    # ln_2
        layer3((1, D, d_mlp)), layer3((1, 1, d_mlp)),            # c_fc
        layer3((1, d_mlp, D)), layer3((1, 1, D)),                # c_proj
        const2((1, D)), const2((1, D)),                          # ln_post
        const2((D, O)),                                          # proj
    ]

    out = pl.pallas_call(
        functools.partial(vit_kernel, n_head=n_head, s_real=s_real),
        out_shape=jax.ShapeDtypeStruct((B_pad, 1, O), jnp.float32),
        grid=(B_pad // Bb, L),
        in_specs=in_specs,
        out_specs=pl.BlockSpec((Bb, 1, O), lambda b, l: (b, 0, 0)),
        scratch_shapes=[pltpu.VMEM((Bb, S_pad, D), jnp.float32),
                        pltpu.VMEM((Bb, S_pad, D), jnp.bfloat16)],
        compiler_params=pltpu.CompilerParams(
            dimension_semantics=("parallel", "arbitrary"),
            vmem_limit_bytes=vmem_limit),
        cost_estimate=pl.CostEstimate(flops=int(flops),
                                      transcendentals=int(transcendentals),
                                      bytes_accessed=int(bytes_accessed)),
    )(patches_aug, params["conv_w"], addend,
      params["ln_pre_w"], params["ln_pre_b"],
      lp["ln1_w"], lp["ln1_b"], lp["w_qkv"], lp["b_qkv"],
      lp["w_o"], lp["b_o"], lp["ln2_w"], lp["ln2_b"],
      lp["w_fc"], lp["b_fc"], lp["w_pr"], lp["b_pr"],
      params["ln_post_w"], params["ln_post_b"], params["proj"])
    return out[:, 0, :]


# ----------------------------------------------------------- params / glue ---
def init_params(key, *, patch_length, patch_size, width, layers, heads,
                d_mlp, output_dim, in_ch=3):
    D = width
    hd = D // heads
    sc_attn = 1.0 / math.sqrt(hd)          # folded into Q projection at init
    scale = width ** (-0.5)
    keys = jax.random.split(key, 8 + 8 * layers)
    ki = iter(keys)

    def nrm(shape, std=0.02):
        return std * jax.random.normal(next(ki), shape, jnp.float32)

    params = {
        # conv1 weight already unfolded+transposed: [C*p*p, width], bf16
        "conv_w": nrm((in_ch * patch_size * patch_size, D)).astype(jnp.bfloat16),
        "class_emb": scale * jax.random.normal(next(ki), (1, D), jnp.float32),
        "pos_emb": scale * jax.random.normal(next(ki), (patch_length + 1, D),
                                             jnp.float32),
        "ln_pre_w": jnp.ones((1, D), jnp.float32),
        "ln_pre_b": jnp.zeros((1, D), jnp.float32),
        "ln_post_w": jnp.ones((1, D), jnp.float32),
        "ln_post_b": jnp.zeros((1, D), jnp.float32),
        "proj": (scale * jax.random.normal(next(ki), (D, output_dim),
                                           jnp.float32)).astype(jnp.bfloat16),
    }

    wqkv, bqkv, wo, wfc, wpr = [], [], [], [], []
    for _ in range(layers):
        wq = nrm((D, D)) * sc_attn           # attention scale folded here ...
        wk = nrm((D, D))
        wv = nrm((D, D))
        wqkv.append(jnp.concatenate([wq, wk, wv], axis=1))   # (D, 3D), (in,out)
        # ... and into the Q third of the in_proj bias (zeros here, but a real
        # checkpoint with nonzero bias stays correct).
        bq = jnp.zeros((1, D), jnp.float32) * sc_attn
        bqkv.append(jnp.concatenate(
            [bq, jnp.zeros((1, D), jnp.float32), jnp.zeros((1, D), jnp.float32)],
            axis=1))
        wo.append(nrm((D, D)))
        wfc.append(nrm((D, d_mlp)))
        wpr.append(nrm((d_mlp, D)))

    L = layers
    params["layers"] = {
        "ln1_w": jnp.ones((L, 1, D), jnp.float32),
        "ln1_b": jnp.zeros((L, 1, D), jnp.float32),
        "w_qkv": jnp.stack(wqkv).astype(jnp.bfloat16),
        "b_qkv": jnp.stack(bqkv),
        "w_o": jnp.stack(wo).astype(jnp.bfloat16),
        "b_o": jnp.zeros((L, 1, D), jnp.float32),
        "ln2_w": jnp.ones((L, 1, D), jnp.float32),
        "ln2_b": jnp.zeros((L, 1, D), jnp.float32),
        "w_fc": jnp.stack(wfc).astype(jnp.bfloat16),
        "b_fc": jnp.zeros((L, 1, d_mlp), jnp.float32),
        "w_pr": jnp.stack(wpr).astype(jnp.bfloat16),
        "b_pr": jnp.zeros((L, 1, D), jnp.float32),
    }
    return params


def visual_transformer_forward(x, params, *, patch_length, patch_size, heads,
                               batch_block=2):
    """x: NCHW float32 [B, 3, H, W] -> pooled_out [B, output_dim]."""
    B, C, H, W = x.shape
    p = patch_size
    gh, gw = H // p, W // p
    npatch = gh * gw
    D = params["conv_w"].shape[1]
    S_real = npatch + 1
    S_pad = ((S_real + 15) // 16) * 16       # bf16 packs 16 rows per sublane tile

    Bb = max(1, min(batch_block, B))
    B_pad = ((B + Bb - 1) // Bb) * Bb        # pad batch to a multiple of Bb

    # unfold into patches (glue): [B, C, gh, p, gw, p] -> [B, np, C*p*p],
    # zero row at the front (CLS slot), zero seq padding rows, zero batch
    # padding, then bf16 cast in the wrapper (halves input DMA bytes).
    patches = (x.reshape(B, C, gh, p, gw, p)
               .transpose(0, 2, 4, 1, 3, 5)
               .reshape(B, npatch, C * p * p))
    patches_aug = jnp.pad(
        patches, ((0, B_pad - B), (1, S_pad - S_real), (0, 0))
    ).astype(jnp.bfloat16)

    # positional embedding (torch tile/overwrite logic; here
    # cur_patch_length == patch_length + 1 so it reduces to pos_emb itself).
    # TODO(synk): the torch tile/overwrite only type-checks when
    #             cur_patch_length == patch_length + 1; re-derive if S changes.
    pos = jnp.tile(params["pos_emb"][-1:], (S_real, 1))
    n = min(patch_length + 1, S_real)
    pos = pos.at[:n].set(params["pos_emb"][:n])

    # additive embedding: row 0 = cls + pos[0], rows 1..np = pos, padding = 0
    addend = jnp.zeros((S_pad, D), jnp.float32)
    addend = addend.at[0].set(params["class_emb"][0] + pos[0])
    addend = addend.at[1:S_real].set(pos[1:])

    # emb_dropout / attention & mlp dropouts are identity in eval mode.
    out = fused_vit(patches_aug, addend, params, n_head=heads,
                    s_real=S_real, batch_block=Bb)           # [B_pad, output_dim]
    return out[:B]


# ----------------------------------------------------------------- driver ---
if __name__ == "__main__":
    # small config: image 16x16, patch 4 -> 16 patches (S=17, padded to 32),
    # width 256, 2 heads (head_dim 128, lane-aligned), 2 layers, mlp 512,
    # output_dim 128, batch 4 blocked as 2 blocks of Bb=2 (keeps >= 2 blocks
    # on the parallel axis for v7x megacore).
    PATCH_SIZE = 4
    PATCH_LENGTH = 16
    WIDTH = 256
    LAYERS = 2
    HEADS = 2
    D_MLP = 512
    OUTPUT_DIM = 128
    B, H, W = 4, 16, 16

    key = jax.random.PRNGKey(0)
    k_x, k_p = jax.random.split(key)
    x = jax.random.normal(k_x, (B, 3, H, W), dtype=jnp.float32)

    params = init_params(k_p, patch_length=PATCH_LENGTH, patch_size=PATCH_SIZE,
                         width=WIDTH, layers=LAYERS, heads=HEADS,
                         d_mlp=D_MLP, output_dim=OUTPUT_DIM)

    out = visual_transformer_forward(x, params, patch_length=PATCH_LENGTH,
                                     patch_size=PATCH_SIZE, heads=HEADS,
                                     batch_block=2)
    out = jax.block_until_ready(out)
    assert out.shape == (B, OUTPUT_DIM)
    assert bool(jnp.all(jnp.isfinite(out)))
    print("KERNEL_OK")
</pallas_src>

<mosaic_0001>
module attributes {stable_mosaic.version = 11 : i64} {
  func.func @vit_kernel(%arg0: i32, %arg1: i32, %arg2: memref<2x32x48xbf16, #tpu.memory_space<vmem>>, %arg3: memref<48x256xbf16, #tpu.memory_space<vmem>>, %arg4: memref<32x256xf32, #tpu.memory_space<vmem>>, %arg5: memref<1x256xf32, #tpu.memory_space<vmem>>, %arg6: memref<1x256xf32, #tpu.memory_space<vmem>>, %arg7: memref<1x1x256xf32, #tpu.memory_space<vmem>>, %arg8: memref<1x1x256xf32, #tpu.memory_space<vmem>>, %arg9: memref<1x256x768xbf16, #tpu.memory_space<vmem>>, %arg10: memref<1x1x768xf32, #tpu.memory_space<vmem>>, %arg11: memref<1x256x256xbf16, #tpu.memory_space<vmem>>, %arg12: memref<1x1x256xf32, #tpu.memory_space<vmem>>, %arg13: memref<1x1x256xf32, #tpu.memory_space<vmem>>, %arg14: memref<1x1x256xf32, #tpu.memory_space<vmem>>, %arg15: memref<1x256x512xbf16, #tpu.memory_space<vmem>>, %arg16: memref<1x1x512xf32, #tpu.memory_space<vmem>>, %arg17: memref<1x512x256xbf16, #tpu.memory_space<vmem>>, %arg18: memref<1x1x256xf32, #tpu.memory_space<vmem>>, %arg19: memref<1x256xf32, #tpu.memory_space<vmem>>, %arg20: memref<1x256xf32, #tpu.memory_space<vmem>>, %arg21: memref<256x128xbf16, #tpu.memory_space<vmem>>, %arg22: memref<2x1x128xf32, #tpu.memory_space<vmem>>, %arg23: memref<2x32x256xf32, #tpu.memory_space<vmem>>, %arg24: memref<2x32x256xbf16, #tpu.memory_space<vmem>>) attributes {dimension_semantics = [#tpu.dimension_semantics<parallel>, #tpu.dimension_semantics<arbitrary>], iteration_bounds = array<i64: 2, 2>, scalar_prefetch = 0 : i64, scratch_operands = 2 : i64, tpu.core_type = #tpu.core_type<tc>, window_params = [{transform_indices = @transform_0, window_bounds = array<i64: 2, 32, 48>}, {pipeline_mode = #tpu.pipeline_mode<synchronous>, transform_indices = @transform_1, window_bounds = array<i64: 48, 256>}, {pipeline_mode = #tpu.pipeline_mode<synchronous>, transform_indices = @transform_2, window_bounds = array<i64: 32, 256>}, {pipeline_mode = #tpu.pipeline_mode<synchronous>, transform_indices = @transform_3, window_bounds = array<i64: 1, 256>}, {pipeline_mode = #tpu.pipeline_mode<synchronous>, transform_indices = @transform_4, window_bounds = array<i64: 1, 256>}, {transform_indices = @transform_5, window_bounds = array<i64: 1, 1, 256>}, {transform_indices = @transform_6, window_bounds = array<i64: 1, 1, 256>}, {transform_indices = @transform_7, window_bounds = array<i64: 1, 256, 768>}, {transform_indices = @transform_8, window_bounds = array<i64: 1, 1, 768>}, {transform_indices = @transform_9, window_bounds = array<i64: 1, 256, 256>}, {transform_indices = @transform_10, window_bounds = array<i64: 1, 1, 256>}, {transform_indices = @transform_11, window_bounds = array<i64: 1, 1, 256>}, {transform_indices = @transform_12, window_bounds = array<i64: 1, 1, 256>}, {transform_indices = @transform_13, window_bounds = array<i64: 1, 256, 512>}, {transform_indices = @transform_14, window_bounds = array<i64: 1, 1, 512>}, {transform_indices = @transform_15, window_bounds = array<i64: 1, 512, 256>}, {transform_indices = @transform_16, window_bounds = array<i64: 1, 1, 256>}, {pipeline_mode = #tpu.pipeline_mode<synchronous>, transform_indices = @transform_17, window_bounds = array<i64: 1, 256>}, {pipeline_mode = #tpu.pipeline_mode<synchronous>, transform_indices = @transform_18, window_bounds = array<i64: 1, 256>}, {pipeline_mode = #tpu.pipeline_mode<synchronous>, transform_indices = @transform_19, window_bounds = array<i64: 256, 128>}, {transform_indices = @transform_20, window_bounds = array<i64: 2, 1, 128>}]} {
    %c0_i32 = arith.constant 0 : i32
    %0 = arith.cmpi eq, %arg1, %c0_i32 : i32
    %1 = arith.extui %0 : i1 to i32
    %c0_i32_0 = arith.constant 0 : i32
    %2 = arith.cmpi ne, %1, %c0_i32_0 : i32
    scf.if %2 {
      %c0_77 = arith.constant 0 : index
      %c0_78 = arith.constant 0 : index
      %c0_79 = arith.constant 0 : index
      %159 = vector.load %arg2[%c0_77, %c0_78, %c0_79] : memref<2x32x48xbf16, #tpu.memory_space<vmem>>, vector<2x32x48xbf16>
      %160 = vector.shape_cast %159 : vector<2x32x48xbf16> to vector<64x48xbf16>
      %c0_80 = arith.constant 0 : index
      %c0_81 = arith.constant 0 : index
      %161 = vector.load %arg3[%c0_80, %c0_81] : memref<48x256xbf16, #tpu.memory_space<vmem>>, vector<48x256xbf16>
      %cst_82 = arith.constant dense<0.000000e+00> : vector<64x256xf32>
      %162 = tpu.matmul %160, %161, %cst_82 {dimension_numbers = #tpu.dot_dimension_numbers<[1], [0], [0], [1], [0, 0, 1, 1], [], []>} : vector<64x48xbf16>, vector<48x256xbf16>, vector<64x256xf32> -> vector<64x256xf32>
      %163 = vector.shape_cast %162 : vector<64x256xf32> to vector<2x32x256xf32>
      %c0_83 = arith.constant 0 : index
      %c0_84 = arith.constant 0 : index
      %164 = vector.load %arg4[%c0_83, %c0_84] : memref<32x256xf32, #tpu.memory_space<vmem>>, vector<32x256xf32>
      %165 = vector.shape_cast %164 : vector<32x256xf32> to vector<1x32x256xf32>
      %166 = vector.broadcast %165 : vector<1x32x256xf32> to vector<2x32x256xf32>
      %167 = arith.addf %163, %166 : vector<2x32x256xf32>
      %c0_85 = arith.constant 0 : index
      %c0_86 = arith.constant 0 : index
      %168 = vector.load %arg5[%c0_85, %c0_86] : memref<1x256xf32, #tpu.memory_space<vmem>>, vector<1x256xf32>
      %c0_87 = arith.constant 0 : index
      %c0_88 = arith.constant 0 : index
      %169 = vector.load %arg6[%c0_87, %c0_88] : memref<1x256xf32, #tpu.memory_space<vmem>>, vector<1x256xf32>
      %cst_89 = arith.constant dense<0.000000e+00> : vector<2x32xf32>
      %170 = vector.multi_reduction <add>, %167, %cst_89 [2] : vector<2x32x256xf32> to vector<2x32xf32>
      %171 = vector.shape_cast %170 : vector<2x32xf32> to vector<2x32x1xf32>
      %cst_90 = arith.constant 2.560000e+02 : f32
      %172 = vector.broadcast %cst_90 : f32 to vector<2x32x1xf32>
      %173 = arith.divf %171, %172 : vector<2x32x1xf32>
      %174 = vector.broadcast %173 : vector<2x32x1xf32> to vector<2x32x256xf32>
      %175 = arith.subf %167, %174 : vector<2x32x256xf32>
      %176 = arith.mulf %175, %175 : vector<2x32x256xf32>
      %cst_91 = arith.constant dense<0.000000e+00> : vector<2x32xf32>
      %177 = vector.multi_reduction <add>, %176, %cst_91 [2] : vector<2x32x256xf32> to vector<2x32xf32>
      %178 = vector.shape_cast %177 : vector<2x32xf32> to vector<2x32x1xf32>
      %cst_92 = arith.constant 2.560000e+02 : f32
      %179 = vector.broadcast %cst_92 : f32 to vector<2x32x1xf32>
      %180 = arith.divf %178, %179 : vector<2x32x1xf32>
      %181 = vector.broadcast %173 : vector<2x32x1xf32> to vector<2x32x256xf32>
      %182 = arith.subf %167, %181 : vector<2x32x256xf32>
      %cst_93 = arith.constant 9.99999974E-6 : f32
      %183 = vector.broadcast %cst_93 : f32 to vector<2x32x1xf32>
      %184 = arith.addf %180, %183 : vector<2x32x1xf32>
      %185 = math.rsqrt %184 : vector<2x32x1xf32>
      %186 = vector.broadcast %185 : vector<2x32x1xf32> to vector<2x32x256xf32>
      %187 = arith.mulf %182, %186 : vector<2x32x256xf32>
      %188 = vector.shape_cast %168 : vector<1x256xf32> to vector<1x1x256xf32>
      %189 = vector.broadcast %188 : vector<1x1x256xf32> to vector<2x32x256xf32>
      %190 = arith.mulf %187, %189 : vector<2x32x256xf32>
      %191 = vector.shape_cast %169 : vector<1x256xf32> to vector<1x1x256xf32>
      %192 = vector.broadcast %191 : vector<1x1x256xf32> to vector<2x32x256xf32>
      %193 = arith.addf %190, %192 : vector<2x32x256xf32>
      %c0_94 = arith.constant 0 : index
      %c0_95 = arith.constant 0 : index
      %c0_96 = arith.constant 0 : index
      %194 = vector.load %arg23[%c0_94, %c0_95, %c0_96] : memref<2x32x256xf32, #tpu.memory_space<vmem>>, vector<2x32x256xf32>
      tpu.vector_store %arg23[%c0_94, %c0_95, %c0_96], %193 {strides = array<i32>} : memref<2x32x256xf32, #tpu.memory_space<vmem>>, vector<2x32x256xf32>,
    } else {
    }
    %c0 = arith.constant 0 : index
    %c0_1 = arith.constant 0 : index
    %c0_2 = arith.constant 0 : index
    %3 = vector.load %arg23[%c0, %c0_1, %c0_2] : memref<2x32x256xf32, #tpu.memory_space<vmem>>, vector<2x32x256xf32>
    %4 = vector.shape_cast %3 : vector<2x32x256xf32> to vector<64x256xf32>
    %c0_3 = arith.constant 0 : index
    %c0_4 = arith.constant 0 : index
    %c0_5 = arith.constant 0 : index
    %5 = vector.load %arg7[%c0_3, %c0_4, %c0_5] : memref<1x1x256xf32, #tpu.memory_space<vmem>>, vector<1x1x256xf32>
    %6 = vector.shape_cast %5 : vector<1x1x256xf32> to vector<1x256xf32>
    %c0_6 = arith.constant 0 : index
    %c0_7 = arith.constant 0 : index
    %c0_8 = arith.constant 0 : index
    %7 = vector.load %arg8[%c0_6, %c0_7, %c0_8] : memref<1x1x256xf32, #tpu.memory_space<vmem>>, vector<1x1x256xf32>
    %8 = vector.shape_cast %7 : vector<1x1x256xf32> to vector<1x256xf32>
    %cst = arith.constant dense<0.000000e+00> : vector<64xf32>
    %9 = vector.multi_reduction <add>, %4, %cst [1] : vector<64x256xf32> to vector<64xf32>
    %10 = vector.shape_cast %9 : vector<64xf32> to vector<64x1xf32>
    %cst_9 = arith.constant 2.560000e+02 : f32
    %11 = vector.broadcast %cst_9 : f32 to vector<64x1xf32>
    %12 = arith.divf %10, %11 : vector<64x1xf32>
    %13 = vector.broadcast %12 : vector<64x1xf32> to vector<64x256xf32>
    %14 = arith.subf %4, %13 : vector<64x256xf32>
    %15 = arith.mulf %14, %14 : vector<64x256xf32>
    %cst_10 = arith.constant dense<0.000000e+00> : vector<64xf32>
    %16 = vector.multi_reduction <add>, %15, %cst_10 [1] : vector<64x256xf32> to vector<64xf32>
    %17 = vector.shape_cast %16 : vector<64xf32> to vector<64x1xf32>
    %cst_11 = arith.constant 2.560000e+02 : f32
    %18 = vector.broadcast %cst_11 : f32 to vector<64x1xf32>
    %19 = arith.divf %17, %18 : vector<64x1xf32>
    %20 = vector.broadcast %12 : vector<64x1xf32> to vector<64x256xf32>
    %21 = arith.subf %4, %20 : vector<64x256xf32>
    %cst_12 = arith.constant 9.99999974E-6 : f32
    %22 = vector.broadcast %cst_12 : f32 to vector<64x1xf32>
    %23 = arith.addf %19, %22 : vector<64x1xf32>
    %24 = math.rsqrt %23 : vector<64x1xf32>
    %25 = vector.broadcast %24 : vector<64x1xf32> to vector<64x256xf32>
    %26 = arith.mulf %21, %25 : vector<64x256xf32>
    %27 = vector.broadcast %6 : vector<1x256xf32> to vector<64x256xf32>
    %28 = arith.mulf %26, %27 : vector<64x256xf32>
    %29 = vector.broadcast %8 : vector<1x256xf32> to vector<64x256xf32>
    %30 = arith.addf %28, %29 : vector<64x256xf32>
    %31 = arith.truncf %30 : vector<64x256xf32> to vector<64x256xbf16>
    %c0_13 = arith.constant 0 : index
    %c0_14 = arith.constant 0 : index
    %c0_15 = arith.constant 0 : index
    %32 = vector.load %arg9[%c0_13, %c0_14, %c0_15] : memref<1x256x768xbf16, #tpu.memory_space<vmem>>, vector<1x256x768xbf16>
    %33 = vector.shape_cast %32 : vector<1x256x768xbf16> to vector<256x768xbf16>
    %cst_16 = arith.constant dense<0.000000e+00> : vector<64x768xf32>
    %34 = tpu.matmul %31, %33, %cst_16 {dimension_numbers = #tpu.dot_dimension_numbers<[1], [0], [0], [1], [0, 0, 1, 1], [], []>} : vector<64x256xbf16>, vector<256x768xbf16>, vector<64x768xf32> -> vector<64x768xf32>
    %c0_17 = arith.constant 0 : index
    %c0_18 = arith.constant 0 : index
    %c0_19 = arith.constant 0 : index
    %35 = vector.load %arg10[%c0_17, %c0_18, %c0_19] : memref<1x1x768xf32, #tpu.memory_space<vmem>>, vector<1x1x768xf32>
    %36 = vector.shape_cast %35 : vector<1x1x768xf32> to vector<1x768xf32>
    %37 = vector.broadcast %36 : vector<1x768xf32> to vector<64x768xf32>
    %38 = arith.addf %34, %37 : vector<64x768xf32>
    %39 = vector.shape_cast %38 : vector<64x768xf32> to vector<2x32x768xf32>
    %40 = tpu.iota {dimensions = array<i32: 2>} : vector<1x32x32xi32>
    %c17_i32 = arith.constant 17 : i32
    %41 = vector.broadcast %c17_i32 : i32 to vector<1x32x32xi32>
    %42 = arith.cmpi slt, %40, %41 : vector<1x32x32xi32>
    %43 = vector.extract_strided_slice %39 {offsets = [0, 0, 0], sizes = [2, 32, 128], strides = [1, 1, 1]} : vector<2x32x768xf32> to vector<2x32x128xf32>
    %44 = arith.truncf %43 : vector<2x32x128xf32> to vector<2x32x128xbf16>
    %45 = vector.extract_strided_slice %39 {offsets = [0, 0, 256], sizes = [2, 32, 128], strides = [1, 1, 1]} : vector<2x32x768xf32> to vector<2x32x128xf32>
    %46 = arith.truncf %45 : vector<2x32x128xf32> to vector<2x32x128xbf16>
    %47 = vector.extract_strided_slice %39 {offsets = [0, 0, 512], sizes = [2, 32, 128], strides = [1, 1, 1]} : vector<2x32x768xf32> to vector<2x32x128xf32>
    %48 = arith.truncf %47 : vector<2x32x128xf32> to vector<2x32x128xbf16>
    "tpu.trace_start"() <{level = 10 : i32, message = "bqd,bkd->bqk"}> : () -> ()
    %cst_20 = arith.constant dense<0.000000e+00> : vector<2x32x32xf32>
    %49 = tpu.matmul %44, %46, %cst_20 {dimension_numbers = #tpu.dot_dimension_numbers<[2], [2], [1], [1], [0, 0, 0, 1, 1, 1], [0], [0]>} : vector<2x32x128xbf16>, vector<2x32x128xbf16>, vector<2x32x32xf32> -> vector<2x32x32xf32>
    %cst_21 = arith.constant -1.000000e+30 : f32
    "tpu.trace_stop"() : () -> ()
    %50 = vector.shape_cast %42 : vector<1x32x32xi1> to vector<1x32x32xi1>
    %51 = vector.broadcast %50 : vector<1x32x32xi1> to vector<2x32x32xi1>
    %52 = vector.broadcast %cst_21 : f32 to vector<2x32x32xf32>
    %53 = arith.select %51, %49, %52 : vector<2x32x32xi1>, vector<2x32x32xf32>
    %cst_22 = arith.constant dense<0xFF800000> : vector<2x32xf32>
    %54 = vector.multi_reduction <maximumf>, %53, %cst_22 [2] : vector<2x32x32xf32> to vector<2x32xf32>
    %55 = vector.shape_cast %54 : vector<2x32xf32> to vector<2x32x1xf32>
    %56 = vector.broadcast %55 : vector<2x32x1xf32> to vector<2x32x32xf32>
    %57 = arith.subf %53, %56 : vector<2x32x32xf32>
    %58 = math.exp %57 : vector<2x32x32xf32>
    %cst_23 = arith.constant dense<0.000000e+00> : vector<2x32xf32>
    %59 = vector.multi_reduction <add>, %58, %cst_23 [2] : vector<2x32x32xf32> to vector<2x32xf32>
    %60 = vector.shape_cast %59 : vector<2x32xf32> to vector<2x32x1xf32>
    %61 = tpu.reciprocal %60 {approx = true} : vector<2x32x1xf32> -> vector<2x32x1xf32>
    %62 = vector.broadcast %61 : vector<2x32x1xf32> to vector<2x32x32xf32>
    %63 = arith.mulf %58, %62 : vector<2x32x32xf32>
    %64 = arith.truncf %63 : vector<2x32x32xf32> to vector<2x32x32xbf16>
    "tpu.trace_start"() <{level = 10 : i32, message = "bqk,bkd->bqd"}> : () -> ()
    %cst_24 = arith.constant dense<0.000000e+00> : vector<2x32x128xf32>
    %65 = tpu.matmul %64, %48, %cst_24 {dimension_numbers = #tpu.dot_dimension_numbers<[2], [1], [1], [2], [0, 0, 0, 1, 1, 2], [0], [0]>} : vector<2x32x32xbf16>, vector<2x32x128xbf16>, vector<2x32x128xf32> -> vector<2x32x128xf32>
    "tpu.trace_stop"() : () -> ()
    %66 = arith.truncf %65 : vector<2x32x128xf32> to vector<2x32x128xbf16>
    %c0_25 = arith.constant 0 : index
    %c0_26 = arith.constant 0 : index
    %c0_27 = arith.constant 0 : index
    %67 = vector.load %arg24[%c0_25, %c0_26, %c0_27] : memref<2x32x256xbf16, #tpu.memory_space<vmem>>, vector<2x32x128xbf16>
    tpu.vector_store %arg24[%c0_25, %c0_26, %c0_27], %66 {strides = array<i32>} : memref<2x32x256xbf16, #tpu.memory_space<vmem>>, vector<2x32x128xbf16>,
    %68 = vector.extract_strided_slice %39 {offsets = [0, 0, 128], sizes = [2, 32, 128], strides = [1, 1, 1]} : vector<2x32x768xf32> to vector<2x32x128xf32>
    %69 = arith.truncf %68 : vector<2x32x128xf32> to vector<2x32x128xbf16>
    %70 = vector.extract_strided_slice %39 {offsets = [0, 0, 384], sizes = [2, 32, 128], strides = [1, 1, 1]} : vector<2x32x768xf32> to vector<2x32x128xf32>
    %71 = arith.truncf %70 : vector<2x32x128xf32> to vector<2x32x128xbf16>
    %72 = vector.extract_strided_slice %39 {offsets = [0, 0, 640], sizes = [2, 32, 128], strides = [1, 1, 1]} : vector<2x32x768xf32> to vector<2x32x128xf32>
    %73 = arith.truncf %72 : vector<2x32x128xf32> to vector<2x32x128xbf16>
    "tpu.trace_start"() <{level = 10 : i32, message = "bqd,bkd->bqk"}> : () -> ()
    %cst_28 = arith.constant dense<0.000000e+00> : vector<2x32x32xf32>
    %74 = tpu.matmul %69, %71, %cst_28 {dimension_numbers = #tpu.dot_dimension_numbers<[2], [2], [1], [1], [0, 0, 0, 1, 1, 1], [0], [0]>} : vector<2x32x128xbf16>, vector<2x32x128xbf16>, vector<2x32x32xf32> -> vector<2x32x32xf32>
    %cst_29 = arith.constant -1.000000e+30 : f32
    "tpu.trace_stop"() : () -> ()
    %75 = vector.shape_cast %42 : vector<1x32x32xi1> to vector<1x32x32xi1>
    %76 = vector.broadcast %75 : vector<1x32x32xi1> to vector<2x32x32xi1>
    %77 = vector.broadcast %cst_29 : f32 to vector<2x32x32xf32>
    %78 = arith.select %76, %74, %77 : vector<2x32x32xi1>, vector<2x32x32xf32>
    %cst_30 = arith.constant dense<0xFF800000> : vector<2x32xf32>
    %79 = vector.multi_reduction <maximumf>, %78, %cst_30 [2] : vector<2x32x32xf32> to vector<2x32xf32>
    %80 = vector.shape_cast %79 : vector<2x32xf32> to vector<2x32x1xf32>
    %81 = vector.broadcast %80 : vector<2x32x1xf32> to vector<2x32x32xf32>
    %82 = arith.subf %78, %81 : vector<2x32x32xf32>
    %83 = math.exp %82 : vector<2x32x32xf32>
    %cst_31 = arith.constant dense<0.000000e+00> : vector<2x32xf32>
    %84 = vector.multi_reduction <add>, %83, %cst_31 [2] : vector<2x32x32xf32> to vector<2x32xf32>
    %85 = vector.shape_cast %84 : vector<2x32xf32> to vector<2x32x1xf32>
    %86 = tpu.reciprocal %85 {approx = true} : vector<2x32x1xf32> -> vector<2x32x1xf32>
    %87 = vector.broadcast %86 : vector<2x32x1xf32> to vector<2x32x32xf32>
    %88 = arith.mulf %83, %87 : vector<2x32x32xf32>
    %89 = arith.truncf %88 : vector<2x32x32xf32> to vector<2x32x32xbf16>
    "tpu.trace_start"() <{level = 10 : i32, message = "bqk,bkd->bqd"}> : () -> ()
    %cst_32 = arith.constant dense<0.000000e+00> : vector<2x32x128xf32>
    %90 = tpu.matmul %89, %73, %cst_32 {dimension_numbers = #tpu.dot_dimension_numbers<[2], [1], [1], [2], [0, 0, 0, 1, 1, 2], [0], [0]>} : vector<2x32x32xbf16>, vector<2x32x128xbf16>, vector<2x32x128xf32> -> vector<2x32x128xf32>
    "tpu.trace_stop"() : () -> ()
    %91 = arith.truncf %90 : vector<2x32x128xf32> to vector<2x32x128xbf16>
    %c0_33 = arith.constant 0 : index
    %c0_34 = arith.constant 0 : index
    %c128 = arith.constant 128 : index
    %92 = vector.load %arg24[%c0_33, %c0_34, %c128] : memref<2x32x256xbf16, #tpu.memory_space<vmem>>, vector<2x32x128xbf16>
    tpu.vector_store %arg24[%c0_33, %c0_34, %c128], %91 {strides = array<i32>} : memref<2x32x256xbf16, #tpu.memory_space<vmem>>, vector<2x32x128xbf16>,
    %c0_35 = arith.constant 0 : index
    %c0_36 = arith.constant 0 : index
    %c0_37 = arith.constant 0 : index
    %93 = vector.load %arg24[%c0_35, %c0_36, %c0_37] : memref<2x32x256xbf16, #tpu.memory_space<vmem>>, vector<2x32x256xbf16>
    %94 = vector.shape_cast %93 : vector<2x32x256xbf16> to vector<64x256xbf16>
    %c0_38 = arith.constant 0 : index
    %c0_39 = arith.constant 0 : index
    %c0_40 = arith.constant 0 : index
    %95 = vector.load %arg11[%c0_38, %c0_39, %c0_40] : memref<1x256x256xbf16, #tpu.memory_space<vmem>>, vector<1x256x256xbf16>
    %96 = vector.shape_cast %95 : vector<1x256x256xbf16> to vector<256x256xbf16>
    %cst_41 = arith.constant dense<0.000000e+00> : vector<64x256xf32>
    %97 = tpu.matmul %94, %96, %cst_41 {dimension_numbers = #tpu.dot_dimension_numbers<[1], [0], [0], [1], [0, 0, 1, 1], [], []>} : vector<64x256xbf16>, vector<256x256xbf16>, vector<64x256xf32> -> vector<64x256xf32>
    %98 = arith.addf %4, %97 : vector<64x256xf32>
    %c0_42 = arith.constant 0 : index
    %c0_43 = arith.constant 0 : index
    %c0_44 = arith.constant 0 : index
    %99 = vector.load %arg12[%c0_42, %c0_43, %c0_44] : memref<1x1x256xf32, #tpu.memory_space<vmem>>, vector<1x1x256xf32>
    %100 = vector.shape_cast %99 : vector<1x1x256xf32> to vector<1x256xf32>
    %101 = vector.broadcast %100 : vector<1x256xf32> to vector<64x256xf32>
    %102 = arith.addf %98, %101 : vector<64x256xf32>
    %c0_45 = arith.constant 0 : index
    %c0_46 = arith.constant 0 : index
    %c0_47 = arith.constant 0 : index
    %103 = vector.load %arg13[%c0_45, %c0_46, %c0_47] : memref<1x1x256xf32, #tpu.memory_space<vmem>>, vector<1x1x256xf32>
    %104 = vector.shape_cast %103 : vector<1x1x256xf32> to vector<1x256xf32>
    %c0_48 = arith.constant 0 : index
    %c0_49 = arith.constant 0 : index
    %c0_50 = arith.constant 0 : index
    %105 = vector.load %arg14[%c0_48, %c0_49, %c0_50] : memref<1x1x256xf32, #tpu.memory_space<vmem>>, vector<1x1x256xf32>
    %106 = vector.shape_cast %105 : vector<1x1x256xf32> to vector<1x256xf32>
    %cst_51 = arith.constant dense<0.000000e+00> : vector<64xf32>
    %107 = vector.multi_reduction <add>, %102, %cst_51 [1] : vector<64x256xf32> to vector<64xf32>
    %108 = vector.shape_cast %107 : vector<64xf32> to vector<64x1xf32>
    %cst_52 = arith.constant 2.560000e+02 : f32
    %109 = vector.broadcast %cst_52 : f32 to vector<64x1xf32>
    %110 = arith.divf %108, %109 : vector<64x1xf32>
    %111 = vector.broadcast %110 : vector<64x1xf32> to vector<64x256xf32>
    %112 = arith.subf %102, %111 : vector<64x256xf32>
    %113 = arith.mulf %112, %112 : vector<64x256xf32>
    %cst_53 = arith.constant dense<0.000000e+00> : vector<64xf32>
    %114 = vector.multi_reduction <add>, %113, %cst_53 [1] : vector<64x256xf32> to vector<64xf32>
    %115 = vector.shape_cast %114 : vector<64xf32> to vector<64x1xf32>
    %cst_54 = arith.constant 2.560000e+02 : f32
    %116 = vector.broadcast %cst_54 : f32 to vector<64x1xf32>
    %117 = arith.divf %115, %116 : vector<64x1xf32>
    %118 = vector.broadcast %110 : vector<64x1xf32> to vector<64x256xf32>
    %119 = arith.subf %102, %118 : vector<64x256xf32>
    %cst_55 = arith.constant 9.99999974E-6 : f32
    %120 = vector.broadcast %cst_55 : f32 to vector<64x1xf32>
    %121 = arith.addf %117, %120 : vector<64x1xf32>
    %122 = math.rsqrt %121 : vector<64x1xf32>
    %123 = vector.broadcast %122 : vector<64x1xf32> to vector<64x256xf32>
    %124 = arith.mulf %119, %123 : vector<64x256xf32>
    %125 = vector.broadcast %104 : vector<1x256xf32> to vector<64x256xf32>
    %126 = arith.mulf %124, %125 : vector<64x256xf32>
    %127 = vector.broadcast %106 : vector<1x256xf32> to vector<64x256xf32>
    %128 = arith.addf %126, %127 : vector<64x256xf32>
    %129 = arith.truncf %128 : vector<64x256xf32> to vector<64x256xbf16>
    %c0_56 = arith.constant 0 : index
    %c0_57 = arith.constant 0 : index
    %c0_58 = arith.constant 0 : index
    %130 = vector.load %arg15[%c0_56, %c0_57, %c0_58] : memref<1x256x512xbf16, #tpu.memory_space<vmem>>, vector<1x256x512xbf16>
    %131 = vector.shape_cast %130 : vector<1x256x512xbf16> to vector<256x512xbf16>
    %cst_59 = arith.constant dense<0.000000e+00> : vector<64x512xf32>
    %132 = tpu.matmul %129, %131, %cst_59 {dimension_numbers = #tpu.dot_dimension_numbers<[1], [0], [0], [1], [0, 0, 1, 1], [], []>} : vector<64x256xbf16>, vector<256x512xbf16>, vector<64x512xf32> -> vector<64x512xf32>
    %c0_60 = arith.constant 0 : index
    %c0_61 = arith.constant 0 : index
    %c0_62 = arith.constant 0 : index
    %133 = vector.load %arg16[%c0_60, %c0_61, %c0_62] : memref<1x1x512xf32, #tpu.memory_space<vmem>>, vector<1x1x512xf32>
    %134 = vector.shape_cast %133 : vector<1x1x512xf32> to vector<1x512xf32>
    %135 = vector.broadcast %134 : vector<1x512xf32> to vector<64x512xf32>
    %136 = arith.addf %132, %135 : vector<64x512xf32>
    %cst_63 = arith.constant 5.000000e-01 : f32
    %137 = vector.broadcast %cst_63 : f32 to vector<64x512xf32>
    %138 = arith.mulf %137, %136 : vector<64x512xf32>
    %cst_64 = arith.constant 1.41421354 : f32
    %139 = vector.broadcast %cst_64 : f32 to vector<64x512xf32>
    %140 = arith.divf %136, %139 : vector<64x512xf32>
    %141 = math.erf %140 : vector<64x512xf32>
    %cst_65 = arith.constant 1.000000e+00 : f32
    %142 = vector.broadcast %cst_65 : f32 to vector<64x512xf32>
    %143 = arith.addf %142, %141 : vector<64x512xf32>
    %144 = arith.mulf %138, %143 : vector<64x512xf32>
    %145 = arith.truncf %144 : vector<64x512xf32> to vector<64x512xbf16>
    %c0_66 = arith.constant 0 : index
    %c0_67 = arith.constant 0 : index
    %c0_68 = arith.constant 0 : index
    %146 = vector.load %arg17[%c0_66, %c0_67, %c0_68] : memref<1x512x256xbf16, #tpu.memory_space<vmem>>, vector<1x512x256xbf16>
    %147 = vector.shape_cast %146 : vector<1x512x256xbf16> to vector<512x256xbf16>
    %cst_69 = arith.constant dense<0.000000e+00> : vector<64x256xf32>
    %148 = tpu.matmul %145, %147, %cst_69 {dimension_numbers = #tpu.dot_dimension_numbers<[1], [0], [0], [1], [0, 0, 1, 1], [], []>} : vector<64x512xbf16>, vector<512x256xbf16>, vector<64x256xf32> -> vector<64x256xf32>
    %149 = arith.addf %102, %148 : vector<64x256xf32>
    %c0_70 = arith.constant 0 : index
    %c0_71 = arith.constant 0 : index
    %c0_72 = arith.constant 0 : index
    %150 = vector.load %arg18[%c0_70, %c0_71, %c0_72] : memref<1x1x256xf32, #tpu.memory_space<vmem>>, vector<1x1x256xf32>
    %151 = vector.shape_cast %150 : vector<1x1x256xf32> to vector<1x256xf32>
    %152 = vector.broadcast %151 : vector<1x256xf32> to vector<64x256xf32>
    %153 = arith.addf %149, %152 : vector<64x256xf32>
    %154 = vector.shape_cast %153 : vector<64x256xf32> to vector<2x32x256xf32>
    %c0_73 = arith.constant 0 : index
    %c0_74 = arith.constant 0 : index
    %c0_75 = arith.constant 0 : index
    %155 = vector.load %arg23[%c0_73, %c0_74, %c0_75] : memref<2x32x256xf32, #tpu.memory_space<vmem>>, vector<2x32x256xf32>
    tpu.vector_store %arg23[%c0_73, %c0_74, %c0_75], %154 {strides = array<i32>} : memref<2x32x256xf32, #tpu.memory_space<vmem>>, vector<2x32x256xf32>,
    %c1_i32 = arith.constant 1 : i32
    %156 = arith.cmpi eq, %arg1, %c1_i32 : i32
    %157 = arith.extui %156 : i1 to i32
    %c0_i32_76 = arith.constant 0 : i32
    %158 = arith.cmpi ne, %157, %c0_i32_76 : i32
    scf.if %158 {
      %159 = vector.shape_cast %153 : vector<64x256xf32> to vector<2x32x256xf32>
      %160 = vector.extract_strided_slice %159 {offsets = [0, 0, 0], sizes = [2, 1, 256], strides = [1, 1, 1]} : vector<2x32x256xf32> to vector<2x1x256xf32>
      %161 = vector.shape_cast %160 : vector<2x1x256xf32> to vector<2x256xf32>
      %c0_77 = arith.constant 0 : index
      %c0_78 = arith.constant 0 : index
      %162 = vector.load %arg19[%c0_77, %c0_78] : memref<1x256xf32, #tpu.memory_space<vmem>>, vector<1x256xf32>
      %c0_79 = arith.constant 0 : index
      %c0_80 = arith.constant 0 : index
      %163 = vector.load %arg20[%c0_79, %c0_80] : memref<1x256xf32, #tpu.memory_space<vmem>>, vector<1x256xf32>
      %cst_81 = arith.constant dense<0.000000e+00> : vector<2xf32>
      %164 = vector.multi_reduction <add>, %161, %cst_81 [1] : vector<2x256xf32> to vector<2xf32>
      %165 = vector.shape_cast %164 : vector<2xf32> to vector<2x1xf32>
      %cst_82 = arith.constant 2.560000e+02 : f32
      %166 = vector.broadcast %cst_82 : f32 to vector<2x1xf32>
      %167 = arith.divf %165, %166 : vector<2x1xf32>
      %168 = vector.broadcast %167 : vector<2x1xf32> to vector<2x256xf32>
      %169 = arith.subf %161, %168 : vector<2x256xf32>
      %170 = arith.mulf %169, %169 : vector<2x256xf32>
      %cst_83 = arith.constant dense<0.000000e+00> : vector<2xf32>
      %171 = vector.multi_reduction <add>, %170, %cst_83 [1] : vector<2x256xf32> to vector<2xf32>
      %172 = vector.shape_cast %171 : vector<2xf32> to vector<2x1xf32>
      %cst_84 = arith.constant 2.560000e+02 : f32
      %173 = vector.broadcast %cst_84 : f32 to vector<2x1xf32>
      %174 = arith.divf %172, %173 : vector<2x1xf32>
      %175 = vector.broadcast %167 : vector<2x1xf32> to vector<2x256xf32>
      %176 = arith.subf %161, %175 : vector<2x256xf32>
      %cst_85 = arith.constant 9.99999974E-6 : f32
      %177 = vector.broadcast %cst_85 : f32 to vector<2x1xf32>
      %178 = arith.addf %174, %177 : vector<2x1xf32>
      %179 = math.rsqrt %178 : vector<2x1xf32>
      %180 = vector.broadcast %179 : vector<2x1xf32> to vector<2x256xf32>
      %181 = arith.mulf %176, %180 : vector<2x256xf32>
      %182 = vector.broadcast %162 : vector<1x256xf32> to vector<2x256xf32>
      %183 = arith.mulf %181, %182 : vector<2x256xf32>
      %184 = vector.broadcast %163 : vector<1x256xf32> to vector<2x256xf32>
      %185 = arith.addf %183, %184 : vector<2x256xf32>
      %186 = arith.truncf %185 : vector<2x256xf32> to vector<2x256xbf16>
      %c0_86 = arith.constant 0 : index
      %c0_87 = arith.constant 0 : index
      %187 = vector.load %arg21[%c0_86, %c0_87] : memref<256x128xbf16, #tpu.memory_space<vmem>>, vector<256x128xbf16>
      %cst_88 = arith.constant dense<0.000000e+00> : vector<2x128xf32>
      %188 = tpu.matmul %186, %187, %cst_88 {dimension_numbers = #tpu.dot_dimension_numbers<[1], [0], [0], [1], [0, 0, 1, 1], [], []>} : vector<2x256xbf16>, vector<256x128xbf16>, vector<2x128xf32> -> vector<2x128xf32>
      %189 = vector.shape_cast %188 : vector<2x128xf32> to vector<2x1x128xf32>
      %c0_89 = arith.constant 0 : index
      %c0_90 = arith.constant 0 : index
      %c0_91 = arith.constant 0 : index
      %190 = vector.load %arg22[%c0_89, %c0_90, %c0_91] : memref<2x1x128xf32, #tpu.memory_space<vmem>>, vector<2x1x128xf32>
      tpu.vector_store %arg22[%c0_89, %c0_90, %c0_91], %189 {strides = array<i32>} : memref<2x1x128xf32, #tpu.memory_space<vmem>>, vector<2x1x128xf32>,
    } else {
    }
    return
  }
  func.func @transform_0(%arg0: i32, %arg1: i32) -> (i32, i32, i32) {
    %c0_i32 = arith.constant 0 : i32
    %c0_i32_0 = arith.constant 0 : i32
    %c0_i32_1 = arith.constant 0 : i32
    return %arg0, %c0_i32, %c0_i32_0 : i32, i32, i32
  }
  func.func @transform_1(%arg0: i32, %arg1: i32) -> (i32, i32) {
    %c0_i32 = arith.constant 0 : i32
    %c0_i32_0 = arith.constant 0 : i32
    %c0_i32_1 = arith.constant 0 : i32
    return %c0_i32, %c0_i32_0 : i32, i32
  }
  func.func @transform_2(%arg0: i32, %arg1: i32) -> (i32, i32) {
    %c0_i32 = arith.constant 0 : i32
    %c0_i32_0 = arith.constant 0 : i32
    %c0_i32_1 = arith.constant 0 : i32
    return %c0_i32, %c0_i32_0 : i32, i32
  }
  func.func @transform_3(%arg0: i32, %arg1: i32) -> (i32, i32) {
    %c0_i32 = arith.constant 0 : i32
    %c0_i32_0 = arith.constant 0 : i32
    %c0_i32_1 = arith.constant 0 : i32
    return %c0_i32, %c0_i32_0 : i32, i32
  }
  func.func @transform_4(%arg0: i32, %arg1: i32) -> (i32, i32) {
    %c0_i32 = arith.constant 0 : i32
    %c0_i32_0 = arith.constant 0 : i32
    %c0_i32_1 = arith.constant 0 : i32
    return %c0_i32, %c0_i32_0 : i32, i32
  }
  func.func @transform_5(%arg0: i32, %arg1: i32) -> (i32, i32, i32) {
    %c0_i32 = arith.constant 0 : i32
    %c0_i32_0 = arith.constant 0 : i32
    %c0_i32_1 = arith.constant 0 : i32
    return %arg1, %c0_i32, %c0_i32_0 : i32, i32, i32
  }
  func.func @transform_6(%arg0: i32, %arg1: i32) -> (i32, i32, i32) {
    %c0_i32 = arith.constant 0 : i32
    %c0_i32_0 = arith.constant 0 : i32
    %c0_i32_1 = arith.constant 0 : i32
    return %arg1, %c0_i32, %c0_i32_0 : i32, i32, i32
  }
  func.func @transform_7(%arg0: i32, %arg1: i32) -> (i32, i32, i32) {
    %c0_i32 = arith.constant 0 : i32
    %c0_i32_0 = arith.constant 0 : i32
    %c0_i32_1 = arith.constant 0 : i32
    return %arg1, %c0_i32, %c0_i32_0 : i32, i32, i32
  }
  func.func @transform_8(%arg0: i32, %arg1: i32) -> (i32, i32, i32) {
    %c0_i32 = arith.constant 0 : i32
    %c0_i32_0 = arith.constant 0 : i32
    %c0_i32_1 = arith.constant 0 : i32
    return %arg1, %c0_i32, %c0_i32_0 : i32, i32, i32
  }
  func.func @transform_9(%arg0: i32, %arg1: i32) -> (i32, i32, i32) {
    %c0_i32 = arith.constant 0 : i32
    %c0_i32_0 = arith.constant 0 : i32
    %c0_i32_1 = arith.constant 0 : i32
    return %arg1, %c0_i32, %c0_i32_0 : i32, i32, i32
  }
  func.func @transform_10(%arg0: i32, %arg1: i32) -> (i32, i32, i32) {
    %c0_i32 = arith.constant 0 : i32
    %c0_i32_0 = arith.constant 0 : i32
    %c0_i32_1 = arith.constant 0 : i32
    return %arg1, %c0_i32, %c0_i32_0 : i32, i32, i32
  }
  func.func @transform_11(%arg0: i32, %arg1: i32) -> (i32, i32, i32) {
    %c0_i32 = arith.constant 0 : i32
    %c0_i32_0 = arith.constant 0 : i32
    %c0_i32_1 = arith.constant 0 : i32
    return %arg1, %c0_i32, %c0_i32_0 : i32, i32, i32
  }
  func.func @transform_12(%arg0: i32, %arg1: i32) -> (i32, i32, i32) {
    %c0_i32 = arith.constant 0 : i32
    %c0_i32_0 = arith.constant 0 : i32
    %c0_i32_1 = arith.constant 0 : i32
    return %arg1, %c0_i32, %c0_i32_0 : i32, i32, i32
  }
  func.func @transform_13(%arg0: i32, %arg1: i32) -> (i32, i32, i32) {
    %c0_i32 = arith.constant 0 : i32
    %c0_i32_0 = arith.constant 0 : i32
    %c0_i32_1 = arith.constant 0 : i32
    return %arg1, %c0_i32, %c0_i32_0 : i32, i32, i32
  }
  func.func @transform_14(%arg0: i32, %arg1: i32) -> (i32, i32, i32) {
    %c0_i32 = arith.constant 0 : i32
    %c0_i32_0 = arith.constant 0 : i32
    %c0_i32_1 = arith.constant 0 : i32
    return %arg1, %c0_i32, %c0_i32_0 : i32, i32, i32
  }
  func.func @transform_15(%arg0: i32, %arg1: i32) -> (i32, i32, i32) {
    %c0_i32 = arith.constant 0 : i32
    %c0_i32_0 = arith.constant 0 : i32
    %c0_i32_1 = arith.constant 0 : i32
    return %arg1, %c0_i32, %c0_i32_0 : i32, i32, i32
  }
  func.func @transform_16(%arg0: i32, %arg1: i32) -> (i32, i32, i32) {
    %c0_i32 = arith.constant 0 : i32
    %c0_i32_0 = arith.constant 0 : i32
    %c0_i32_1 = arith.constant 0 : i32
    return %arg1, %c0_i32, %c0_i32_0 : i32, i32, i32
  }
  func.func @transform_17(%arg0: i32, %arg1: i32) -> (i32, i32) {
    %c0_i32 = arith.constant 0 : i32
    %c0_i32_0 = arith.constant 0 : i32
    %c0_i32_1 = arith.constant 0 : i32
    return %c0_i32, %c0_i32_0 : i32, i32
  }
  func.func @transform_18(%arg0: i32, %arg1: i32) -> (i32, i32) {
    %c0_i32 = arith.constant 0 : i32
    %c0_i32_0 = arith.constant 0 : i32
    %c0_i32_1 = arith.constant 0 : i32
    return %c0_i32, %c0_i32_0 : i32, i32
  }
  func.func @transform_19(%arg0: i32, %arg1: i32) -> (i32, i32) {
    %c0_i32 = arith.constant 0 : i32
    %c0_i32_0 = arith.constant 0 : i32
    %c0_i32_1 = arith.constant 0 : i32
    return %c0_i32, %c0_i32_0 : i32, i32
  }
  func.func @transform_20(%arg0: i32, %arg1: i32) -> (i32, i32, i32) {
    %c0_i32 = arith.constant 0 : i32
    %c0_i32_0 = arith.constant 0 : i32
    %c0_i32_1 = arith.constant 0 : i32
    return %arg0, %c0_i32, %c0_i32_0 : i32, i32, i32
  }
}

</mosaic_0001>

<llo_original>
// kernel: tpu_custom_call.1
$region0: #{tpu_custom_call.1}
  #allocation0 [shape = 'u32[]', space=smem, size = 0x4, offset = 0x4, fixed_abs, tag = 'smem constant byte address 0x4 - core index']
  #allocation1 [shape = 'u32[144,128]{1,0:T(1,128)}', space=vmem, size = 0x12000, scoped, tag = 'internal scratch']
  #allocation2 [shape = 'f32[2,32,256]{2,1,0:T(8,128)}', space=vmem, size = 0x10000, scoped, tag = 'scratch operand']
  #allocation3 [shape = 'bf16[2,32,256]{2,1,0:T(8,128)(2,1)}', space=vmem, size = 0x8000, scoped, tag = 'scratch operand']
  %s0 = inlined_call_operand.hbm [shape: bf16[4,32,48], index: 0, kind: input, shape index: {}]
  %s1 = inlined_call_operand.hbm [shape: bf16[48,256], index: 1, kind: input, shape index: {}]
  %s2 = inlined_call_operand.hbm [shape: f32[32,256], index: 2, kind: input, shape index: {}]
  %s3 = inlined_call_operand.hbm [shape: f32[1,256], index: 3, kind: input, shape index: {}]
  %s4 = inlined_call_operand.hbm [shape: f32[1,256], index: 4, kind: input, shape index: {}]
  %s5 = inlined_call_operand.hbm [shape: f32[2,1,256], index: 5, kind: input, shape index: {}]
  %s6 = inlined_call_operand.hbm [shape: f32[2,1,256], index: 6, kind: input, shape index: {}]
  %s7 = inlined_call_operand.hbm [shape: bf16[2,256,768], index: 7, kind: input, shape index: {}]
  %s8 = inlined_call_operand.vmem [shape: f32[2,1,768], index: 8, kind: input, shape index: {}]
  %s9 = inlined_call_operand.hbm [shape: bf16[2,256,256], index: 9, kind: input, shape index: {}]
  %s10 = inlined_call_operand.hbm [shape: f32[2,1,256], index: 10, kind: input, shape index: {}]
  %s11 = inlined_call_operand.hbm [shape: f32[2,1,256], index: 11, kind: input, shape index: {}]
  %s12 = inlined_call_operand.hbm [shape: f32[2,1,256], index: 12, kind: input, shape index: {}]
  %s13 = inlined_call_operand.hbm [shape: bf16[2,256,512], index: 13, kind: input, shape index: {}]
  %s14 = inlined_call_operand.vmem [shape: f32[2,1,512], index: 14, kind: input, shape index: {}]
  %s15 = inlined_call_operand.hbm [shape: bf16[2,512,256], index: 15, kind: input, shape index: {}]
  %s16 = inlined_call_operand.vmem [shape: f32[2,1,256], index: 16, kind: input, shape index: {}]
  %s17 = inlined_call_operand.vmem [shape: f32[1,256], index: 17, kind: input, shape index: {}]
  %s18 = inlined_call_operand.vmem [shape: f32[1,256], index: 18, kind: input, shape index: {}]
  %s19 = inlined_call_operand.hbm [shape: bf16[256,128], index: 19, kind: input, shape index: {}]
  %s20 = inlined_call_operand.hbm [shape: f32[4,1,128], index: 20, kind: output, shape index: {}]
  %s21 = sld [smem:[#allocation0]]
  $region181: #{tpu_custom_call.1} parent=0
    _
  %s23 = ssub.s32 1, %s21
  %s24 = scalar_select 0, %s23, %s21
  $region1: #{tpu_custom_call.1} parent=0
    #allocation4 [shape = 'u8[32768]{0}', space=vmem, size = 0x8000, scoped, tag = 'input window, operand 0']
    #allocation5 [shape = 's32[2]{0}', space=sflag, size = 0x8, scoped, tag = 'scoped memory for tpu_custom_call.1']
    #allocation6 [shape = 's32[2]{0}', space=sflag, size = 0x8, scoped, tag = 'scoped memory for tpu_custom_call.1']
    #allocation7 [shape = 'u8[24576]{0}', space=vmem, size = 0x6000, scoped, tag = 'input window, operand 1, single buffered']
    #allocation8 [shape = 's32[1]{0}', space=sflag, size = 0x4, scoped, tag = 'scoped memory for tpu_custom_call.1']
    #allocation9 [shape = 'u8[32768]{0}', space=vmem, size = 0x8000, scoped, tag = 'input window, operand 2, single buffered']
    #allocation10 [shape = 'u8[1024]{0}', space=vmem, size = 0x400, scoped, tag = 'input window, operand 3, single buffered']
    #allocation11 [shape = 's32[1]{0}', space=sflag, size = 0x4, scoped, tag = 'scoped memory for tpu_custom_call.1']
    #allocation12 [shape = 'u8[1024]{0}', space=vmem, size = 0x400, scoped, tag = 'input window, operand 4, single buffered']
    #allocation13 [shape = 'u8[2048]{0}', space=vmem, size = 0x800, scoped, tag = 'input window, operand 5']
    #allocation14 [shape = 's32[2]{0}', space=sflag, size = 0x8, scoped, tag = 'scoped memory for tpu_custom_call.1']
    #allocation15 [shape = 'u8[2048]{0}', space=vmem, size = 0x800, scoped, tag = 'input window, operand 6']
    #allocation16 [shape = 'u8[786432]{0}', space=vmem, size = 0xc0000, scoped, tag = 'input window, operand 7']
    #allocation17 [shape = 's32[2]{0}', space=sflag, size = 0x8, scoped, tag = 'scoped memory for tpu_custom_call.1']
    #allocation18 [shape = 'u8[262144]{0}', space=vmem, size = 0x40000, scoped, tag = 'input window, operand 9']
    #allocation19 [shape = 'u8[2048]{0}', space=vmem, size = 0x800, scoped, tag = 'input window, operand 10']
    #allocation20 [shape = 's32[2]{0}', space=sflag, size = 0x8, scoped, tag = 'scoped memory for tpu_custom_call.1']
    #allocation21 [shape = 'u8[2048]{0}', space=vmem, size = 0x800, scoped, tag = 'input window, operand 11']
    #allocation22 [shape = 'u8[2048]{0}', space=vmem, size = 0x800, scoped, tag = 'input window, operand 12']
    #allocation23 [shape = 's32[2]{0}', space=sflag, size = 0x8, scoped, tag = 'scoped memory for tpu_custom_call.1']
    #allocation24 [shape = 'u8[524288]{0}', space=vmem, size = 0x80000, scoped, tag = 'input window, operand 13']
    #allocation25 [shape = 'u8[524288]{0}', space=vmem, size = 0x80000, scoped, tag = 'input window, operand 15']
    #allocation26 [shape = 's32[2]{0}', space=sflag, size = 0x8, scoped, tag = 'scoped memory for tpu_custom_call.1']
    #allocation27 [shape = 'u8[65536]{0}', space=vmem, size = 0x10000, scoped, tag = 'input window, operand 19, single buffered']
    #allocation28 [shape = 'u8[2048]{0}', space=vmem, size = 0x800, scoped, tag = 'output window, operand 0']
    %25 = vsyncpa [#allocation5], 0
    %s26 = scalar_lea.sflag [#allocation5], 1
    %27 = vsyncpa %s26, 0
    %28 = vsyncpa [#allocation8], 0
    %29 = vsyncpa [#allocation11], 0
    %30 = vsyncpa [#allocation14], 0
    %s31 = scalar_lea.sflag [#allocation14], 1
    %32 = vsyncpa %s31, 0
    %33 = vsyncpa [#allocation17], 0
    %s34 = scalar_lea.sflag [#allocation17], 1
    %35 = vsyncpa %s34, 0
    %36 = vsyncpa [#allocation20], 0
    %s37 = scalar_lea.sflag [#allocation20], 1
    %38 = vsyncpa %s37, 0
    %39 = vsyncpa [#allocation23], 0
    %s40 = scalar_lea.sflag [#allocation23], 1
    %41 = vsyncpa %s40, 0
    %42 = vsyncpa [#allocation26], 0
    %s43 = scalar_lea.sflag [#allocation26], 1
    %44 = vsyncpa %s43, 0
    %45 = vsyncpa [#allocation6], 0
    %s46 = scalar_lea.sflag [#allocation6], 1
    %47 = vsyncpa %s46, 0
    loop: start=0, step=1, limit=6
    $region2: #{tpu_custom_call.1} parent=1 // loop_pre_header
      _
    $region3: #{tpu_custom_call.1} parent=1 // loop_header
      %s49 = sphi 0, %s53
      %p50 = scmp.ge.s32.totalorder %s49, 6
      %s56 = sphi 0, %s68
      %s57 = sphi 0, %s64
      %s58 = sphi 0, %s56
      %s59 = sphi 0, %s57
      %s60 = sphi 0, %s58
      %s61 = sphi 0, %s59
      %s71 = sphi 0, %s73
      %s74 = sphi 0, %s71
      %s75 = sphi 0, %s74
      %s91 = sphi 0, %s75
      %s95 = sphi 0, %s95
      %s97 = sphi 0, %s95
      %s98 = sphi 0, %s97
      %s112 = sphi 0, %s98
      %s116 = sphi 0, %s116
      %s118 = sphi 0, %s116
      %s119 = sphi 0, %s118
      %s133 = sphi 0, %s119
      %s137 = sphi 0, %s137
      %s139 = sphi 0, %s137
      %s140 = sphi 0, %s139
      %s154 = sphi 0, %s140
      %s158 = sphi 0, %s158
      %s160 = sphi 0, %s158
      %s161 = sphi 0, %s160
      %s175 = sphi 0, %s161
      %s181 = sphi 0, %s183
      %s184 = sphi 0, %s181
      %s185 = sphi 0, %s184
      %s201 = sphi 0, %s185
      %s207 = sphi 0, %s209
      %s210 = sphi 0, %s207
      %s211 = sphi 0, %s210
      %s227 = sphi 0, %s211
      %s233 = sphi 0, %s235
      %s236 = sphi 0, %s233
      %s237 = sphi 0, %s236
      %s253 = sphi 0, %s237
      %s259 = sphi 0, %s261
      %s262 = sphi 0, %s259
      %s263 = sphi 0, %s262
      %s279 = sphi 0, %s263
      %s285 = sphi 0, %s287
      %s288 = sphi 0, %s285
      %s289 = sphi 0, %s288
      %s305 = sphi 0, %s289
      %s311 = sphi 0, %s313
      %s314 = sphi 0, %s311
      %s315 = sphi 0, %s314
      %s331 = sphi 0, %s315
      %s337 = sphi 0, %s339
      %s340 = sphi 0, %s337
      %s341 = sphi 0, %s340
      %s357 = sphi 0, %s341
      %s363 = sphi 0, %s365
      %s366 = sphi 0, %s363
      %s367 = sphi 0, %s366
      %s383 = sphi 0, %s367
      %s389 = sphi 0, %s391
      %s392 = sphi 0, %s389
      %s393 = sphi 0, %s392
      %s409 = sphi 0, %s393
      %s415 = sphi 0, %s417
      %s418 = sphi 0, %s415
      %s419 = sphi 0, %s418
      %s435 = sphi 0, %s419
      %s441 = sphi 0, %s443
      %s444 = sphi 0, %s441
      %s445 = sphi 0, %s444
      %s461 = sphi 0, %s445
      %s467 = sphi 0, %s469
      %s470 = sphi 0, %s467
      %s471 = sphi 0, %s470
      %s487 = sphi 0, %s471
      %s491 = sphi 0, %s491
      %s493 = sphi 0, %s491
      %s494 = sphi 0, %s493
      %s508 = sphi 0, %s494
      %s512 = sphi 0, %s512
      %s514 = sphi 0, %s512
      %s515 = sphi 0, %s514
      %s529 = sphi 0, %s515
      %s533 = sphi 0, %s533
      %s535 = sphi 0, %s533
      %s536 = sphi 0, %s535
      %s550 = sphi 0, %s536
      %s556 = sphi 0, %s558
      %s559 = sphi 0, %s556
      %s560 = sphi 0, %s559
      %s576 = sphi 0, %s560
    $region4: #{tpu_custom_call.1} parent=1 // loop_header_branch
      %52 = sbr.rel (%p50) target = $region8
    $region5: #{tpu_custom_call.1} parent=1 // loop_body
      %s54 = ssub.s32 %s49, 1
      %s55 = ssub.s32 %s49, 2
      %s62 = sadd.s32 1, %s57
      %p63 = scmp.ge.s32.totalorder %s62, 2
      %s64 = scalar_select %p63, 0, %s62
      %s65 = sadd.s32 1, %s56
      %s66 = scalar_select %p63, %s65, %s56
      %p67 = scmp.ge.s32.totalorder %s66, 2
      %s68 = scalar_select %p67, 0, %s66
      %s69 = ssub.s32 %s56, %s68
      %p70 = scmp.eq.s32.totalorder %s69, 0
      %s72 = sadd.s32 %s71, 1
      %s73 = scalar_select %p70, %s71, %s72
      %p76 = pneg %p70
      %p77 = scmp.eq.s32.totalorder %s49, 3
      %p78 = por %p76, %p77
      %p79 = scmp.ne.s32.totalorder %s71, %s74
      %p80 = scmp.eq.s32.totalorder %s49, 0
      %p81 = por %p79, %p80
      %p82 = scmp.ne.s32.totalorder %s71, %s74
      %p83 = scmp.eq.s32.totalorder %s54, 3
      %p84 = por %p82, %p83
      %p85 = scmp.ne.s32.totalorder %s74, %s75
      %p86 = scmp.eq.s32.totalorder %s54, 0
      %p87 = por %p85, %p86
      %p88 = scmp.ne.s32.totalorder %s74, %s75
      %p89 = scmp.eq.s32.totalorder %s55, 3
      %p90 = por %p88, %p89
      %p92 = scmp.ne.s32.totalorder %s75, %s91
      %p93 = scmp.eq.s32.totalorder %s55, 0
      %p94 = por %p92, %p93
      %s96 = sadd.s32 %s95, 1
      %p99 = scmp.eq.s32.totalorder %s49, 3
      %p100 = scmp.ne.s32.totalorder %s95, %s97
      %p101 = scmp.eq.s32.totalorder %s49, 0
      %p102 = por %p100, %p101
      %p103 = scmp.ne.s32.totalorder %s95, %s97
      %p104 = scmp.eq.s32.totalorder %s54, 3
      %p105 = por %p103, %p104
      %p106 = scmp.ne.s32.totalorder %s97, %s98
      %p107 = scmp.eq.s32.totalorder %s54, 0
      %p108 = por %p106, %p107
      %p109 = scmp.ne.s32.totalorder %s97, %s98
      %p110 = scmp.eq.s32.totalorder %s55, 3
      %p111 = por %p109, %p110
      %p113 = scmp.ne.s32.totalorder %s98, %s112
      %p114 = scmp.eq.s32.totalorder %s55, 0
      %p115 = por %p113, %p114
      %s117 = sadd.s32 %s116, 1
      %p120 = scmp.eq.s32.totalorder %s49, 3
      %p121 = scmp.ne.s32.totalorder %s116, %s118
      %p122 = scmp.eq.s32.totalorder %s49, 0
      %p123 = por %p121, %p122
      %p124 = scmp.ne.s32.totalorder %s116, %s118
      %p125 = scmp.eq.s32.totalorder %s54, 3
      %p126 = por %p124, %p125
      %p127 = scmp.ne.s32.totalorder %s118, %s119
      %p128 = scmp.eq.s32.totalorder %s54, 0
      %p129 = por %p127, %p128
      %p130 = scmp.ne.s32.totalorder %s118, %s119
      %p131 = scmp.eq.s32.totalorder %s55, 3
      %p132 = por %p130, %p131
      %p134 = scmp.ne.s32.totalorder %s119, %s133
      %p135 = scmp.eq.s32.totalorder %s55, 0
      %p136 = por %p134, %p135
      %s138 = sadd.s32 %s137, 1
      %p141 = scmp.eq.s32.totalorder %s49, 3
      %p142 = scmp.ne.s32.totalorder %s137, %s139
      %p143 = scmp.eq.s32.totalorder %s49, 0
      %p144 = por %p142, %p143
      %p145 = scmp.ne.s32.totalorder %s137, %s139
      %p146 = scmp.eq.s32.totalorder %s54, 3
      %p147 = por %p145, %p146
      %p148 = scmp.ne.s32.totalorder %s139, %s140
      %p149 = scmp.eq.s32.totalorder %s54, 0
      %p150 = por %p148, %p149
      %p151 = scmp.ne.s32.totalorder %s139, %s140
      %p152 = scmp.eq.s32.totalorder %s55, 3
      %p153 = por %p151, %p152
      %p155 = scmp.ne.s32.totalorder %s140, %s154
      %p156 = scmp.eq.s32.totalorder %s55, 0
      %p157 = por %p155, %p156
      %s159 = sadd.s32 %s158, 1
      %p162 = scmp.eq.s32.totalorder %s49, 3
      %p163 = scmp.ne.s32.totalorder %s158, %s160
      %p164 = scmp.eq.s32.totalorder %s49, 0
      %p165 = por %p163, %p164
      %p166 = scmp.ne.s32.totalorder %s158, %s160
      %p167 = scmp.eq.s32.totalorder %s54, 3
      %p168 = por %p166, %p167
      %p169 = scmp.ne.s32.totalorder %s160, %s161
      %p170 = scmp.eq.s32.totalorder %s54, 0
      %p171 = por %p169, %p170
      %p172 = scmp.ne.s32.totalorder %s160, %s161
      %p173 = scmp.eq.s32.totalorder %s55, 3
      %p174 = por %p172, %p173
      %p176 = scmp.ne.s32.totalorder %s161, %s175
      %p177 = scmp.eq.s32.totalorder %s55, 0
      %p178 = por %p176, %p177
      %s179 = ssub.s32 %s57, %s64
      %p180 = scmp.eq.s32.totalorder %s179, 0
      %s182 = sadd.s32 %s181, 1
      %s183 = scalar_select %p180, %s181, %s182
      %p186 = pneg %p180
      %p187 = scmp.eq.s32.totalorder %s49, 3
      %p188 = por %p186, %p187
      %p189 = scmp.ne.s32.totalorder %s181, %s184
      %p190 = scmp.eq.s32.totalorder %s49, 0
      %p191 = por %p189, %p190
      %p192 = scmp.ne.s32.totalorder %s181, %s184
      %p193 = scmp.eq.s32.totalorder %s54, 3
      %p194 = por %p192, %p193
      %p195 = scmp.ne.s32.totalorder %s184, %s185
      %p196 = scmp.eq.s32.totalorder %s54, 0
      %p197 = por %p195, %p196
      %p198 = scmp.ne.s32.totalorder %s184, %s185
      %p199 = scmp.eq.s32.totalorder %s55, 3
      %p200 = por %p198, %p199
      %p202 = scmp.ne.s32.totalorder %s185, %s201
      %p203 = scmp.eq.s32.totalorder %s55, 0
      %p204 = por %p202, %p203
      %s205 = ssub.s32 %s57, %s64
      %p206 = scmp.eq.s32.totalorder %s205, 0
      %s208 = sadd.s32 %s207, 1
      %s209 = scalar_select %p206, %s207, %s208
      %p212 = pneg %p206
      %p213 = scmp.eq.s32.totalorder %s49, 3
      %p214 = por %p212, %p213
      %p215 = scmp.ne.s32.totalorder %s207, %s210
      %p216 = scmp.eq.s32.totalorder %s49, 0
      %p217 = por %p215, %p216
      %p218 = scmp.ne.s32.totalorder %s207, %s210
      %p219 = scmp.eq.s32.totalorder %s54, 3
      %p220 = por %p218, %p219
      %p221 = scmp.ne.s32.totalorder %s210, %s211
      %p222 = scmp.eq.s32.totalorder %s54, 0
      %p223 = por %p221, %p222
      %p224 = scmp.ne.s32.totalorder %s210, %s211
      %p225 = scmp.eq.s32.totalorder %s55, 3
      %p226 = por %p224, %p225
      %p228 = scmp.ne.s32.totalorder %s211, %s227
      %p229 = scmp.eq.s32.totalorder %s55, 0
      %p230 = por %p228, %p229
      %s231 = ssub.s32 %s57, %s64
      %p232 = scmp.eq.s32.totalorder %s231, 0
      %s234 = sadd.s32 %s233, 1
      %s235 = scalar_select %p232, %s233, %s234
      %p238 = pneg %p232
      %p239 = scmp.eq.s32.totalorder %s49, 3
      %p240 = por %p238, %p239
      %p241 = scmp.ne.s32.totalorder %s233, %s236
      %p242 = scmp.eq.s32.totalorder %s49, 0
      %p243 = por %p241, %p242
      %p244 = scmp.ne.s32.totalorder %s233, %s236
      %p245 = scmp.eq.s32.totalorder %s54, 3
      %p246 = por %p244, %p245
      %p247 = scmp.ne.s32.totalorder %s236, %s237
      %p248 = scmp.eq.s32.totalorder %s54, 0
      %p249 = por %p247, %p248
      %p250 = scmp.ne.s32.totalorder %s236, %s237
      %p251 = scmp.eq.s32.totalorder %s55, 3
      %p252 = por %p250, %p251
      %p254 = scmp.ne.s32.totalorder %s237, %s253
      %p255 = scmp.eq.s32.totalorder %s55, 0
      %p256 = por %p254, %p255
      %s257 = ssub.s32 %s57, %s64
      %p258 = scmp.eq.s32.totalorder %s257, 0
      %s260 = sadd.s32 %s259, 1
      %s261 = scalar_select %p258, %s259, %s260
      %p264 = pneg %p258
      %p265 = scmp.eq.s32.totalorder %s49, 3
      %p266 = por %p264, %p265
      %p267 = scmp.ne.s32.totalorder %s259, %s262
      %p268 = scmp.eq.s32.totalorder %s49, 0
      %p269 = por %p267, %p268
      %p270 = scmp.ne.s32.totalorder %s259, %s262
      %p271 = scmp.eq.s32.totalorder %s54, 3
      %p272 = por %p270, %p271
      %p273 = scmp.ne.s32.totalorder %s262, %s263
      %p274 = scmp.eq.s32.totalorder %s54, 0
      %p275 = por %p273, %p274
      %p276 = scmp.ne.s32.totalorder %s262, %s263
      %p277 = scmp.eq.s32.totalorder %s55, 3
      %p278 = por %p276, %p277
      %p280 = scmp.ne.s32.totalorder %s263, %s279
      %p281 = scmp.eq.s32.totalorder %s55, 0
      %p282 = por %p280, %p281
      %s283 = ssub.s32 %s57, %s64
      %p284 = scmp.eq.s32.totalorder %s283, 0
      %s286 = sadd.s32 %s285, 1
      %s287 = scalar_select %p284, %s285, %s286
      %p290 = pneg %p284
      %p291 = scmp.eq.s32.totalorder %s49, 3
      %p292 = por %p290, %p291
      %p293 = scmp.ne.s32.totalorder %s285, %s288
      %p294 = scmp.eq.s32.totalorder %s49, 0
      %p295 = por %p293, %p294
      %p296 = scmp.ne.s32.totalorder %s285, %s288
      %p297 = scmp.eq.s32.totalorder %s54, 3
      %p298 = por %p296, %p297
      %p299 = scmp.ne.s32.totalorder %s288, %s289
      %p300 = scmp.eq.s32.totalorder %s54, 0
      %p301 = por %p299, %p300
      %p302 = scmp.ne.s32.totalorder %s288, %s289
      %p303 = scmp.eq.s32.totalorder %s55, 3
      %p304 = por %p302, %p303
      %p306 = scmp.ne.s32.totalorder %s289, %s305
      %p307 = scmp.eq.s32.totalorder %s55, 0
      %p308 = por %p306, %p307
      %s309 = ssub.s32 %s57, %s64
      %p310 = scmp.eq.s32.totalorder %s309, 0
      %s312 = sadd.s32 %s311, 1
      %s313 = scalar_select %p310, %s311, %s312
      %p316 = pneg %p310
      %p317 = scmp.eq.s32.totalorder %s49, 3
      %p318 = por %p316, %p317
      %p319 = scmp.ne.s32.totalorder %s311, %s314
      %p320 = scmp.eq.s32.totalorder %s49, 0
      %p321 = por %p319, %p320
      %p322 = scmp.ne.s32.totalorder %s311, %s314
      %p323 = scmp.eq.s32.totalorder %s54, 3
      %p324 = por %p322, %p323
      %p325 = scmp.ne.s32.totalorder %s314, %s315
      %p326 = scmp.eq.s32.totalorder %s54, 0
      %p327 = por %p325, %p326
      %p328 = scmp.ne.s32.totalorder %s314, %s315
      %p329 = scmp.eq.s32.totalorder %s55, 3
      %p330 = por %p328, %p329
      %p332 = scmp.ne.s32.totalorder %s315, %s331
      %p333 = scmp.eq.s32.totalorder %s55, 0
      %p334 = por %p332, %p333
      %s335 = ssub.s32 %s57, %s64
      %p336 = scmp.eq.s32.totalorder %s335, 0
      %s338 = sadd.s32 %s337, 1
      %s339 = scalar_select %p336, %s337, %s338
      %p342 = pneg %p336
      %p343 = scmp.eq.s32.totalorder %s49, 3
      %p344 = por %p342, %p343
      %p345 = scmp.ne.s32.totalorder %s337, %s340
      %p346 = scmp.eq.s32.totalorder %s49, 0
      %p347 = por %p345, %p346
      %p348 = scmp.ne.s32.totalorder %s337, %s340
      %p349 = scmp.eq.s32.totalorder %s54, 3
      %p350 = por %p348, %p349
      %p351 = scmp.ne.s32.totalorder %s340, %s341
      %p352 = scmp.eq.s32.totalorder %s54, 0
      %p353 = por %p351, %p352
      %p354 = scmp.ne.s32.totalorder %s340, %s341
      %p355 = scmp.eq.s32.totalorder %s55, 3
      %p356 = por %p354, %p355
      %p358 = scmp.ne.s32.totalorder %s341, %s357
      %p359 = scmp.eq.s32.totalorder %s55, 0
      %p360 = por %p358, %p359
      %s361 = ssub.s32 %s57, %s64
      %p362 = scmp.eq.s32.totalorder %s361, 0
      %s364 = sadd.s32 %s363, 1
      %s365 = scalar_select %p362, %s363, %s364
      %p368 = pneg %p362
      %p369 = scmp.eq.s32.totalorder %s49, 3
      %p370 = por %p368, %p369
      %p371 = scmp.ne.s32.totalorder %s363, %s366
      %p372 = scmp.eq.s32.totalorder %s49, 0
      %p373 = por %p371, %p372
      %p374 = scmp.ne.s32.totalorder %s363, %s366
      %p375 = scmp.eq.s32.totalorder %s54, 3
      %p376 = por %p374, %p375
      %p377 = scmp.ne.s32.totalorder %s366, %s367
      %p378 = scmp.eq.s32.totalorder %s54, 0
      %p379 = por %p377, %p378
      %p380 = scmp.ne.s32.totalorder %s366, %s367
      %p381 = scmp.eq.s32.totalorder %s55, 3
      %p382 = por %p380, %p381
      %p384 = scmp.ne.s32.totalorder %s367, %s383
      %p385 = scmp.eq.s32.totalorder %s55, 0
      %p386 = por %p384, %p385
      %s387 = ssub.s32 %s57, %s64
      %p388 = scmp.eq.s32.totalorder %s387, 0
      %s390 = sadd.s32 %s389, 1
      %s391 = scalar_select %p388, %s389, %s390
      %p394 = pneg %p388
      %p395 = scmp.eq.s32.totalorder %s49, 3
      %p396 = por %p394, %p395
      %p397 = scmp.ne.s32.totalorder %s389, %s392
      %p398 = scmp.eq.s32.totalorder %s49, 0
      %p399 = por %p397, %p398
      %p400 = scmp.ne.s32.totalorder %s389, %s392
      %p401 = scmp.eq.s32.totalorder %s54, 3
      %p402 = por %p400, %p401
      %p403 = scmp.ne.s32.totalorder %s392, %s393
      %p404 = scmp.eq.s32.totalorder %s54, 0
      %p405 = por %p403, %p404
      %p406 = scmp.ne.s32.totalorder %s392, %s393
      %p407 = scmp.eq.s32.totalorder %s55, 3
      %p408 = por %p406, %p407
      %p410 = scmp.ne.s32.totalorder %s393, %s409
      %p411 = scmp.eq.s32.totalorder %s55, 0
      %p412 = por %p410, %p411
      %s413 = ssub.s32 %s57, %s64
      %p414 = scmp.eq.s32.totalorder %s413, 0
      %s416 = sadd.s32 %s415, 1
      %s417 = scalar_select %p414, %s415, %s416
      %p420 = pneg %p414
      %p421 = scmp.eq.s32.totalorder %s49, 3
      %p422 = por %p420, %p421
      %p423 = scmp.ne.s32.totalorder %s415, %s418
      %p424 = scmp.eq.s32.totalorder %s49, 0
      %p425 = por %p423, %p424
      %p426 = scmp.ne.s32.totalorder %s415, %s418
      %p427 = scmp.eq.s32.totalorder %s54, 3
      %p428 = por %p426, %p427
      %p429 = scmp.ne.s32.totalorder %s418, %s419
      %p430 = scmp.eq.s32.totalorder %s54, 0
      %p431 = por %p429, %p430
      %p432 = scmp.ne.s32.totalorder %s418, %s419
      %p433 = scmp.eq.s32.totalorder %s55, 3
      %p434 = por %p432, %p433
      %p436 = scmp.ne.s32.totalorder %s419, %s435
      %p437 = scmp.eq.s32.totalorder %s55, 0
      %p438 = por %p436, %p437
      %s439 = ssub.s32 %s57, %s64
      %p440 = scmp.eq.s32.totalorder %s439, 0
      %s442 = sadd.s32 %s441, 1
      %s443 = scalar_select %p440, %s441, %s442
      %p446 = pneg %p440
      %p447 = scmp.eq.s32.totalorder %s49, 3
      %p448 = por %p446, %p447
      %p449 = scmp.ne.s32.totalorder %s441, %s444
      %p450 = scmp.eq.s32.totalorder %s49, 0
      %p451 = por %p449, %p450
      %p452 = scmp.ne.s32.totalorder %s441, %s444
      %p453 = scmp.eq.s32.totalorder %s54, 3
      %p454 = por %p452, %p453
      %p455 = scmp.ne.s32.totalorder %s444, %s445
      %p456 = scmp.eq.s32.totalorder %s54, 0
      %p457 = por %p455, %p456
      %p458 = scmp.ne.s32.totalorder %s444, %s445
      %p459 = scmp.eq.s32.totalorder %s55, 3
      %p460 = por %p458, %p459
      %p462 = scmp.ne.s32.totalorder %s445, %s461
      %p463 = scmp.eq.s32.totalorder %s55, 0
      %p464 = por %p462, %p463
      %s465 = ssub.s32 %s57, %s64
      %p466 = scmp.eq.s32.totalorder %s465, 0
      %s468 = sadd.s32 %s467, 1
      %s469 = scalar_select %p466, %s467, %s468
      %p472 = pneg %p466
      %p473 = scmp.eq.s32.totalorder %s49, 3
      %p474 = por %p472, %p473
      %p475 = scmp.ne.s32.totalorder %s467, %s470
      %p476 = scmp.eq.s32.totalorder %s49, 0
      %p477 = por %p475, %p476
      %p478 = scmp.ne.s32.totalorder %s467, %s470
      %p479 = scmp.eq.s32.totalorder %s54, 3
      %p480 = por %p478, %p479
      %p481 = scmp.ne.s32.totalorder %s470, %s471
      %p482 = scmp.eq.s32.totalorder %s54, 0
      %p483 = por %p481, %p482
      %p484 = scmp.ne.s32.totalorder %s470, %s471
      %p485 = scmp.eq.s32.totalorder %s55, 3
      %p486 = por %p484, %p485
      %p488 = scmp.ne.s32.totalorder %s471, %s487
      %p489 = scmp.eq.s32.totalorder %s55, 0
      %p490 = por %p488, %p489
      %s492 = sadd.s32 %s491, 1
      %p495 = scmp.eq.s32.totalorder %s49, 3
      %p496 = scmp.ne.s32.totalorder %s491, %s493
      %p497 = scmp.eq.s32.totalorder %s49, 0
      %p498 = por %p496, %p497
      %p499 = scmp.ne.s32.totalorder %s491, %s493
      %p500 = scmp.eq.s32.totalorder %s54, 3
      %p501 = por %p499, %p500
      %p502 = scmp.ne.s32.totalorder %s493, %s494
      %p503 = scmp.eq.s32.totalorder %s54, 0
      %p504 = por %p502, %p503
      %p505 = scmp.ne.s32.totalorder %s493, %s494
      %p506 = scmp.eq.s32.totalorder %s55, 3
      %p507 = por %p505, %p506
      %p509 = scmp.ne.s32.totalorder %s494, %s508
      %p510 = scmp.eq.s32.totalorder %s55, 0
      %p511 = por %p509, %p510
      %s513 = sadd.s32 %s512, 1
      %p516 = scmp.eq.s32.totalorder %s49, 3
      %p517 = scmp.ne.s32.totalorder %s512, %s514
      %p518 = scmp.eq.s32.totalorder %s49, 0
      %p519 = por %p517, %p518
      %p520 = scmp.ne.s32.totalorder %s512, %s514
      %p521 = scmp.eq.s32.totalorder %s54, 3
      %p522 = por %p520, %p521
      %p523 = scmp.ne.s32.totalorder %s514, %s515
      %p524 = scmp.eq.s32.totalorder %s54, 0
      %p525 = por %p523, %p524
      %p526 = scmp.ne.s32.totalorder %s514, %s515
      %p527 = scmp.eq.s32.totalorder %s55, 3
      %p528 = por %p526, %p527
      %p530 = scmp.ne.s32.totalorder %s515, %s529
      %p531 = scmp.eq.s32.totalorder %s55, 0
      %p532 = por %p530, %p531
      %s534 = sadd.s32 %s533, 1
      %p537 = scmp.eq.s32.totalorder %s49, 3
      %p538 = scmp.ne.s32.totalorder %s533, %s535
      %p539 = scmp.eq.s32.totalorder %s49, 0
      %p540 = por %p538, %p539
      %p541 = scmp.ne.s32.totalorder %s533, %s535
      %p542 = scmp.eq.s32.totalorder %s54, 3
      %p543 = por %p541, %p542
      %p544 = scmp.ne.s32.totalorder %s535, %s536
      %p545 = scmp.eq.s32.totalorder %s54, 0
      %p546 = por %p544, %p545
      %p547 = scmp.ne.s32.totalorder %s535, %s536
      %p548 = scmp.eq.s32.totalorder %s55, 3
      %p549 = por %p547, %p548
      %p551 = scmp.ne.s32.totalorder %s536, %s550
      %p552 = scmp.eq.s32.totalorder %s55, 0
      %p553 = por %p551, %p552
      %s554 = ssub.s32 %s56, %s68
      %p555 = scmp.eq.s32.totalorder %s554, 0
      %s557 = sadd.s32 %s556, 1
      %s558 = scalar_select %p555, %s556, %s557
      %p561 = pneg %p555
      %p562 = scmp.eq.s32.totalorder %s49, 3
      %p563 = por %p561, %p562
      %p564 = scmp.ne.s32.totalorder %s556, %s559
      %p565 = scmp.eq.s32.totalorder %s49, 0
      %p566 = por %p564, %p565
      %p567 = scmp.ne.s32.totalorder %s556, %s559
      %p568 = scmp.eq.s32.totalorder %s54, 3
      %p569 = por %p567, %p568
      %p570 = scmp.ne.s32.totalorder %s559, %s560
      %p571 = scmp.eq.s32.totalorder %s54, 0
      %p572 = por %p570, %p571
      %p573 = scmp.ne.s32.totalorder %s559, %s560
      %p574 = scmp.eq.s32.totalorder %s55, 3
      %p575 = por %p573, %p574
      %p577 = scmp.ne.s32.totalorder %s560, %s576
      %p578 = scmp.eq.s32.totalorder %s55, 0
      %p579 = por %p577, %p578
      %p580 = scmp.le.s32.totalorder 1, %s49
      %p581 = scmp.lt.s32.totalorder %s49, 5
      %p582 = pnand %p580, %p581
      %p583 = pneg %p582
      // Predicated region
      $region9: #{tpu_custom_call.1} parent=5 // pred_check
        _
      $region10: #{tpu_custom_call.1} parent=5 // pred_check_branch
        %585 = sbr.rel (%p582) target = $region12
      $region11: #{tpu_custom_call.1} parent=5 // pred_region
        %s586 = ssub.s32 %s49, 1
        // Predicated region
        $region13: #{tpu_custom_call.1} parent=11 // pred_check
          %p587 = pneg %p108
        $region14: #{tpu_custom_call.1} parent=11 // pred_check_branch
          %589 = sbr.rel (%p587) target = $region16
        $region15: #{tpu_custom_call.1} parent=11 // pred_region
          %s591 = ssub.s32 768, 768
          %592 = vsyncadd [#allocation8], %s591
          %s593 = sshll.u32 [#allocation7], 4
          %s594 = int_to_ptr.vmem [resolvable:$true] %s593
          %599 = dma.hbm_to_vmem [thread:$0]  %s1, 768, %s594, [#allocation8], 128, 128, 8
        $region16: #{tpu_custom_call.1} parent=11 // pred_fallthru
          _
        // Predicated region
        $region17: #{tpu_custom_call.1} parent=11 // pred_check
          %p600 = pneg %p129
        $region18: #{tpu_custom_call.1} parent=11 // pred_check_branch
          %602 = sbr.rel (%p600) target = $region20
        $region19: #{tpu_custom_call.1} parent=11 // pred_region
          %s604 = ssub.s32 1024, 1024
          %605 = vsyncadd [#allocation8], %s604
          %s606 = sshll.u32 [#allocation9], 4
          %s607 = int_to_ptr.vmem [resolvable:$true] %s606
          %612 = dma.hbm_to_vmem [thread:$0]  %s2, 1024, %s607, [#allocation8], 256, 256, 16
        $region20: #{tpu_custom_call.1} parent=11 // pred_fallthru
          _
        // Predicated region
        $region21: #{tpu_custom_call.1} parent=11 // pred_check
          %p613 = pneg %p150
        $region22: #{tpu_custom_call.1} parent=11 // pred_check_branch
          %615 = sbr.rel (%p613) target = $region24
        $region23: #{tpu_custom_call.1} parent=11 // pred_region
          %s617 = ssub.s32 32, 32
          %618 = vsyncadd [#allocation11], %s617
          %s620 = sshll.u32 [#allocation10], 4
          %s621 = int_to_ptr.vmem [resolvable:$true] %s620
          %623 = dma.hbm_to_vmem [thread:$0]  %s3, 32, %s621, [#allocation11]
        $region24: #{tpu_custom_call.1} parent=11 // pred_fallthru
          _
        // Predicated region
        $region25: #{tpu_custom_call.1} parent=11 // pred_check
          %p624 = pneg %p171
        $region26: #{tpu_custom_call.1} parent=11 // pred_check_branch
          %626 = sbr.rel (%p624) target = $region28
        $region27: #{tpu_custom_call.1} parent=11 // pred_region
          %s628 = ssub.s32 32, 32
          %629 = vsyncadd [#allocation11], %s628
          %s631 = sshll.u32 [#allocation12], 4
          %s632 = int_to_ptr.vmem [resolvable:$true] %s631
          %634 = dma.hbm_to_vmem [thread:$0]  %s4, 32, %s632, [#allocation11]
        $region28: #{tpu_custom_call.1} parent=11 // pred_fallthru
          _
        // Predicated region
        $region29: #{tpu_custom_call.1} parent=11 // pred_check
          %p635 = pneg %p504
        $region30: #{tpu_custom_call.1} parent=11 // pred_check_branch
          %637 = sbr.rel (%p635) target = $region32
        $region31: #{tpu_custom_call.1} parent=11 // pred_region
          _
        $region32: #{tpu_custom_call.1} parent=11 // pred_fallthru
          _
        // Predicated region
        $region33: #{tpu_custom_call.1} parent=11 // pred_check
          %p638 = pneg %p525
        $region34: #{tpu_custom_call.1} parent=11 // pred_check_branch
          %640 = sbr.rel (%p638) target = $region36
        $region35: #{tpu_custom_call.1} parent=11 // pred_region
          _
        $region36: #{tpu_custom_call.1} parent=11 // pred_fallthru
          _
        // Predicated region
        $region37: #{tpu_custom_call.1} parent=11 // pred_check
          %p641 = pneg %p546
        $region38: #{tpu_custom_call.1} parent=11 // pred_check_branch
          %643 = sbr.rel (%p641) target = $region40
        $region39: #{tpu_custom_call.1} parent=11 // pred_region
          %s645 = ssub.s32 2048, 2048
          %646 = vsyncadd [#allocation26], %s645
          %s647 = sshll.u32 [#allocation27], 4
          %s648 = int_to_ptr.vmem [resolvable:$true] %s647
          %653 = dma.hbm_to_vmem [thread:$0]  %s19, 2048, %s648, [#allocation26], 64, 64, 4
        $region40: #{tpu_custom_call.1} parent=11 // pred_fallthru
          _
      $region12: #{tpu_custom_call.1} parent=5 // pred_fallthru
        _
      %p654 = scmp.lt.s32.totalorder %s49, 4
      // Predicated region
      $region41: #{tpu_custom_call.1} parent=5 // pred_check
        %p655 = pneg %p654
      $region42: #{tpu_custom_call.1} parent=5 // pred_check_branch
        %657 = sbr.rel (%p655) target = $region44
      $region43: #{tpu_custom_call.1} parent=5 // pred_region
        // Predicated region
        $region45: #{tpu_custom_call.1} parent=43 // pred_check
          %p658 = pneg %p81
        $region46: #{tpu_custom_call.1} parent=43 // pred_check_branch
          %660 = sbr.rel (%p658) target = $region48
        $region47: #{tpu_custom_call.1} parent=43 // pred_region
          %s661 = sand.u32 %s71, 1
          %s662 = scalar_lea.sflag [#allocation5], %s661
          %s663 = sand.u32 %s71, 1
          %s664 = smul.addr %s663, 32
          %s665 = scalar_lea.vmem [#allocation4], %s664
          %s666 = smul.u32 2, %s56
          %s668 = ssub.s32 512, 512
          %669 = vsyncadd %s662, %s668
          %s670 = smul.addr %s666, 4
          %s671 = smul.addr %s670, 64
          %s672 = scalar_lea.hbm %s0, %s671
          %s673 = sshll.u32 %s665, 4
          %s674 = int_to_ptr.vmem [resolvable:$true] %s673
          %679 = dma.hbm_to_vmem [thread:$0]  %s672, 512, %s674, %s662, 64, 64, 4
        $region48: #{tpu_custom_call.1} parent=43 // pred_fallthru
          _
        // Predicated region
        $region49: #{tpu_custom_call.1} parent=43 // pred_check
          %p680 = pneg %p191
        $region50: #{tpu_custom_call.1} parent=43 // pred_check_branch
          %682 = sbr.rel (%p680) target = $region52
        $region51: #{tpu_custom_call.1} parent=43 // pred_region
          %s683 = sand.u32 %s49, 1
          %s684 = scalar_lea.sflag [#allocation14], %s683
          %s685 = sand.u32 %s181, 1
          %s686 = smul.addr %s685, 2
          %s687 = scalar_lea.vmem [#allocation13], %s686
          %s689 = ssub.s32 32, 32
          %690 = vsyncadd %s684, %s689
          %s691 = smul.addr %s57, 2
          %s692 = smul.addr %s691, 16
          %s693 = scalar_lea.hbm %s5, %s692
          %s695 = sshll.u32 %s687, 4
          %s696 = int_to_ptr.vmem [resolvable:$true] %s695
          %698 = dma.hbm_to_vmem [thread:$0]  %s693, 32, %s696, %s684
        $region52: #{tpu_custom_call.1} parent=43 // pred_fallthru
          _
        // Predicated region
        $region53: #{tpu_custom_call.1} parent=43 // pred_check
          %p699 = pneg %p217
        $region54: #{tpu_custom_call.1} parent=43 // pred_check_branch
          %701 = sbr.rel (%p699) target = $region56
        $region55: #{tpu_custom_call.1} parent=43 // pred_region
          %s702 = sand.u32 %s49, 1
          %s703 = scalar_lea.sflag [#allocation14], %s702
          %s704 = sand.u32 %s207, 1
          %s705 = smul.addr %s704, 2
          %s706 = scalar_lea.vmem [#allocation15], %s705
          %s708 = ssub.s32 32, 32
          %709 = vsyncadd %s703, %s708
          %s710 = smul.addr %s57, 2
          %s711 = smul.addr %s710, 16
          %s712 = scalar_lea.hbm %s6, %s711
          %s714 = sshll.u32 %s706, 4
          %s715 = int_to_ptr.vmem [resolvable:$true] %s714
          %717 = dma.hbm_to_vmem [thread:$0]  %s712, 32, %s715, %s703
        $region56: #{tpu_custom_call.1} parent=43 // pred_fallthru
          _
        // Predicated region
        $region57: #{tpu_custom_call.1} parent=43 // pred_check
          %p718 = pneg %p243
        $region58: #{tpu_custom_call.1} parent=43 // pred_check_branch
          %720 = sbr.rel (%p718) target = $region60
        $region59: #{tpu_custom_call.1} parent=43 // pred_region
          %s721 = sand.u32 %s49, 1
          %s722 = scalar_lea.sflag [#allocation17], %s721
          %s723 = sand.u32 %s233, 1
          %s724 = smul.addr %s723, 768
          %s725 = scalar_lea.vmem [#allocation16], %s724
          %s727 = ssub.s32 12288, 12288
          %728 = vsyncadd %s722, %s727
          %s729 = smul.addr %s57, 192
          %s730 = smul.addr %s729, 64
          %s731 = scalar_lea.hbm %s7, %s730
          %s732 = sshll.u32 %s725, 4
          %s733 = int_to_ptr.vmem [resolvable:$true] %s732
          %738 = dma.hbm_to_vmem [thread:$0]  %s731, 12288, %s733, %s722, 384, 384, 24
        $region60: #{tpu_custom_call.1} parent=43 // pred_fallthru
          _
        // Predicated region
        $region61: #{tpu_custom_call.1} parent=43 // pred_check
          %p739 = pneg %p269
        $region62: #{tpu_custom_call.1} parent=43 // pred_check_branch
          %741 = sbr.rel (%p739) target = $region64
        $region63: #{tpu_custom_call.1} parent=43 // pred_region
          %p742 = scmp.lt.s32.totalorder %s57, 1
          %s743 = scalar_select %p742, %s57, 1
          %s744 = smul.addr %s743, 6
          %s745 = scalar_lea.vmem %s8, %s744
        $region64: #{tpu_custom_call.1} parent=43 // pred_fallthru
          _
        // Predicated region
        $region65: #{tpu_custom_call.1} parent=43 // pred_check
          %p746 = pneg %p295
        $region66: #{tpu_custom_call.1} parent=43 // pred_check_branch
          %748 = sbr.rel (%p746) target = $region68
        $region67: #{tpu_custom_call.1} parent=43 // pred_region
          %s749 = sand.u32 %s49, 1
          %s750 = scalar_lea.sflag [#allocation17], %s749
          %s751 = sand.u32 %s285, 1
          %s752 = smul.addr %s751, 256
          %s753 = scalar_lea.vmem [#allocation18], %s752
          %s755 = ssub.s32 4096, 4096
          %756 = vsyncadd %s750, %s755
          %s757 = smul.addr %s57, 64
          %s758 = smul.addr %s757, 64
          %s759 = scalar_lea.hbm %s9, %s758
          %s760 = sshll.u32 %s753, 4
          %s761 = int_to_ptr.vmem [resolvable:$true] %s760
          %766 = dma.hbm_to_vmem [thread:$0]  %s759, 4096, %s761, %s750, 128, 128, 8
        $region68: #{tpu_custom_call.1} parent=43 // pred_fallthru
          _
        // Predicated region
        $region69: #{tpu_custom_call.1} parent=43 // pred_check
          %p767 = pneg %p321
        $region70: #{tpu_custom_call.1} parent=43 // pred_check_branch
          %769 = sbr.rel (%p767) target = $region72
        $region71: #{tpu_custom_call.1} parent=43 // pred_region
          %s770 = sand.u32 %s49, 1
          %s771 = scalar_lea.sflag [#allocation20], %s770
          %s772 = sand.u32 %s311, 1
          %s773 = smul.addr %s772, 2
          %s774 = scalar_lea.vmem [#allocation19], %s773
          %s776 = ssub.s32 32, 32
          %777 = vsyncadd %s771, %s776
          %s778 = smul.addr %s57, 2
          %s779 = smul.addr %s778, 16
          %s780 = scalar_lea.hbm %s10, %s779
          %s782 = sshll.u32 %s774, 4
          %s783 = int_to_ptr.vmem [resolvable:$true] %s782
          %785 = dma.hbm_to_vmem [thread:$0]  %s780, 32, %s783, %s771
        $region72: #{tpu_custom_call.1} parent=43 // pred_fallthru
          _
        // Predicated region
        $region73: #{tpu_custom_call.1} parent=43 // pred_check
          %p786 = pneg %p347
        $region74: #{tpu_custom_call.1} parent=43 // pred_check_branch
          %788 = sbr.rel (%p786) target = $region76
        $region75: #{tpu_custom_call.1} parent=43 // pred_region
          %s789 = sand.u32 %s49, 1
          %s790 = scalar_lea.sflag [#allocation20], %s789
          %s791 = sand.u32 %s337, 1
          %s792 = smul.addr %s791, 2
          %s793 = scalar_lea.vmem [#allocation21], %s792
          %s795 = ssub.s32 32, 32
          %796 = vsyncadd %s790, %s795
          %s797 = smul.addr %s57, 2
          %s798 = smul.addr %s797, 16
          %s799 = scalar_lea.hbm %s11, %s798
          %s801 = sshll.u32 %s793, 4
          %s802 = int_to_ptr.vmem [resolvable:$true] %s801
          %804 = dma.hbm_to_vmem [thread:$0]  %s799, 32, %s802, %s790
        $region76: #{tpu_custom_call.1} parent=43 // pred_fallthru
          _
        // Predicated region
        $region77: #{tpu_custom_call.1} parent=43 // pred_check
          %p805 = pneg %p373
        $region78: #{tpu_custom_call.1} parent=43 // pred_check_branch
          %807 = sbr.rel (%p805) target = $region80
        $region79: #{tpu_custom_call.1} parent=43 // pred_region
          %s808 = sand.u32 %s49, 1
          %s809 = scalar_lea.sflag [#allocation23], %s808
          %s810 = sand.u32 %s363, 1
          %s811 = smul.addr %s810, 2
          %s812 = scalar_lea.vmem [#allocation22], %s811
          %s814 = ssub.s32 32, 32
          %815 = vsyncadd %s809, %s814
          %s816 = smul.addr %s57, 2
          %s817 = smul.addr %s816, 16
          %s818 = scalar_lea.hbm %s12, %s817
          %s820 = sshll.u32 %s812, 4
          %s821 = int_to_ptr.vmem [resolvable:$true] %s820
          %823 = dma.hbm_to_vmem [thread:$0]  %s818, 32, %s821, %s809
        $region80: #{tpu_custom_call.1} parent=43 // pred_fallthru
          _
        // Predicated region
        $region81: #{tpu_custom_call.1} parent=43 // pred_check
          %p824 = pneg %p399
        $region82: #{tpu_custom_call.1} parent=43 // pred_check_branch
          %826 = sbr.rel (%p824) target = $region84
        $region83: #{tpu_custom_call.1} parent=43 // pred_region
          %s827 = sand.u32 %s49, 1
          %s828 = scalar_lea.sflag [#allocation23], %s827
          %s829 = sand.u32 %s389, 1
          %s830 = smul.addr %s829, 512
          %s831 = scalar_lea.vmem [#allocation24], %s830
          %s833 = ssub.s32 8192, 8192
          %834 = vsyncadd %s828, %s833
          %s835 = smul.addr %s57, 128
          %s836 = smul.addr %s835, 64
          %s837 = scalar_lea.hbm %s13, %s836
          %s838 = sshll.u32 %s831, 4
          %s839 = int_to_ptr.vmem [resolvable:$true] %s838
          %844 = dma.hbm_to_vmem [thread:$0]  %s837, 8192, %s839, %s828, 256, 256, 16
        $region84: #{tpu_custom_call.1} parent=43 // pred_fallthru
          _
        // Predicated region
        $region85: #{tpu_custom_call.1} parent=43 // pred_check
          %p845 = pneg %p425
        $region86: #{tpu_custom_call.1} parent=43 // pred_check_branch
          %847 = sbr.rel (%p845) target = $region88
        $region87: #{tpu_custom_call.1} parent=43 // pred_region
          %p848 = scmp.lt.s32.totalorder %s57, 1
          %s849 = scalar_select %p848, %s57, 1
          %s850 = smul.addr %s849, 4
          %s851 = scalar_lea.vmem %s14, %s850
        $region88: #{tpu_custom_call.1} parent=43 // pred_fallthru
          _
        // Predicated region
        $region89: #{tpu_custom_call.1} parent=43 // pred_check
          %p852 = pneg %p451
        $region90: #{tpu_custom_call.1} parent=43 // pred_check_branch
          %854 = sbr.rel (%p852) target = $region92
        $region91: #{tpu_custom_call.1} parent=43 // pred_region
          %s855 = sand.u32 %s49, 1
          %s856 = scalar_lea.sflag [#allocation26], %s855
          %s857 = sand.u32 %s441, 1
          %s858 = smul.addr %s857, 512
          %s859 = scalar_lea.vmem [#allocation25], %s858
          %s861 = ssub.s32 8192, 8192
          %862 = vsyncadd %s856, %s861
          %s863 = smul.addr %s57, 128
          %s864 = smul.addr %s863, 64
          %s865 = scalar_lea.hbm %s15, %s864
          %s866 = sshll.u32 %s859, 4
          %s867 = int_to_ptr.vmem [resolvable:$true] %s866
          %872 = dma.hbm_to_vmem [thread:$0]  %s865, 8192, %s867, %s856, 128, 128, 8
        $region92: #{tpu_custom_call.1} parent=43 // pred_fallthru
          _
        // Predicated region
        $region93: #{tpu_custom_call.1} parent=43 // pred_check
          %p873 = pneg %p477
        $region94: #{tpu_custom_call.1} parent=43 // pred_check_branch
          %875 = sbr.rel (%p873) target = $region96
        $region95: #{tpu_custom_call.1} parent=43 // pred_region
          %p876 = scmp.lt.s32.totalorder %s57, 1
          %s877 = scalar_select %p876, %s57, 1
          %s878 = smul.addr %s877, 2
          %s879 = scalar_lea.vmem %s16, %s878
        $region96: #{tpu_custom_call.1} parent=43 // pred_fallthru
          _
      $region44: #{tpu_custom_call.1} parent=5 // pred_fallthru
        _
      %p880 = scmp.le.s32.totalorder 1, %s49
      %p881 = scmp.lt.s32.totalorder %s49, 5
      %p882 = pnand %p880, %p881
      %p883 = pneg %p882
      // Predicated region
      $region97: #{tpu_custom_call.1} parent=5 // pred_check
        _
      $region98: #{tpu_custom_call.1} parent=5 // pred_check_branch
        %885 = sbr.rel (%p882) target = $region100
      $region99: #{tpu_custom_call.1} parent=5 // pred_region
        %s886 = ssub.s32 %s49, 1
        %s887 = sand.u32 %s74, 1
        %s888 = scalar_lea.sflag [#allocation5], %s887
        %s889 = sand.u32 %s74, 1
        %s890 = smul.addr %s889, 32
        %s891 = scalar_lea.vmem [#allocation4], %s890
        // Predicated region
        $region101: #{tpu_custom_call.1} parent=99 // pred_check
          %p892 = pneg %p87
        $region102: #{tpu_custom_call.1} parent=99 // pred_check_branch
          %894 = sbr.rel (%p892) target = $region104
        $region103: #{tpu_custom_call.1} parent=99 // pred_region
          %895 = dma.done %s888, 512
        $region104: #{tpu_custom_call.1} parent=99 // pred_fallthru
          _
        // Predicated region
        $region105: #{tpu_custom_call.1} parent=99 // pred_check
          %p896 = pneg %p108
        $region106: #{tpu_custom_call.1} parent=99 // pred_check_branch
          %898 = sbr.rel (%p896) target = $region108
        $region107: #{tpu_custom_call.1} parent=99 // pred_region
          %899 = dma.done [#allocation8], 768
        $region108: #{tpu_custom_call.1} parent=99 // pred_fallthru
          _
        // Predicated region
        $region109: #{tpu_custom_call.1} parent=99 // pred_check
          %p900 = pneg %p129
        $region110: #{tpu_custom_call.1} parent=99 // pred_check_branch
          %902 = sbr.rel (%p900) target = $region112
        $region111: #{tpu_custom_call.1} parent=99 // pred_region
          %903 = dma.done [#allocation8], 1024
        $region112: #{tpu_custom_call.1} parent=99 // pred_fallthru
          _
        // Predicated region
        $region113: #{tpu_custom_call.1} parent=99 // pred_check
          %p904 = pneg %p150
        $region114: #{tpu_custom_call.1} parent=99 // pred_check_branch
          %906 = sbr.rel (%p904) target = $region116
        $region115: #{tpu_custom_call.1} parent=99 // pred_region
          %907 = dma.done [#allocation11], 32
        $region116: #{tpu_custom_call.1} parent=99 // pred_fallthru
          _
        // Predicated region
        $region117: #{tpu_custom_call.1} parent=99 // pred_check
          %p908 = pneg %p171
        $region118: #{tpu_custom_call.1} parent=99 // pred_check_branch
          %910 = sbr.rel (%p908) target = $region120
        $region119: #{tpu_custom_call.1} parent=99 // pred_region
          %911 = dma.done [#allocation11], 32
        $region120: #{tpu_custom_call.1} parent=99 // pred_fallthru
          _
        %s912 = sand.u32 %s54, 1
        %s913 = scalar_lea.sflag [#allocation14], %s912
        %s914 = sand.u32 %s184, 1
        %s915 = smul.addr %s914, 2
        %s916 = scalar_lea.vmem [#allocation13], %s915
        // Predicated region
        $region121: #{tpu_custom_call.1} parent=99 // pred_check
          %p917 = pneg %p197
        $region122: #{tpu_custom_call.1} parent=99 // pred_check_branch
          %919 = sbr.rel (%p917) target = $region124
        $region123: #{tpu_custom_call.1} parent=99 // pred_region
          %920 = dma.done %s913, 32
        $region124: #{tpu_custom_call.1} parent=99 // pred_fallthru
          _
        %s921 = sand.u32 %s54, 1
        %s922 = scalar_lea.sflag [#allocation14], %s921
        %s923 = sand.u32 %s210, 1
        %s924 = smul.addr %s923, 2
        %s925 = scalar_lea.vmem [#allocation15], %s924
        // Predicated region
        $region125: #{tpu_custom_call.1} parent=99 // pred_check
          %p926 = pneg %p223
        $region126: #{tpu_custom_call.1} parent=99 // pred_check_branch
          %928 = sbr.rel (%p926) target = $region128
        $region127: #{tpu_custom_call.1} parent=99 // pred_region
          %929 = dma.done %s922, 32
        $region128: #{tpu_custom_call.1} parent=99 // pred_fallthru
          _
        %s930 = sand.u32 %s54, 1
        %s931 = scalar_lea.sflag [#allocation17], %s930
        %s932 = sand.u32 %s236, 1
        %s933 = smul.addr %s932, 768
        %s934 = scalar_lea.vmem [#allocation16], %s933
        // Predicated region
        $region129: #{tpu_custom_call.1} parent=99 // pred_check
          %p935 = pneg %p249
        $region130: #{tpu_custom_call.1} parent=99 // pred_check_branch
          %937 = sbr.rel (%p935) target = $region132
        $region131: #{tpu_custom_call.1} parent=99 // pred_region
          %938 = dma.done %s931, 12288
        $region132: #{tpu_custom_call.1} parent=99 // pred_fallthru
          _
        %s939 = sand.u32 %s54, 1
        %s940 = scalar_lea.sflag [#allocation17], %s939
        %s941 = sand.u32 %s288, 1
        %s942 = smul.addr %s941, 256
        %s943 = scalar_lea.vmem [#allocation18], %s942
        // Predicated region
        $region133: #{tpu_custom_call.1} parent=99 // pred_check
          %p944 = pneg %p301
        $region134: #{tpu_custom_call.1} parent=99 // pred_check_branch
          %946 = sbr.rel (%p944) target = $region136
        $region135: #{tpu_custom_call.1} parent=99 // pred_region
          %947 = dma.done %s940, 4096
        $region136: #{tpu_custom_call.1} parent=99 // pred_fallthru
          _
        %s948 = sand.u32 %s54, 1
        %s949 = scalar_lea.sflag [#allocation20], %s948
        %s950 = sand.u32 %s314, 1
        %s951 = smul.addr %s950, 2
        %s952 = scalar_lea.vmem [#allocation19], %s951
        // Predicated region
        $region137: #{tpu_custom_call.1} parent=99 // pred_check
          %p953 = pneg %p327
        $region138: #{tpu_custom_call.1} parent=99 // pred_check_branch
          %955 = sbr.rel (%p953) target = $region140
        $region139: #{tpu_custom_call.1} parent=99 // pred_region
          %956 = dma.done %s949, 32
        $region140: #{tpu_custom_call.1} parent=99 // pred_fallthru
          _
        %s957 = sand.u32 %s54, 1
        %s958 = scalar_lea.sflag [#allocation20], %s957
        %s959 = sand.u32 %s340, 1
        %s960 = smul.addr %s959, 2
        %s961 = scalar_lea.vmem [#allocation21], %s960
        // Predicated region
        $region141: #{tpu_custom_call.1} parent=99 // pred_check
          %p962 = pneg %p353
        $region142: #{tpu_custom_call.1} parent=99 // pred_check_branch
          %964 = sbr.rel (%p962) target = $region144
        $region143: #{tpu_custom_call.1} parent=99 // pred_region
          %965 = dma.done %s958, 32
        $region144: #{tpu_custom_call.1} parent=99 // pred_fallthru
          _
        %s966 = sand.u32 %s54, 1
        %s967 = scalar_lea.sflag [#allocation23], %s966
        %s968 = sand.u32 %s366, 1
        %s969 = smul.addr %s968, 2
        %s970 = scalar_lea.vmem [#allocation22], %s969
        // Predicated region
        $region145: #{tpu_custom_call.1} parent=99 // pred_check
          %p971 = pneg %p379
        $region146: #{tpu_custom_call.1} parent=99 // pred_check_branch
          %973 = sbr.rel (%p971) target = $region148
        $region147: #{tpu_custom_call.1} parent=99 // pred_region
          %974 = dma.done %s967, 32
        $region148: #{tpu_custom_call.1} parent=99 // pred_fallthru
          _
        %s975 = sand.u32 %s54, 1
        %s976 = scalar_lea.sflag [#allocation23], %s975
        %s977 = sand.u32 %s392, 1
        %s978 = smul.addr %s977, 512
        %s979 = scalar_lea.vmem [#allocation24], %s978
        // Predicated region
        $region149: #{tpu_custom_call.1} parent=99 // pred_check
          %p980 = pneg %p405
        $region150: #{tpu_custom_call.1} parent=99 // pred_check_branch
          %982 = sbr.rel (%p980) target = $region152
        $region151: #{tpu_custom_call.1} parent=99 // pred_region
          %983 = dma.done %s976, 8192
        $region152: #{tpu_custom_call.1} parent=99 // pred_fallthru
          _
        %s984 = sand.u32 %s54, 1
        %s985 = scalar_lea.sflag [#allocation26], %s984
        %s986 = sand.u32 %s444, 1
        %s987 = smul.addr %s986, 512
        %s988 = scalar_lea.vmem [#allocation25], %s987
        // Predicated region
        $region153: #{tpu_custom_call.1} parent=99 // pred_check
          %p989 = pneg %p457
        $region154: #{tpu_custom_call.1} parent=99 // pred_check_branch
          %991 = sbr.rel (%p989) target = $region156
        $region155: #{tpu_custom_call.1} parent=99 // pred_region
          %992 = dma.done %s985, 8192
        $region156: #{tpu_custom_call.1} parent=99 // pred_fallthru
          _
        // Predicated region
        $region157: #{tpu_custom_call.1} parent=99 // pred_check
          %p993 = pneg %p546
        $region158: #{tpu_custom_call.1} parent=99 // pred_check_branch
          %995 = sbr.rel (%p993) target = $region160
        $region159: #{tpu_custom_call.1} parent=99 // pred_region
          %996 = dma.done [#allocation26], 2048
        $region160: #{tpu_custom_call.1} parent=99 // pred_fallthru
          _
        %s997 = sand.u32 %s74, 1
        %s998 = scalar_lea.sflag [#allocation5], %s997
        %s999 = sand.u32 %s74, 1
        %s1000 = smul.addr %s999, 32
        %s1001 = scalar_lea.vmem [#allocation4], %s1000
        %p1002 = pneg %p87
        %p1003 = pneg %p84
        %p1004 = pneg %p108
        %p1005 = pneg %p105
        %p1006 = pneg %p129
        %p1007 = pneg %p126
        %p1008 = pneg %p150
        %p1009 = pneg %p147
        %p1010 = pneg %p171
        %p1011 = pneg %p168
        %s1012 = sand.u32 %s54, 1
        %s1013 = scalar_lea.sflag [#allocation14], %s1012
        %s1014 = sand.u32 %s184, 1
        %s1015 = smul.addr %s1014, 2
        %s1016 = scalar_lea.vmem [#allocation13], %s1015
        %p1017 = pneg %p197
        %p1018 = pneg %p194
        %s1019 = sand.u32 %s54, 1
        %s1020 = scalar_lea.sflag [#allocation14], %s1019
        %s1021 = sand.u32 %s210, 1
        %s1022 = smul.addr %s1021, 2
        %s1023 = scalar_lea.vmem [#allocation15], %s1022
        %p1024 = pneg %p223
        %p1025 = pneg %p220
        %s1026 = sand.u32 %s54, 1
        %s1027 = scalar_lea.sflag [#allocation17], %s1026
        %s1028 = sand.u32 %s236, 1
        %s1029 = smul.addr %s1028, 768
        %s1030 = scalar_lea.vmem [#allocation16], %s1029
        %p1031 = pneg %p249
        %p1032 = pneg %p246
        %p1033 = scmp.lt.s32.totalorder %s59, 1
        %s1034 = scalar_select %p1033, %s59, 1
        %s1035 = smul.addr %s1034, 6
        %s1036 = scalar_lea.vmem %s8, %s1035
        %p1037 = pneg %p275
        %p1038 = pneg %p272
        %s1039 = sand.u32 %s54, 1
        %s1040 = scalar_lea.sflag [#allocation17], %s1039
        %s1041 = sand.u32 %s288, 1
        %s1042 = smul.addr %s1041, 256
        %s1043 = scalar_lea.vmem [#allocation18], %s1042
        %p1044 = pneg %p301
        %p1045 = pneg %p298
        %s1046 = sand.u32 %s54, 1
        %s1047 = scalar_lea.sflag [#allocation20], %s1046
        %s1048 = sand.u32 %s314, 1
        %s1049 = smul.addr %s1048, 2
        %s1050 = scalar_lea.vmem [#allocation19], %s1049
        %p1051 = pneg %p327
        %p1052 = pneg %p324
        %s1053 = sand.u32 %s54, 1
        %s1054 = scalar_lea.sflag [#allocation20], %s1053
        %s1055 = sand.u32 %s340, 1
        %s1056 = smul.addr %s1055, 2
        %s1057 = scalar_lea.vmem [#allocation21], %s1056
        %p1058 = pneg %p353
        %p1059 = pneg %p350
        %s1060 = sand.u32 %s54, 1
        %s1061 = scalar_lea.sflag [#allocation23], %s1060
        %s1062 = sand.u32 %s366, 1
        %s1063 = smul.addr %s1062, 2
        %s1064 = scalar_lea.vmem [#allocation22], %s1063
        %p1065 = pneg %p379
        %p1066 = pneg %p376
        %s1067 = sand.u32 %s54, 1
        %s1068 = scalar_lea.sflag [#allocation23], %s1067
        %s1069 = sand.u32 %s392, 1
        %s1070 = smul.addr %s1069, 512
        %s1071 = scalar_lea.vmem [#allocation24], %s1070
        %p1072 = pneg %p405
        %p1073 = pneg %p402
        %p1074 = scmp.lt.s32.totalorder %s59, 1
        %s1075 = scalar_select %p1074, %s59, 1
        %s1076 = smul.addr %s1075, 4
        %s1077 = scalar_lea.vmem %s14, %s1076
        %p1078 = pneg %p431
        %p1079 = pneg %p428
        %s1080 = sand.u32 %s54, 1
        %s1081 = scalar_lea.sflag [#allocation26], %s1080
        %s1082 = sand.u32 %s444, 1
        %s1083 = smul.addr %s1082, 512
        %s1084 = scalar_lea.vmem [#allocation25], %s1083
        %p1085 = pneg %p457
        %p1086 = pneg %p454
        %p1087 = scmp.lt.s32.totalorder %s59, 1
        %s1088 = scalar_select %p1087, %s59, 1
        %s1089 = smul.addr %s1088, 2
        %s1090 = scalar_lea.vmem %s16, %s1089
        %p1091 = pneg %p483
        %p1092 = pneg %p480
        %p1093 = pneg %p504
        %p1094 = pneg %p501
        %p1095 = pneg %p525
        %p1096 = pneg %p522
        %p1097 = pneg %p546
        %p1098 = pneg %p543
        %p1099 = pneg %p572
        %p1100 = pneg %p569
        %s1101 = sand.u32 %s559, 1
        %s1102 = scalar_lea.sflag [#allocation6], %s1101
        %s1103 = sand.u32 %s559, 1
        %s1104 = smul.addr %s1103, 2
        %s1105 = scalar_lea.vmem [#allocation28], %s1104
        %s1106 = smul.u32 2, %s58
        %p1107 = scmp.lt.s32.totalorder %s59, 1
        %s1108 = scalar_select %p1107, %s59, 1
        %s1109 = smul.addr %s1108, 6
        %s1110 = scalar_lea.vmem %s8, %s1109
        %p1111 = scmp.lt.s32.totalorder %s59, 1
        %s1112 = scalar_select %p1111, %s59, 1
        %s1113 = smul.addr %s1112, 4
        %s1114 = scalar_lea.vmem %s14, %s1113
        %p1115 = scmp.lt.s32.totalorder %s59, 1
        %s1116 = scalar_select %p1115, %s59, 1
        %s1117 = smul.addr %s1116, 2
        %s1118 = scalar_lea.vmem %s16, %s1117
        %s1119 = smul.u32 2, %s58
        %p1121 = scmp.eq.s32.totalorder %s59, 0
        // Predicated region
        $region161: #{tpu_custom_call.1} parent=99 // pred_check
          %p1122 = pneg %p1121
        $region162: #{tpu_custom_call.1} parent=99 // pred_check_branch
          %1124 = sbr.rel (%p1122) target = $region164
        $region163: #{tpu_custom_call.1} parent=99 // pred_region
          %v1125 = vld [vmem:[%s891] sm:$0xf]
          %v1126 = vld [vmem:[%s891 + $0x4] sm:$0xf]
          %v1127 = vld [vmem:[%s891 + $0x8] sm:$0xf]
          %v1128 = vld [vmem:[%s891 + $0xc] sm:$0xf]
          %v1129 = vld [vmem:[%s891 + $0x10] sm:$0xf]
          %v1130 = vld [vmem:[%s891 + $0x14] sm:$0xf]
          %v1131 = vld [vmem:[%s891 + $0x18] sm:$0xf]
          %v1132 = vld [vmem:[%s891 + $0x1c] sm:$0xf]
          %v1133 = vld [vmem:[#allocation7] sm:$0xff]
          %v1134 = vld [vmem:[#allocation7 + $0x8] sm:$0xff]
          %v1135 = vld [vmem:[#allocation7 + $0x10] sm:$0xff]
          %v1136 = vld [vmem:[#allocation7 + $0x18] sm:$0xff]
          %v1137 = vld [vmem:[#allocation7 + $0x20] sm:$0xff]
          %v1138 = vld [vmem:[#allocation7 + $0x28] sm:$0xff]
          %v1147 = vunpack.c.l.b16 %v1125
          %v1148 = vunpack.c.l.b16 %v1126
          %v1149 = vunpack.c.l.b16 %v1127
          %v1150 = vunpack.c.l.b16 %v1128
          %v1151 = vunpack.c.l.b16 %v1129
          %v1152 = vunpack.c.l.b16 %v1130
          %v1153 = vunpack.c.l.b16 %v1131
          %v1154 = vunpack.c.l.b16 %v1132
          %v1155 = vpack.c.b16 %v1148, %v1147
          %v1156 = vpack.c.b16 %v1150, %v1149
          %v1157 = vpack.c.b16 %v1152, %v1151
          %v1158 = vpack.c.b16 %v1154, %v1153
          %v1165 = vunpack.c.l.b16 %v1133
          %v1166 = vunpack.c.h.b16 %v1133
          %v1167 = vunpack.c.l.b16 %v1134
          %v1168 = vunpack.c.h.b16 %v1134
          %v1169 = vunpack.c.l.b16 %v1135
          %v1170 = vunpack.c.h.b16 %v1135
          %v1171 = vunpack.c.l.b16 %v1136
          %v1172 = vunpack.c.h.b16 %v1136
          %v1173 = vunpack.c.l.b16 %v1137
          %v1174 = vunpack.c.h.b16 %v1137
          %v1175 = vunpack.c.l.b16 %v1138
          %v1176 = vunpack.c.h.b16 %v1138
          %v1177 = vpack.c.b16 %v1167, %v1165
          %v1178 = vpack.c.b16 %v1168, %v1166
          %v1179 = vpack.c.b16 %v1171, %v1169
          %v1180 = vpack.c.b16 %v1172, %v1170
          %v1181 = vpack.c.b16 %v1175, %v1173
          %v1182 = vpack.c.b16 %v1176, %v1174
          %vm1189 = vcmask 392192
          %v1191 = vsel %vm1189, %v1155, 0
          %v1194 = vsel %vm1189, %v1156, 0
          %v1197 = vsel %vm1189, %v1157, 0
          %v1200 = vsel %vm1189, %v1158, 0
          %1202 = vmatprep.subr.bf16.mxu0 0
          %1203 = vmatpush1.bf16.msra.mxu0 0
          %1204 = vmatprep.subr.bf16.mxu0 0
          %1205 = vmatpush1.bf16.msra.mxu0 0
          %1206 = vmatprep.subr.bf16.mxu0 0
          %1207 = vmatpush1.bf16.msra.mxu0 0
          %1208 = vmatprep.subr.bf16.mxu0 0
          %1209 = vmatpush1.bf16.msra.mxu0 0
          %1210 = vmatprep.subr.bf16.mxu0 0
          %1211 = vmatpush1.bf16.msra.mxu0 0
          %1212 = vmatprep.subr.bf16.mxu0 %v1182
          %1213 = vmatpush1.bf16.msra.mxu0 %v1181
          %1214 = vmatprep.subr.bf16.mxu0 %v1180
          %1215 = vmatpush1.bf16.msra.mxu0 %v1179
          %1216 = vmatprep.subr.bf16.mxu0 %v1178
          %1217 = vmatpush1.bf16.msra.mxu0 %v1177
          %1218 = vmatprep.subr.bf16.mxu0 0
          %1219 = vmatpush2.bf16.msra.mxu0 0
          %1220 = vmatprep.subr.bf16.mxu0 0
          %1221 = vmatpush2.bf16.msra.mxu0 0
          %1222 = vmatprep.subr.bf16.mxu0 0
          %1223 = vmatpush2.bf16.msra.mxu0 0
          %1224 = vmatprep.subr.bf16.mxu0 0
          %1225 = vmatpush2.bf16.msra.mxu0 0
          %1226 = vmatprep.subr.bf16.mxu0 0
          %1227 = vmatpush2.bf16.msra.mxu0 0
          %1228 = vmatprep.subr.bf16.mxu0 0
          %1229 = vmatpush2.bf16.msra.mxu0 0
          %1230 = vmatprep.subr.bf16.mxu0 0
          %1231 = vmatpush2.bf16.msra.mxu0 0
          %1232 = vmatprep.subr.bf16.mxu0 0
          %1233 = vmatpush2.bf16.msra.mxu0 0
          %1234 = vmatprep.mubr.bf16.mxu0 0
          %1235 = vmatmul.mubr.bf16.gmra.mxu0 %v1191
          %v1236 = vpop.f32.mrf.mxu0
          %v1237 = vadd.f32 0.0, %v1236
          %v1238 = vpop.f32.mrf.mxu0
          %v1239 = vadd.f32 0.0, %v1238
          %v1240 = vpop.f32.mrf.mxu0
          %v1241 = vadd.f32 0.0, %v1240
          %v1242 = vpop.f32.mrf.mxu0
          %v1243 = vadd.f32 0.0, %v1242
          %1244 = vmatprep.mubr.bf16.mxu0 0
          %1245 = vmatmul.mubr.bf16.gmra.mxu0 %v1194
          %v1246 = vpop.f32.mrf.mxu0
          %v1247 = vadd.f32 0.0, %v1246
          %v1248 = vpop.f32.mrf.mxu0
          %v1249 = vadd.f32 0.0, %v1248
          %v1250 = vpop.f32.mrf.mxu0
          %v1251 = vadd.f32 0.0, %v1250
          %v1252 = vpop.f32.mrf.mxu0
          %v1253 = vadd.f32 0.0, %v1252
          %1254 = vmatprep.mubr.bf16.mxu0 0
          %1255 = vmatmul.mubr.bf16.gmra.mxu0 %v1197
          %v1256 = vpop.f32.mrf.mxu0
          %v1257 = vadd.f32 0.0, %v1256
          %v1258 = vpop.f32.mrf.mxu0
          %v1259 = vadd.f32 0.0, %v1258
          %v1260 = vpop.f32.mrf.mxu0
          %v1261 = vadd.f32 0.0, %v1260
          %v1262 = vpop.f32.mrf.mxu0
          %v1263 = vadd.f32 0.0, %v1262
          %1264 = vmatprep.mubr.bf16.mxu0 0
          %1265 = vmatmul.mubr.bf16.gmra.mxu0 %v1200
          %v1266 = vpop.f32.mrf.mxu0
          %v1267 = vadd.f32 0.0, %v1266
          %v1268 = vpop.f32.mrf.mxu0
          %v1269 = vadd.f32 0.0, %v1268
          %v1270 = vpop.f32.mrf.mxu0
          %v1271 = vadd.f32 0.0, %v1270
          %v1272 = vpop.f32.mrf.mxu0
          %v1273 = vadd.f32 0.0, %v1272
          %1274 = vdwg.mxu0
          %v1275 = vld [vmem:[#allocation9] sm:$0xff]
          %v1276 = vld [vmem:[#allocation9 + $0x8] sm:$0xff]
          %v1277 = vld [vmem:[#allocation9 + $0x10] sm:$0xff]
          %v1278 = vld [vmem:[#allocation9 + $0x18] sm:$0xff]
          %v1279 = vld [vmem:[#allocation9 + $0x20] sm:$0xff]
          %v1280 = vld [vmem:[#allocation9 + $0x28] sm:$0xff]
          %v1281 = vld [vmem:[#allocation9 + $0x30] sm:$0xff]
          %v1282 = vld [vmem:[#allocation9 + $0x38] sm:$0xff]
          %v1283 = vadd.f32 %v1237, %v1275
          %v1284 = vadd.f32 %v1239, %v1276
          %v1285 = vadd.f32 %v1241, %v1277
          %v1286 = vadd.f32 %v1243, %v1278
          %v1287 = vadd.f32 %v1247, %v1279
          %v1288 = vadd.f32 %v1249, %v1280
          %v1289 = vadd.f32 %v1251, %v1281
          %v1290 = vadd.f32 %v1253, %v1282
          %v1291 = vadd.f32 %v1257, %v1275
          %v1292 = vadd.f32 %v1259, %v1276
          %v1293 = vadd.f32 %v1261, %v1277
          %v1294 = vadd.f32 %v1263, %v1278
          %v1295 = vadd.f32 %v1267, %v1279
          %v1296 = vadd.f32 %v1269, %v1280
          %v1297 = vadd.f32 %v1271, %v1281
          %v1298 = vadd.f32 %v1273, %v1282
          %v1299 = vld [vmem:[#allocation10] sm:$0x3]
          %v1300 = vld [vmem:[#allocation12] sm:$0x3]
          %v1301 = vadd.f32 %v1283, %v1284
          %1302 = vadd.xlane.f32.xlu0 %v1301
          %v1303 = vpop.xlane.xlu0 %1302
          %v1304 = vadd.f32 %v1285, %v1286
          %1305 = vadd.xlane.f32.xlu0 %v1304
          %v1306 = vpop.xlane.xlu0 %1305
          %v1307 = vadd.f32 %v1287, %v1288
          %1308 = vadd.xlane.f32.xlu0 %v1307
          %v1309 = vpop.xlane.xlu0 %1308
          %v1310 = vadd.f32 %v1289, %v1290
          %1311 = vadd.xlane.f32.xlu0 %v1310
          %v1312 = vpop.xlane.xlu0 %1311
          %v1313 = vadd.f32 %v1291, %v1292
          %1314 = vadd.xlane.f32.xlu0 %v1313
          %v1315 = vpop.xlane.xlu0 %1314
          %v1316 = vadd.f32 %v1293, %v1294
          %1317 = vadd.xlane.f32.xlu0 %v1316
          %v1318 = vpop.xlane.xlu0 %1317
          %v1319 = vadd.f32 %v1295, %v1296
          %1320 = vadd.xlane.f32.xlu0 %v1319
          %v1321 = vpop.xlane.xlu0 %1320
          %v1322 = vadd.f32 %v1297, %v1298
          %1323 = vadd.xlane.f32.xlu0 %v1322
          %v1324 = vpop.xlane.xlu0 %1323
          %v1325 = vrcp.pop 256.0
          %v1326 = vmul.f32 %v1303, %v1325
          %v1327 = vmul.f32 %v1306, %v1325
          %v1328 = vmul.f32 %v1309, %v1325
          %v1329 = vmul.f32 %v1312, %v1325
          %v1330 = vmul.f32 %v1315, %v1325
          %v1331 = vmul.f32 %v1318, %v1325
          %v1332 = vmul.f32 %v1321, %v1325
          %v1333 = vmul.f32 %v1324, %v1325
          %v1334 = vsub.f32 %v1283, %v1326
          %v1335 = vsub.f32 %v1284, %v1326
          %v1336 = vsub.f32 %v1285, %v1327
          %v1337 = vsub.f32 %v1286, %v1327
          %v1338 = vsub.f32 %v1287, %v1328
          %v1339 = vsub.f32 %v1288, %v1328
          %v1340 = vsub.f32 %v1289, %v1329
          %v1341 = vsub.f32 %v1290, %v1329
          %v1342 = vsub.f32 %v1291, %v1330
          %v1343 = vsub.f32 %v1292, %v1330
          %v1344 = vsub.f32 %v1293, %v1331
          %v1345 = vsub.f32 %v1294, %v1331
          %v1346 = vsub.f32 %v1295, %v1332
          %v1347 = vsub.f32 %v1296, %v1332
          %v1348 = vsub.f32 %v1297, %v1333
          %v1349 = vsub.f32 %v1298, %v1333
          %v1350 = vmul.f32 %v1334, %v1334
          %v1351 = vmul.f32 %v1335, %v1335
          %v1352 = vmul.f32 %v1336, %v1336
          %v1353 = vmul.f32 %v1337, %v1337
          %v1354 = vmul.f32 %v1338, %v1338
          %v1355 = vmul.f32 %v1339, %v1339
          %v1356 = vmul.f32 %v1340, %v1340
          %v1357 = vmul.f32 %v1341, %v1341
          %v1358 = vmul.f32 %v1342, %v1342
          %v1359 = vmul.f32 %v1343, %v1343
          %v1360 = vmul.f32 %v1344, %v1344
          %v1361 = vmul.f32 %v1345, %v1345
          %v1362 = vmul.f32 %v1346, %v1346
          %v1363 = vmul.f32 %v1347, %v1347
          %v1364 = vmul.f32 %v1348, %v1348
          %v1365 = vmul.f32 %v1349, %v1349
          %v1366 = vadd.f32 %v1350, %v1351
          %1367 = vadd.xlane.f32.xlu0 %v1366
          %v1368 = vpop.xlane.xlu0 %1367
          %v1369 = vadd.f32 %v1352, %v1353
          %1370 = vadd.xlane.f32.xlu0 %v1369
          %v1371 = vpop.xlane.xlu0 %1370
          %v1372 = vadd.f32 %v1354, %v1355
          %1373 = vadd.xlane.f32.xlu0 %v1372
          %v1374 = vpop.xlane.xlu0 %1373
          %v1375 = vadd.f32 %v1356, %v1357
          %1376 = vadd.xlane.f32.xlu0 %v1375
          %v1377 = vpop.xlane.xlu0 %1376
          %v1378 = vadd.f32 %v1358, %v1359
          %1379 = vadd.xlane.f32.xlu0 %v1378
          %v1380 = vpop.xlane.xlu0 %1379
          %v1381 = vadd.f32 %v1360, %v1361
          %1382 = vadd.xlane.f32.xlu0 %v1381
          %v1383 = vpop.xlane.xlu0 %1382
          %v1384 = vadd.f32 %v1362, %v1363
          %1385 = vadd.xlane.f32.xlu0 %v1384
          %v1386 = vpop.xlane.xlu0 %1385
          %v1387 = vadd.f32 %v1364, %v1365
          %1388 = vadd.xlane.f32.xlu0 %v1387
          %v1389 = vpop.xlane.xlu0 %1388
          %v1390 = vmul.f32 %v1368, %v1325
          %v1391 = vmul.f32 %v1371, %v1325
          %v1392 = vmul.f32 %v1374, %v1325
          %v1393 = vmul.f32 %v1377, %v1325
          %v1394 = vmul.f32 %v1380, %v1325
          %v1395 = vmul.f32 %v1383, %v1325
          %v1396 = vmul.f32 %v1386, %v1325
          %v1397 = vmul.f32 %v1389, %v1325
          %v1398 = vadd.f32 %v1390, 1e-05
          %v1399 = vadd.f32 %v1391, 1e-05
          %v1400 = vadd.f32 %v1392, 1e-05
          %v1401 = vadd.f32 %v1393, 1e-05
          %v1402 = vadd.f32 %v1394, 1e-05
          %v1403 = vadd.f32 %v1395, 1e-05
          %v1404 = vadd.f32 %v1396, 1e-05
          %v1405 = vadd.f32 %v1397, 1e-05
          %v1406 = vrsqrt.pop %v1398
          %v1407 = vrsqrt.pop %v1399
          %v1408 = vrsqrt.pop %v1400
          %v1409 = vrsqrt.pop %v1401
          %v1410 = vrsqrt.pop %v1402
          %v1411 = vrsqrt.pop %v1403
          %v1412 = vrsqrt.pop %v1404
          %v1413 = vrsqrt.pop %v1405
          %v1414 = vmul.f32 %v1334, %v1406
          %v1415 = vmul.f32 %v1335, %v1406
          %v1416 = vmul.f32 %v1336, %v1407
          %v1417 = vmul.f32 %v1337, %v1407
          %v1418 = vmul.f32 %v1338, %v1408
          %v1419 = vmul.f32 %v1339, %v1408
          %v1420 = vmul.f32 %v1340, %v1409
          %v1421 = vmul.f32 %v1341, %v1409
          %v1422 = vmul.f32 %v1342, %v1410
          %v1423 = vmul.f32 %v1343, %v1410
          %v1424 = vmul.f32 %v1344, %v1411
          %v1425 = vmul.f32 %v1345, %v1411
          %v1426 = vmul.f32 %v1346, %v1412
          %v1427 = vmul.f32 %v1347, %v1412
          %v1428 = vmul.f32 %v1348, %v1413
          %v1429 = vmul.f32 %v1349, %v1413
          %v1431 = vlaneseq
          %v1432 = vshrl.u32 %v1431, 7
          %v1433 = vsub.s32 0, %v1432
          %v1434 = vrot.slane %v1299, %v1433
          %v1435 = vlaneseq
          %v1436 = vshrl.u32 %v1435, 7
          %v1437 = vsub.s32 1, %v1436
          %v1438 = vrot.slane %v1299, %v1437
          %v1441 = vmul.f32 %v1414, %v1434
          %v1442 = vmul.f32 %v1415, %v1438
          %v1443 = vmul.f32 %v1416, %v1434
          %v1444 = vmul.f32 %v1417, %v1438
          %v1445 = vmul.f32 %v1418, %v1434
          %v1446 = vmul.f32 %v1419, %v1438
          %v1447 = vmul.f32 %v1420, %v1434
          %v1448 = vmul.f32 %v1421, %v1438
          %v1449 = vmul.f32 %v1422, %v1434
          %v1450 = vmul.f32 %v1423, %v1438
          %v1451 = vmul.f32 %v1424, %v1434
          %v1452 = vmul.f32 %v1425, %v1438
          %v1453 = vmul.f32 %v1426, %v1434
          %v1454 = vmul.f32 %v1427, %v1438
          %v1455 = vmul.f32 %v1428, %v1434
          %v1456 = vmul.f32 %v1429, %v1438
          %v1458 = vlaneseq
          %v1459 = vshrl.u32 %v1458, 7
          %v1460 = vsub.s32 0, %v1459
          %v1461 = vrot.slane %v1300, %v1460
          %v1462 = vlaneseq
          %v1463 = vshrl.u32 %v1462, 7
          %v1464 = vsub.s32 1, %v1463
          %v1465 = vrot.slane %v1300, %v1464
          %v1468 = vadd.f32 %v1441, %v1461
          %v1469 = vadd.f32 %v1442, %v1465
          %v1470 = vadd.f32 %v1443, %v1461
          %v1471 = vadd.f32 %v1444, %v1465
          %v1472 = vadd.f32 %v1445, %v1461
          %v1473 = vadd.f32 %v1446, %v1465
          %v1474 = vadd.f32 %v1447, %v1461
          %v1475 = vadd.f32 %v1448, %v1465
          %v1476 = vadd.f32 %v1449, %v1461
          %v1477 = vadd.f32 %v1450, %v1465
          %v1478 = vadd.f32 %v1451, %v1461
          %v1479 = vadd.f32 %v1452, %v1465
          %v1480 = vadd.f32 %v1453, %v1461
          %v1481 = vadd.f32 %v1454, %v1465
          %v1482 = vadd.f32 %v1455, %v1461
          %v1483 = vadd.f32 %v1456, %v1465
          %1484 = vst [vmem:[#allocation2] sm:$0xff] %v1468
          %1485 = vst [vmem:[#allocation2 + $0x8] sm:$0xff] %v1469
          %1486 = vst [vmem:[#allocation2 + $0x10] sm:$0xff] %v1470
          %1487 = vst [vmem:[#allocation2 + $0x18] sm:$0xff] %v1471
          %1488 = vst [vmem:[#allocation2 + $0x20] sm:$0xff] %v1472
          %1489 = vst [vmem:[#allocation2 + $0x28] sm:$0xff] %v1473
          %1490 = vst [vmem:[#allocation2 + $0x30] sm:$0xff] %v1474
          %1491 = vst [vmem:[#allocation2 + $0x38] sm:$0xff] %v1475
          %1492 = vst [vmem:[#allocation2 + $0x40] sm:$0xff] %v1476
          %1493 = vst [vmem:[#allocation2 + $0x48] sm:$0xff] %v1477
          %1494 = vst [vmem:[#allocation2 + $0x50] sm:$0xff] %v1478
          %1495 = vst [vmem:[#allocation2 + $0x58] sm:$0xff] %v1479
          %1496 = vst [vmem:[#allocation2 + $0x60] sm:$0xff] %v1480
          %1497 = vst [vmem:[#allocation2 + $0x68] sm:$0xff] %v1481
          %1498 = vst [vmem:[#allocation2 + $0x70] sm:$0xff] %v1482
          %1499 = vst [vmem:[#allocation2 + $0x78] sm:$0xff] %v1483
        $region164: #{tpu_custom_call.1} parent=99 // pred_fallthru
          _
        %v1500 = vld [vmem:[#allocation2] sm:$0xff]
        %v1501 = vld [vmem:[#allocation2 + $0x8] sm:$0xff]
        %v1502 = vld [vmem:[#allocation2 + $0x10] sm:$0xff]
        %v1503 = vld [vmem:[#allocation2 + $0x18] sm:$0xff]
        %v1504 = vld [vmem:[#allocation2 + $0x20] sm:$0xff]
        %v1505 = vld [vmem:[#allocation2 + $0x28] sm:$0xff]
        %v1506 = vld [vmem:[#allocation2 + $0x30] sm:$0xff]
        %v1507 = vld [vmem:[#allocation2 + $0x38] sm:$0xff]
        %v1508 = vld [vmem:[#allocation2 + $0x40] sm:$0xff]
        %v1509 = vld [vmem:[#allocation2 + $0x48] sm:$0xff]
        %v1510 = vld [vmem:[#allocation2 + $0x50] sm:$0xff]
        %v1511 = vld [vmem:[#allocation2 + $0x58] sm:$0xff]
        %v1512 = vld [vmem:[#allocation2 + $0x60] sm:$0xff]
        %v1513 = vld [vmem:[#allocation2 + $0x68] sm:$0xff]
        %v1514 = vld [vmem:[#allocation2 + $0x70] sm:$0xff]
        %v1515 = vld [vmem:[#allocation2 + $0x78] sm:$0xff]
        %v1516 = vld [vmem:[%s916] sm:$0x3]
        %v1517 = vld [vmem:[%s925] sm:$0x3]
        %v1518 = vadd.f32 %v1500, %v1501
        %1519 = vadd.xlane.f32.xlu0 %v1518
        %v1520 = vpop.xlane.xlu0 %1519
        %v1521 = vadd.f32 %v1502, %v1503
        %1522 = vadd.xlane.f32.xlu0 %v1521
        %v1523 = vpop.xlane.xlu0 %1522
        %v1524 = vadd.f32 %v1504, %v1505
        %1525 = vadd.xlane.f32.xlu0 %v1524
        %v1526 = vpop.xlane.xlu0 %1525
        %v1527 = vadd.f32 %v1506, %v1507
        %1528 = vadd.xlane.f32.xlu0 %v1527
        %v1529 = vpop.xlane.xlu0 %1528
        %v1530 = vadd.f32 %v1508, %v1509
        %1531 = vadd.xlane.f32.xlu0 %v1530
        %v1532 = vpop.xlane.xlu0 %1531
        %v1533 = vadd.f32 %v1510, %v1511
        %1534 = vadd.xlane.f32.xlu0 %v1533
        %v1535 = vpop.xlane.xlu0 %1534
        %v1536 = vadd.f32 %v1512, %v1513
        %1537 = vadd.xlane.f32.xlu0 %v1536
        %v1538 = vpop.xlane.xlu0 %1537
        %v1539 = vadd.f32 %v1514, %v1515
        %1540 = vadd.xlane.f32.xlu0 %v1539
        %v1541 = vpop.xlane.xlu0 %1540
        %v1542 = vrcp.pop 256.0
        %v1543 = vmul.f32 %v1520, %v1542
        %v1544 = vmul.f32 %v1523, %v1542
        %v1545 = vmul.f32 %v1526, %v1542
        %v1546 = vmul.f32 %v1529, %v1542
        %v1547 = vmul.f32 %v1532, %v1542
        %v1548 = vmul.f32 %v1535, %v1542
        %v1549 = vmul.f32 %v1538, %v1542
        %v1550 = vmul.f32 %v1541, %v1542
        %v1551 = vsub.f32 %v1500, %v1543
        %v1552 = vsub.f32 %v1501, %v1543
        %v1553 = vsub.f32 %v1502, %v1544
        %v1554 = vsub.f32 %v1503, %v1544
        %v1555 = vsub.f32 %v1504, %v1545
        %v1556 = vsub.f32 %v1505, %v1545
        %v1557 = vsub.f32 %v1506, %v1546
        %v1558 = vsub.f32 %v1507, %v1546
        %v1559 = vsub.f32 %v1508, %v1547
        %v1560 = vsub.f32 %v1509, %v1547
        %v1561 = vsub.f32 %v1510, %v1548
        %v1562 = vsub.f32 %v1511, %v1548
        %v1563 = vsub.f32 %v1512, %v1549
        %v1564 = vsub.f32 %v1513, %v1549
        %v1565 = vsub.f32 %v1514, %v1550
        %v1566 = vsub.f32 %v1515, %v1550
        %v1567 = vmul.f32 %v1551, %v1551
        %v1568 = vmul.f32 %v1552, %v1552
        %v1569 = vmul.f32 %v1553, %v1553
        %v1570 = vmul.f32 %v1554, %v1554
        %v1571 = vmul.f32 %v1555, %v1555
        %v1572 = vmul.f32 %v1556, %v1556
        %v1573 = vmul.f32 %v1557, %v1557
        %v1574 = vmul.f32 %v1558, %v1558
        %v1575 = vmul.f32 %v1559, %v1559
        %v1576 = vmul.f32 %v1560, %v1560
        %v1577 = vmul.f32 %v1561, %v1561
        %v1578 = vmul.f32 %v1562, %v1562
        %v1579 = vmul.f32 %v1563, %v1563
        %v1580 = vmul.f32 %v1564, %v1564
        %v1581 = vmul.f32 %v1565, %v1565
        %v1582 = vmul.f32 %v1566, %v1566
        %v1583 = vadd.f32 %v1567, %v1568
        %1584 = vadd.xlane.f32.xlu0 %v1583
        %v1585 = vpop.xlane.xlu0 %1584
        %v1586 = vadd.f32 %v1569, %v1570
        %1587 = vadd.xlane.f32.xlu0 %v1586
        %v1588 = vpop.xlane.xlu0 %1587
        %v1589 = vadd.f32 %v1571, %v1572
        %1590 = vadd.xlane.f32.xlu0 %v1589
        %v1591 = vpop.xlane.xlu0 %1590
        %v1592 = vadd.f32 %v1573, %v1574
        %1593 = vadd.xlane.f32.xlu0 %v1592
        %v1594 = vpop.xlane.xlu0 %1593
        %v1595 = vadd.f32 %v1575, %v1576
        %1596 = vadd.xlane.f32.xlu0 %v1595
        %v1597 = vpop.xlane.xlu0 %1596
        %v1598 = vadd.f32 %v1577, %v1578
        %1599 = vadd.xlane.f32.xlu0 %v1598
        %v1600 = vpop.xlane.xlu0 %1599
        %v1601 = vadd.f32 %v1579, %v1580
        %1602 = vadd.xlane.f32.xlu0 %v1601
        %v1603 = vpop.xlane.xlu0 %1602
        %v1604 = vadd.f32 %v1581, %v1582
        %1605 = vadd.xlane.f32.xlu0 %v1604
        %v1606 = vpop.xlane.xlu0 %1605
        %v1607 = vmul.f32 %v1585, %v1542
        %v1608 = vmul.f32 %v1588, %v1542
        %v1609 = vmul.f32 %v1591, %v1542
        %v1610 = vmul.f32 %v1594, %v1542
        %v1611 = vmul.f32 %v1597, %v1542
        %v1612 = vmul.f32 %v1600, %v1542
        %v1613 = vmul.f32 %v1603, %v1542
        %v1614 = vmul.f32 %v1606, %v1542
        %v1615 = vadd.f32 %v1607, 1e-05
        %v1616 = vadd.f32 %v1608, 1e-05
        %v1617 = vadd.f32 %v1609, 1e-05
        %v1618 = vadd.f32 %v1610, 1e-05
        %v1619 = vadd.f32 %v1611, 1e-05
        %v1620 = vadd.f32 %v1612, 1e-05
        %v1621 = vadd.f32 %v1613, 1e-05
        %v1622 = vadd.f32 %v1614, 1e-05
        %v1623 = vrsqrt.pop %v1615
        %v1624 = vrsqrt.pop %v1616
        %v1625 = vrsqrt.pop %v1617
        %v1626 = vrsqrt.pop %v1618
        %v1627 = vrsqrt.pop %v1619
        %v1628 = vrsqrt.pop %v1620
        %v1629 = vrsqrt.pop %v1621
        %v1630 = vrsqrt.pop %v1622
        %v1631 = vmul.f32 %v1551, %v1623
        %v1632 = vmul.f32 %v1552, %v1623
        %v1633 = vmul.f32 %v1553, %v1624
        %v1634 = vmul.f32 %v1554, %v1624
        %v1635 = vmul.f32 %v1555, %v1625
        %v1636 = vmul.f32 %v1556, %v1625
        %v1637 = vmul.f32 %v1557, %v1626
        %v1638 = vmul.f32 %v1558, %v1626
        %v1639 = vmul.f32 %v1559, %v1627
        %v1640 = vmul.f32 %v1560, %v1627
        %v1641 = vmul.f32 %v1561, %v1628
        %v1642 = vmul.f32 %v1562, %v1628
        %v1643 = vmul.f32 %v1563, %v1629
        %v1644 = vmul.f32 %v1564, %v1629
        %v1645 = vmul.f32 %v1565, %v1630
        %v1646 = vmul.f32 %v1566, %v1630
        %v1648 = vlaneseq
        %v1649 = vshrl.u32 %v1648, 7
        %v1650 = vsub.s32 0, %v1649
        %v1651 = vrot.slane %v1516, %v1650
        %v1652 = vlaneseq
        %v1653 = vshrl.u32 %v1652, 7
        %v1654 = vsub.s32 1, %v1653
        %v1655 = vrot.slane %v1516, %v1654
        %v1658 = vmul.f32 %v1631, %v1651
        %v1659 = vmul.f32 %v1632, %v1655
        %v1660 = vmul.f32 %v1633, %v1651
        %v1661 = vmul.f32 %v1634, %v1655
        %v1662 = vmul.f32 %v1635, %v1651
        %v1663 = vmul.f32 %v1636, %v1655
        %v1664 = vmul.f32 %v1637, %v1651
        %v1665 = vmul.f32 %v1638, %v1655
        %v1666 = vmul.f32 %v1639, %v1651
        %v1667 = vmul.f32 %v1640, %v1655
        %v1668 = vmul.f32 %v1641, %v1651
        %v1669 = vmul.f32 %v1642, %v1655
        %v1670 = vmul.f32 %v1643, %v1651
        %v1671 = vmul.f32 %v1644, %v1655
        %v1672 = vmul.f32 %v1645, %v1651
        %v1673 = vmul.f32 %v1646, %v1655
        %v1675 = vlaneseq
        %v1676 = vshrl.u32 %v1675, 7
        %v1677 = vsub.s32 0, %v1676
        %v1678 = vrot.slane %v1517, %v1677
        %v1679 = vlaneseq
        %v1680 = vshrl.u32 %v1679, 7
        %v1681 = vsub.s32 1, %v1680
        %v1682 = vrot.slane %v1517, %v1681
        %v1685 = vadd.f32 %v1658, %v1678
        %v1686 = vadd.f32 %v1659, %v1682
        %v1687 = vadd.f32 %v1660, %v1678
        %v1688 = vadd.f32 %v1661, %v1682
        %v1689 = vadd.f32 %v1662, %v1678
        %v1690 = vadd.f32 %v1663, %v1682
        %v1691 = vadd.f32 %v1664, %v1678
        %v1692 = vadd.f32 %v1665, %v1682
        %v1693 = vadd.f32 %v1666, %v1678
        %v1694 = vadd.f32 %v1667, %v1682
        %v1695 = vadd.f32 %v1668, %v1678
        %v1696 = vadd.f32 %v1669, %v1682
        %v1697 = vadd.f32 %v1670, %v1678
        %v1698 = vadd.f32 %v1671, %v1682
        %v1699 = vadd.f32 %v1672, %v1678
        %v1700 = vadd.f32 %v1673, %v1682
        %v1701 = vpack.c.bf16 %v1687, %v1685
        %v1702 = vpack.c.bf16 %v1688, %v1686
        %v1703 = vpack.c.bf16 %v1691, %v1689
        %v1704 = vpack.c.bf16 %v1692, %v1690
        %v1705 = vpack.c.bf16 %v1695, %v1693
        %v1706 = vpack.c.bf16 %v1696, %v1694
        %v1707 = vpack.c.bf16 %v1699, %v1697
        %v1708 = vpack.c.bf16 %v1700, %v1698
        %v1709 = vld [vmem:[%s934] sm:$0xff]
        %v1710 = vld [vmem:[%s934 + $0x8] sm:$0xff]
        %v1711 = vld [vmem:[%s934 + $0x10] sm:$0xff]
        %v1712 = vld [vmem:[%s934 + $0x18] sm:$0xff]
        %v1713 = vld [vmem:[%s934 + $0x20] sm:$0xff]
        %v1714 = vld [vmem:[%s934 + $0x28] sm:$0xff]
        %v1715 = vld [vmem:[%s934 + $0x30] sm:$0xff]
        %v1716 = vld [vmem:[%s934 + $0x38] sm:$0xff]
        %v1717 = vld [vmem:[%s934 + $0x40] sm:$0xff]
        %v1718 = vld [vmem:[%s934 + $0x48] sm:$0xff]
        %v1719 = vld [vmem:[%s934 + $0x50] sm:$0xff]
        %v1720 = vld [vmem:[%s934 + $0x58] sm:$0xff]
        %v1721 = vld [vmem:[%s934 + $0x60] sm:$0xff]
        %v1722 = vld [vmem:[%s934 + $0x68] sm:$0xff]
        %v1723 = vld [vmem:[%s934 + $0x70] sm:$0xff]
        %v1724 = vld [vmem:[%s934 + $0x78] sm:$0xff]
        %v1725 = vld [vmem:[%s934 + $0x80] sm:$0xff]
        %v1726 = vld [vmem:[%s934 + $0x88] sm:$0xff]
        %v1727 = vld [vmem:[%s934 + $0x90] sm:$0xff]
        %v1728 = vld [vmem:[%s934 + $0x98] sm:$0xff]
        %v1729 = vld [vmem:[%s934 + $0xa0] sm:$0xff]
        %v1730 = vld [vmem:[%s934 + $0xa8] sm:$0xff]
        %v1731 = vld [vmem:[%s934 + $0xb0] sm:$0xff]
        %v1732 = vld [vmem:[%s934 + $0xb8] sm:$0xff]
        %v1733 = vld [vmem:[%s934 + $0xc0] sm:$0xff]
        %v1734 = vld [vmem:[%s934 + $0xc8] sm:$0xff]
        %v1735 = vld [vmem:[%s934 + $0xd0] sm:$0xff]
        %v1736 = vld [vmem:[%s934 + $0xd8] sm:$0xff]
        %v1737 = vld [vmem:[%s934 + $0xe0] sm:$0xff]
        %v1738 = vld [vmem:[%s934 + $0xe8] sm:$0xff]
        %v1739 = vld [vmem:[%s934 + $0xf0] sm:$0xff]
        %v1740 = vld [vmem:[%s934 + $0xf8] sm:$0xff]
        %v1741 = vld [vmem:[%s934 + $0x100] sm:$0xff]
        %v1742 = vld [vmem:[%s934 + $0x108] sm:$0xff]
        %v1743 = vld [vmem:[%s934 + $0x110] sm:$0xff]
        %v1744 = vld [vmem:[%s934 + $0x118] sm:$0xff]
        %v1745 = vld [vmem:[%s934 + $0x120] sm:$0xff]
        %v1746 = vld [vmem:[%s934 + $0x128] sm:$0xff]
        %v1747 = vld [vmem:[%s934 + $0x130] sm:$0xff]
        %v1748 = vld [vmem:[%s934 + $0x138] sm:$0xff]
        %v1749 = vld [vmem:[%s934 + $0x140] sm:$0xff]
        %v1750 = vld [vmem:[%s934 + $0x148] sm:$0xff]
        %v1751 = vld [vmem:[%s934 + $0x150] sm:$0xff]
        %v1752 = vld [vmem:[%s934 + $0x158] sm:$0xff]
        %v1753 = vld [vmem:[%s934 + $0x160] sm:$0xff]
        %v1754 = vld [vmem:[%s934 + $0x168] sm:$0xff]
        %v1755 = vld [vmem:[%s934 + $0x170] sm:$0xff]
        %v1756 = vld [vmem:[%s934 + $0x178] sm:$0xff]
        %v1757 = vld [vmem:[%s934 + $0x180] sm:$0xff]
        %v1758 = vld [vmem:[%s934 + $0x188] sm:$0xff]
        %v1759 = vld [vmem:[%s934 + $0x190] sm:$0xff]
        %v1760 = vld [vmem:[%s934 + $0x198] sm:$0xff]
        %v1761 = vld [vmem:[%s934 + $0x1a0] sm:$0xff]
        %v1762 = vld [vmem:[%s934 + $0x1a8] sm:$0xff]
        %v1763 = vld [vmem:[%s934 + $0x1b0] sm:$0xff]
        %v1764 = vld [vmem:[%s934 + $0x1b8] sm:$0xff]
        %v1765 = vld [vmem:[%s934 + $0x1c0] sm:$0xff]
        %v1766 = vld [vmem:[%s934 + $0x1c8] sm:$0xff]
        %v1767 = vld [vmem:[%s934 + $0x1d0] sm:$0xff]
        %v1768 = vld [vmem:[%s934 + $0x1d8] sm:$0xff]
        %v1769 = vld [vmem:[%s934 + $0x1e0] sm:$0xff]
        %v1770 = vld [vmem:[%s934 + $0x1e8] sm:$0xff]
        %v1771 = vld [vmem:[%s934 + $0x1f0] sm:$0xff]
        %v1772 = vld [vmem:[%s934 + $0x1f8] sm:$0xff]
        %v1773 = vld [vmem:[%s934 + $0x200] sm:$0xff]
        %v1774 = vld [vmem:[%s934 + $0x208] sm:$0xff]
        %v1775 = vld [vmem:[%s934 + $0x210] sm:$0xff]
        %v1776 = vld [vmem:[%s934 + $0x218] sm:$0xff]
        %v1777 = vld [vmem:[%s934 + $0x220] sm:$0xff]
        %v1778 = vld [vmem:[%s934 + $0x228] sm:$0xff]
        %v1779 = vld [vmem:[%s934 + $0x230] sm:$0xff]
        %v1780 = vld [vmem:[%s934 + $0x238] sm:$0xff]
        %v1781 = vld [vmem:[%s934 + $0x240] sm:$0xff]
        %v1782 = vld [vmem:[%s934 + $0x248] sm:$0xff]
        %v1783 = vld [vmem:[%s934 + $0x250] sm:$0xff]
        %v1784 = vld [vmem:[%s934 + $0x258] sm:$0xff]
        %v1785 = vld [vmem:[%s934 + $0x260] sm:$0xff]
        %v1786 = vld [vmem:[%s934 + $0x268] sm:$0xff]
        %v1787 = vld [vmem:[%s934 + $0x270] sm:$0xff]
        %v1788 = vld [vmem:[%s934 + $0x278] sm:$0xff]
        %v1789 = vld [vmem:[%s934 + $0x280] sm:$0xff]
        %v1790 = vld [vmem:[%s934 + $0x288] sm:$0xff]
        %v1791 = vld [vmem:[%s934 + $0x290] sm:$0xff]
        %v1792 = vld [vmem:[%s934 + $0x298] sm:$0xff]
        %v1793 = vld [vmem:[%s934 + $0x2a0] sm:$0xff]
        %v1794 = vld [vmem:[%s934 + $0x2a8] sm:$0xff]
        %v1795 = vld [vmem:[%s934 + $0x2b0] sm:$0xff]
        %v1796 = vld [vmem:[%s934 + $0x2b8] sm:$0xff]
        %v1797 = vld [vmem:[%s934 + $0x2c0] sm:$0xff]
        %v1798 = vld [vmem:[%s934 + $0x2c8] sm:$0xff]
        %v1799 = vld [vmem:[%s934 + $0x2d0] sm:$0xff]
        %v1800 = vld [vmem:[%s934 + $0x2d8] sm:$0xff]
        %v1801 = vld [vmem:[%s934 + $0x2e0] sm:$0xff]
        %v1802 = vld [vmem:[%s934 + $0x2e8] sm:$0xff]
        %v1803 = vld [vmem:[%s934 + $0x2f0] sm:$0xff]
        %v1804 = vld [vmem:[%s934 + $0x2f8] sm:$0xff]
        %v1805 = vld [vmem:[%s1110] sm:$0x3f]
        %v1807 = vlaneseq
        %v1808 = vshrl.u32 %v1807, 7
        %v1809 = vsub.s32 0, %v1808
        %v1810 = vrot.slane %v1805, %v1809
        %v1811 = vlaneseq
        %v1812 = vshrl.u32 %v1811, 7
        %v1813 = vsub.s32 1, %v1812
        %v1814 = vrot.slane %v1805, %v1813
        %v1815 = vlaneseq
        %v1816 = vshrl.u32 %v1815, 7
        %v1817 = vsub.s32 2, %v1816
        %v1818 = vrot.slane %v1805, %v1817
        %v1819 = vlaneseq
        %v1820 = vshrl.u32 %v1819, 7
        %v1821 = vsub.s32 3, %v1820
        %v1822 = vrot.slane %v1805, %v1821
        %v1823 = vlaneseq
        %v1824 = vshrl.u32 %v1823, 7
        %v1825 = vsub.s32 4, %v1824
        %v1826 = vrot.slane %v1805, %v1825
        %v1827 = vlaneseq
        %v1828 = vshrl.u32 %v1827, 7
        %v1829 = vsub.s32 5, %v1828
        %v1830 = vrot.slane %v1805, %v1829
        %v1933 = vunpack.c.l.b16 %v1709
        %v1934 = vunpack.c.h.b16 %v1709
        %v1935 = vunpack.c.l.b16 %v1710
        %v1936 = vunpack.c.h.b16 %v1710
        %v1937 = vunpack.c.l.b16 %v1711
        %v1938 = vunpack.c.h.b16 %v1711
        %v1939 = vunpack.c.l.b16 %v1712
        %v1940 = vunpack.c.h.b16 %v1712
        %v1941 = vunpack.c.l.b16 %v1713
        %v1942 = vunpack.c.h.b16 %v1713
        %v1943 = vunpack.c.l.b16 %v1714
        %v1944 = vunpack.c.h.b16 %v1714
        %v1945 = vunpack.c.l.b16 %v1715
        %v1946 = vunpack.c.h.b16 %v1715
        %v1947 = vunpack.c.l.b16 %v1716
        %v1948 = vunpack.c.h.b16 %v1716
        %v1949 = vunpack.c.l.b16 %v1717
        %v1950 = vunpack.c.h.b16 %v1717
        %v1951 = vunpack.c.l.b16 %v1718
        %v1952 = vunpack.c.h.b16 %v1718
        %v1953 = vunpack.c.l.b16 %v1719
        %v1954 = vunpack.c.h.b16 %v1719
        %v1955 = vunpack.c.l.b16 %v1720
        %v1956 = vunpack.c.h.b16 %v1720
        %v1957 = vunpack.c.l.b16 %v1721
        %v1958 = vunpack.c.h.b16 %v1721
        %v1959 = vunpack.c.l.b16 %v1722
        %v1960 = vunpack.c.h.b16 %v1722
        %v1961 = vunpack.c.l.b16 %v1723
        %v1962 = vunpack.c.h.b16 %v1723
        %v1963 = vunpack.c.l.b16 %v1724
        %v1964 = vunpack.c.h.b16 %v1724
        %v1965 = vunpack.c.l.b16 %v1725
        %v1966 = vunpack.c.h.b16 %v1725
        %v1967 = vunpack.c.l.b16 %v1726
        %v1968 = vunpack.c.h.b16 %v1726
        %v1969 = vunpack.c.l.b16 %v1727
        %v1970 = vunpack.c.h.b16 %v1727
        %v1971 = vunpack.c.l.b16 %v1728
        %v1972 = vunpack.c.h.b16 %v1728
        %v1973 = vunpack.c.l.b16 %v1729
        %v1974 = vunpack.c.h.b16 %v1729
        %v1975 = vunpack.c.l.b16 %v1730
        %v1976 = vunpack.c.h.b16 %v1730
        %v1977 = vunpack.c.l.b16 %v1731
        %v1978 = vunpack.c.h.b16 %v1731
        %v1979 = vunpack.c.l.b16 %v1732
        %v1980 = vunpack.c.h.b16 %v1732
        %v1981 = vunpack.c.l.b16 %v1733
        %v1982 = vunpack.c.h.b16 %v1733
        %v1983 = vunpack.c.l.b16 %v1734
        %v1984 = vunpack.c.h.b16 %v1734
        %v1985 = vunpack.c.l.b16 %v1735
        %v1986 = vunpack.c.h.b16 %v1735
        %v1987 = vunpack.c.l.b16 %v1736
        %v1988 = vunpack.c.h.b16 %v1736
        %v1989 = vunpack.c.l.b16 %v1737
        %v1990 = vunpack.c.h.b16 %v1737
        %v1991 = vunpack.c.l.b16 %v1738
        %v1992 = vunpack.c.h.b16 %v1738
        %v1993 = vunpack.c.l.b16 %v1739
        %v1994 = vunpack.c.h.b16 %v1739
        %v1995 = vunpack.c.l.b16 %v1740
        %v1996 = vunpack.c.h.b16 %v1740
        %v1997 = vunpack.c.l.b16 %v1741
        %v1998 = vunpack.c.h.b16 %v1741
        %v1999 = vunpack.c.l.b16 %v1742
        %v2000 = vunpack.c.h.b16 %v1742
        %v2001 = vunpack.c.l.b16 %v1743
        %v2002 = vunpack.c.h.b16 %v1743
        %v2003 = vunpack.c.l.b16 %v1744
        %v2004 = vunpack.c.h.b16 %v1744
        %v2005 = vunpack.c.l.b16 %v1745
        %v2006 = vunpack.c.h.b16 %v1745
        %v2007 = vunpack.c.l.b16 %v1746
        %v2008 = vunpack.c.h.b16 %v1746
        %v2009 = vunpack.c.l.b16 %v1747
        %v2010 = vunpack.c.h.b16 %v1747
        %v2011 = vunpack.c.l.b16 %v1748
        %v2012 = vunpack.c.h.b16 %v1748
        %v2013 = vunpack.c.l.b16 %v1749
        %v2014 = vunpack.c.h.b16 %v1749
        %v2015 = vunpack.c.l.b16 %v1750
        %v2016 = vunpack.c.h.b16 %v1750
        %v2017 = vunpack.c.l.b16 %v1751
        %v2018 = vunpack.c.h.b16 %v1751
        %v2019 = vunpack.c.l.b16 %v1752
        %v2020 = vunpack.c.h.b16 %v1752
        %v2021 = vunpack.c.l.b16 %v1753
        %v2022 = vunpack.c.h.b16 %v1753
        %v2023 = vunpack.c.l.b16 %v1754
        %v2024 = vunpack.c.h.b16 %v1754
        %v2025 = vunpack.c.l.b16 %v1755
        %v2026 = vunpack.c.h.b16 %v1755
        %v2027 = vunpack.c.l.b16 %v1756
        %v2028 = vunpack.c.h.b16 %v1756
        %v2029 = vunpack.c.l.b16 %v1757
        %v2030 = vunpack.c.h.b16 %v1757
        %v2031 = vunpack.c.l.b16 %v1758
        %v2032 = vunpack.c.h.b16 %v1758
        %v2033 = vunpack.c.l.b16 %v1759
        %v2034 = vunpack.c.h.b16 %v1759
        %v2035 = vunpack.c.l.b16 %v1760
        %v2036 = vunpack.c.h.b16 %v1760
        %v2037 = vunpack.c.l.b16 %v1761
        %v2038 = vunpack.c.h.b16 %v1761
        %v2039 = vunpack.c.l.b16 %v1762
        %v2040 = vunpack.c.h.b16 %v1762
        %v2041 = vunpack.c.l.b16 %v1763
        %v2042 = vunpack.c.h.b16 %v1763
        %v2043 = vunpack.c.l.b16 %v1764
        %v2044 = vunpack.c.h.b16 %v1764
        %v2045 = vunpack.c.l.b16 %v1765
        %v2046 = vunpack.c.h.b16 %v1765
        %v2047 = vunpack.c.l.b16 %v1766
        %v2048 = vunpack.c.h.b16 %v1766
        %v2049 = vunpack.c.l.b16 %v1767
        %v2050 = vunpack.c.h.b16 %v1767
        %v2051 = vunpack.c.l.b16 %v1768
        %v2052 = vunpack.c.h.b16 %v1768
        %v2053 = vunpack.c.l.b16 %v1769
        %v2054 = vunpack.c.h.b16 %v1769
        %v2055 = vunpack.c.l.b16 %v1770
        %v2056 = vunpack.c.h.b16 %v1770
        %v2057 = vunpack.c.l.b16 %v1771
        %v2058 = vunpack.c.h.b16 %v1771
        %v2059 = vunpack.c.l.b16 %v1772
        %v2060 = vunpack.c.h.b16 %v1772
        %v2061 = vunpack.c.l.b16 %v1773
        %v2062 = vunpack.c.h.b16 %v1773
        %v2063 = vunpack.c.l.b16 %v1774
        %v2064 = vunpack.c.h.b16 %v1774
        %v2065 = vunpack.c.l.b16 %v1775
        %v2066 = vunpack.c.h.b16 %v1775
        %v2067 = vunpack.c.l.b16 %v1776
        %v2068 = vunpack.c.h.b16 %v1776
        %v2069 = vunpack.c.l.b16 %v1777
        %v2070 = vunpack.c.h.b16 %v1777
        %v2071 = vunpack.c.l.b16 %v1778
        %v2072 = vunpack.c.h.b16 %v1778
        %v2073 = vunpack.c.l.b16 %v1779
        %v2074 = vunpack.c.h.b16 %v1779
        %v2075 = vunpack.c.l.b16 %v1780
        %v2076 = vunpack.c.h.b16 %v1780
        %v2077 = vunpack.c.l.b16 %v1781
        %v2078 = vunpack.c.h.b16 %v1781
        %v2079 = vunpack.c.l.b16 %v1782
        %v2080 = vunpack.c.h.b16 %v1782
        %v2081 = vunpack.c.l.b16 %v1783
        %v2082 = vunpack.c.h.b16 %v1783
        %v2083 = vunpack.c.l.b16 %v1784
        %v2084 = vunpack.c.h.b16 %v1784
        %v2085 = vunpack.c.l.b16 %v1785
        %v2086 = vunpack.c.h.b16 %v1785
        %v2087 = vunpack.c.l.b16 %v1786
        %v2088 = vunpack.c.h.b16 %v1786
        %v2089 = vunpack.c.l.b16 %v1787
        %v2090 = vunpack.c.h.b16 %v1787
        %v2091 = vunpack.c.l.b16 %v1788
        %v2092 = vunpack.c.h.b16 %v1788
        %v2093 = vunpack.c.l.b16 %v1789
        %v2094 = vunpack.c.h.b16 %v1789
        %v2095 = vunpack.c.l.b16 %v1790
        %v2096 = vunpack.c.h.b16 %v1790
        %v2097 = vunpack.c.l.b16 %v1791
        %v2098 = vunpack.c.h.b16 %v1791
        %v2099 = vunpack.c.l.b16 %v1792
        %v2100 = vunpack.c.h.b16 %v1792
        %v2101 = vunpack.c.l.b16 %v1793
        %v2102 = vunpack.c.h.b16 %v1793
        %v2103 = vunpack.c.l.b16 %v1794
        %v2104 = vunpack.c.h.b16 %v1794
        %v2105 = vunpack.c.l.b16 %v1795
        %v2106 = vunpack.c.h.b16 %v1795
        %v2107 = vunpack.c.l.b16 %v1796
        %v2108 = vunpack.c.h.b16 %v1796
        %v2109 = vunpack.c.l.b16 %v1797
        %v2110 = vunpack.c.h.b16 %v1797
        %v2111 = vunpack.c.l.b16 %v1798
        %v2112 = vunpack.c.h.b16 %v1798
        %v2113 = vunpack.c.l.b16 %v1799
        %v2114 = vunpack.c.h.b16 %v1799
        %v2115 = vunpack.c.l.b16 %v1800
        %v2116 = vunpack.c.h.b16 %v1800
        %v2117 = vunpack.c.l.b16 %v1801
        %v2118 = vunpack.c.h.b16 %v1801
        %v2119 = vunpack.c.l.b16 %v1802
        %v2120 = vunpack.c.h.b16 %v1802
        %v2121 = vunpack.c.l.b16 %v1803
        %v2122 = vunpack.c.h.b16 %v1803
        %v2123 = vunpack.c.l.b16 %v1804
        %v2124 = vunpack.c.h.b16 %v1804
        %v2125 = vpack.c.b16 %v1939, %v1933
        %v2126 = vpack.c.b16 %v1940, %v1934
        %v2127 = vpack.c.b16 %v1941, %v1935
        %v2128 = vpack.c.b16 %v1942, %v1936
        %v2129 = vpack.c.b16 %v1943, %v1937
        %v2130 = vpack.c.b16 %v1944, %v1938
        %v2131 = vpack.c.b16 %v1951, %v1945
        %v2132 = vpack.c.b16 %v1952, %v1946
        %v2133 = vpack.c.b16 %v1953, %v1947
        %v2134 = vpack.c.b16 %v1954, %v1948
        %v2135 = vpack.c.b16 %v1955, %v1949
        %v2136 = vpack.c.b16 %v1956, %v1950
        %v2137 = vpack.c.b16 %v1963, %v1957
        %v2138 = vpack.c.b16 %v1964, %v1958
        %v2139 = vpack.c.b16 %v1965, %v1959
        %v2140 = vpack.c.b16 %v1966, %v1960
        %v2141 = vpack.c.b16 %v1967, %v1961
        %v2142 = vpack.c.b16 %v1968, %v1962
        %v2143 = vpack.c.b16 %v1975, %v1969
        %v2144 = vpack.c.b16 %v1976, %v1970
        %v2145 = vpack.c.b16 %v1977, %v1971
        %v2146 = vpack.c.b16 %v1978, %v1972
        %v2147 = vpack.c.b16 %v1979, %v1973
        %v2148 = vpack.c.b16 %v1980, %v1974
        %v2149 = vpack.c.b16 %v1987, %v1981
        %v2150 = vpack.c.b16 %v1988, %v1982
        %v2151 = vpack.c.b16 %v1989, %v1983
        %v2152 = vpack.c.b16 %v1990, %v1984
        %v2153 = vpack.c.b16 %v1991, %v1985
        %v2154 = vpack.c.b16 %v1992, %v1986
        %v2155 = vpack.c.b16 %v1999, %v1993
        %v2156 = vpack.c.b16 %v2000, %v1994
        %v2157 = vpack.c.b16 %v2001, %v1995
        %v2158 = vpack.c.b16 %v2002, %v1996
        %v2159 = vpack.c.b16 %v2003, %v1997
        %v2160 = vpack.c.b16 %v2004, %v1998
        %v2161 = vpack.c.b16 %v2011, %v2005
        %v2162 = vpack.c.b16 %v2012, %v2006
        %v2163 = vpack.c.b16 %v2013, %v2007
        %v2164 = vpack.c.b16 %v2014, %v2008
        %v2165 = vpack.c.b16 %v2015, %v2009
        %v2166 = vpack.c.b16 %v2016, %v2010
        %v2167 = vpack.c.b16 %v2023, %v2017
        %v2168 = vpack.c.b16 %v2024, %v2018
        %v2169 = vpack.c.b16 %v2025, %v2019
        %v2170 = vpack.c.b16 %v2026, %v2020
        %v2171 = vpack.c.b16 %v2027, %v2021
        %v2172 = vpack.c.b16 %v2028, %v2022
        %v2173 = vpack.c.b16 %v2035, %v2029
        %v2174 = vpack.c.b16 %v2036, %v2030
        %v2175 = vpack.c.b16 %v2037, %v2031
        %v2176 = vpack.c.b16 %v2038, %v2032
        %v2177 = vpack.c.b16 %v2039, %v2033
        %v2178 = vpack.c.b16 %v2040, %v2034
        %v2179 = vpack.c.b16 %v2047, %v2041
        %v2180 = vpack.c.b16 %v2048, %v2042
        %v2181 = vpack.c.b16 %v2049, %v2043
        %v2182 = vpack.c.b16 %v2050, %v2044
        %v2183 = vpack.c.b16 %v2051, %v2045
        %v2184 = vpack.c.b16 %v2052, %v2046
        %v2185 = vpack.c.b16 %v2059, %v2053
        %v2186 = vpack.c.b16 %v2060, %v2054
        %v2187 = vpack.c.b16 %v2061, %v2055
        %v2188 = vpack.c.b16 %v2062, %v2056
        %v2189 = vpack.c.b16 %v2063, %v2057
        %v2190 = vpack.c.b16 %v2064, %v2058
        %v2191 = vpack.c.b16 %v2071, %v2065
        %v2192 = vpack.c.b16 %v2072, %v2066
        %v2193 = vpack.c.b16 %v2073, %v2067
        %v2194 = vpack.c.b16 %v2074, %v2068
        %v2195 = vpack.c.b16 %v2075, %v2069
        %v2196 = vpack.c.b16 %v2076, %v2070
        %v2197 = vpack.c.b16 %v2083, %v2077
        %v2198 = vpack.c.b16 %v2084, %v2078
        %v2199 = vpack.c.b16 %v2085, %v2079
        %v2200 = vpack.c.b16 %v2086, %v2080
        %v2201 = vpack.c.b16 %v2087, %v2081
        %v2202 = vpack.c.b16 %v2088, %v2082
        %v2203 = vpack.c.b16 %v2095, %v2089
        %v2204 = vpack.c.b16 %v2096, %v2090
        %v2205 = vpack.c.b16 %v2097, %v2091
        %v2206 = vpack.c.b16 %v2098, %v2092
        %v2207 = vpack.c.b16 %v2099, %v2093
        %v2208 = vpack.c.b16 %v2100, %v2094
        %v2209 = vpack.c.b16 %v2107, %v2101
        %v2210 = vpack.c.b16 %v2108, %v2102
        %v2211 = vpack.c.b16 %v2109, %v2103
        %v2212 = vpack.c.b16 %v2110, %v2104
        %v2213 = vpack.c.b16 %v2111, %v2105
        %v2214 = vpack.c.b16 %v2112, %v2106
        %v2215 = vpack.c.b16 %v2119, %v2113
        %v2216 = vpack.c.b16 %v2120, %v2114
        %v2217 = vpack.c.b16 %v2121, %v2115
        %v2218 = vpack.c.b16 %v2122, %v2116
        %v2219 = vpack.c.b16 %v2123, %v2117
        %v2220 = vpack.c.b16 %v2124, %v2118
        %2317 = vmatprep.subr.bf16.mxu0 %v2168
        %2318 = vmatpush1.bf16.msra.mxu0 %v2167
        %2319 = vmatprep.subr.bf16.mxu0 %v2162
        %2320 = vmatpush1.bf16.msra.mxu0 %v2161
        %2321 = vmatprep.subr.bf16.mxu0 %v2156
        %2322 = vmatpush1.bf16.msra.mxu0 %v2155
        %2323 = vmatprep.subr.bf16.mxu0 %v2150
        %2324 = vmatpush1.bf16.msra.mxu0 %v2149
        %2325 = vmatprep.subr.bf16.mxu0 %v2144
        %2326 = vmatpush1.bf16.msra.mxu0 %v2143
        %2327 = vmatprep.subr.bf16.mxu0 %v2138
        %2328 = vmatpush1.bf16.msra.mxu0 %v2137
        %2329 = vmatprep.subr.bf16.mxu0 %v2132
        %2330 = vmatpush1.bf16.msra.mxu0 %v2131
        %2331 = vmatprep.subr.bf16.mxu0 %v2126
        %2332 = vmatpush1.bf16.msra.mxu0 %v2125
        %2333 = vmatprep.subr.bf16.mxu0 %v2216
        %2334 = vmatpush2.bf16.msra.mxu0 %v2215
        %2335 = vmatprep.subr.bf16.mxu0 %v2210
        %2336 = vmatpush2.bf16.msra.mxu0 %v2209
        %2337 = vmatprep.subr.bf16.mxu0 %v2204
        %2338 = vmatpush2.bf16.msra.mxu0 %v2203
        %2339 = vmatprep.subr.bf16.mxu0 %v2198
        %2340 = vmatpush2.bf16.msra.mxu0 %v2197
        %2341 = vmatprep.subr.bf16.mxu0 %v2192
        %2342 = vmatpush2.bf16.msra.mxu0 %v2191
        %2343 = vmatprep.subr.bf16.mxu0 %v2186
        %2344 = vmatpush2.bf16.msra.mxu0 %v2185
        %2345 = vmatprep.subr.bf16.mxu0 %v2180
        %2346 = vmatpush2.bf16.msra.mxu0 %v2179
        %2347 = vmatprep.subr.bf16.mxu0 %v2174
        %2348 = vmatpush2.bf16.msra.mxu0 %v2173
        %2349 = vmatprep.mubr.bf16.mxu0 %v1702
        %2350 = vmatmul.mubr.bf16.gmra.mxu0 %v1701
        %v2351 = vpop.f32.mrf.mxu0
        %v2352 = vadd.f32 %v1810, %v2351
        %v2353 = vpop.f32.mrf.mxu0
        %v2354 = vadd.f32 %v1814, %v2353
        %v2355 = vpop.f32.mrf.mxu0
        %v2356 = vadd.f32 %v1810, %v2355
        %v2357 = vpop.f32.mrf.mxu0
        %v2358 = vadd.f32 %v1814, %v2357
        %2359 = vmatprep.mubr.bf16.mxu0 %v1704
        %2360 = vmatmul.mubr.bf16.gmra.mxu0 %v1703
        %v2361 = vpop.f32.mrf.mxu0
        %v2362 = vadd.f32 %v1810, %v2361
        %v2363 = vpop.f32.mrf.mxu0
        %v2364 = vadd.f32 %v1814, %v2363
        %v2365 = vpop.f32.mrf.mxu0
        %v2366 = vadd.f32 %v1810, %v2365
        %v2367 = vpop.f32.mrf.mxu0
        %v2368 = vadd.f32 %v1814, %v2367
        %2369 = vmatprep.mubr.bf16.mxu0 %v1706
        %2370 = vmatmul.mubr.bf16.gmra.mxu0 %v1705
        %v2371 = vpop.f32.mrf.mxu0
        %v2372 = vadd.f32 %v1810, %v2371
        %v2373 = vpop.f32.mrf.mxu0
        %v2374 = vadd.f32 %v1814, %v2373
        %v2375 = vpop.f32.mrf.mxu0
        %v2376 = vadd.f32 %v1810, %v2375
        %v2377 = vpop.f32.mrf.mxu0
        %v2378 = vadd.f32 %v1814, %v2377
        %2379 = vmatprep.mubr.bf16.mxu0 %v1708
        %2380 = vmatmul.mubr.bf16.gmra.mxu0 %v1707
        %v2381 = vpop.f32.mrf.mxu0
        %v2382 = vadd.f32 %v1810, %v2381
        %v2383 = vpop.f32.mrf.mxu0
        %v2384 = vadd.f32 %v1814, %v2383
        %v2385 = vpop.f32.mrf.mxu0
        %v2386 = vadd.f32 %v1810, %v2385
        %v2387 = vpop.f32.mrf.mxu0
        %v2388 = vadd.f32 %v1814, %v2387
        %2389 = vdwg.mxu0
        %2390 = vmatprep.subr.bf16.mxu0 %v2170
        %2391 = vmatpush1.bf16.msra.mxu0 %v2169
        %2392 = vmatprep.subr.bf16.mxu0 %v2164
        %2393 = vmatpush1.bf16.msra.mxu0 %v2163
        %2394 = vmatprep.subr.bf16.mxu0 %v2158
        %2395 = vmatpush1.bf16.msra.mxu0 %v2157
        %2396 = vmatprep.subr.bf16.mxu0 %v2152
        %2397 = vmatpush1.bf16.msra.mxu0 %v2151
        %2398 = vmatprep.subr.bf16.mxu0 %v2146
        %2399 = vmatpush1.bf16.msra.mxu0 %v2145
        %2400 = vmatprep.subr.bf16.mxu0 %v2140
        %2401 = vmatpush1.bf16.msra.mxu0 %v2139
        %2402 = vmatprep.subr.bf16.mxu0 %v2134
        %2403 = vmatpush1.bf16.msra.mxu0 %v2133
        %2404 = vmatprep.subr.bf16.mxu0 %v2128
        %2405 = vmatpush1.bf16.msra.mxu0 %v2127
        %2406 = vmatprep.subr.bf16.mxu0 %v2218
        %2407 = vmatpush2.bf16.msra.mxu0 %v2217
        %2408 = vmatprep.subr.bf16.mxu0 %v2212
        %2409 = vmatpush2.bf16.msra.mxu0 %v2211
        %2410 = vmatprep.subr.bf16.mxu0 %v2206
        %2411 = vmatpush2.bf16.msra.mxu0 %v2205
        %2412 = vmatprep.subr.bf16.mxu0 %v2200
        %2413 = vmatpush2.bf16.msra.mxu0 %v2199
        %2414 = vmatprep.subr.bf16.mxu0 %v2194
        %2415 = vmatpush2.bf16.msra.mxu0 %v2193
        %2416 = vmatprep.subr.bf16.mxu0 %v2188
        %2417 = vmatpush2.bf16.msra.mxu0 %v2187
        %2418 = vmatprep.subr.bf16.mxu0 %v2182
        %2419 = vmatpush2.bf16.msra.mxu0 %v2181
        %2420 = vmatprep.subr.bf16.mxu0 %v2176
        %2421 = vmatpush2.bf16.msra.mxu0 %v2175
        %2422 = vmatprep.mubr.bf16.mxu0 %v1702
        %2423 = vmatmul.mubr.bf16.gmra.mxu0 %v1701
        %v2424 = vpop.f32.mrf.mxu0
        %v2425 = vadd.f32 %v1818, %v2424
        %v2426 = vpop.f32.mrf.mxu0
        %v2427 = vadd.f32 %v1822, %v2426
        %v2428 = vpop.f32.mrf.mxu0
        %v2429 = vadd.f32 %v1818, %v2428
        %v2430 = vpop.f32.mrf.mxu0
        %v2431 = vadd.f32 %v1822, %v2430
        %2432 = vmatprep.mubr.bf16.mxu0 %v1704
        %2433 = vmatmul.mubr.bf16.gmra.mxu0 %v1703
        %v2434 = vpop.f32.mrf.mxu0
        %v2435 = vadd.f32 %v1818, %v2434
        %v2436 = vpop.f32.mrf.mxu0
        %v2437 = vadd.f32 %v1822, %v2436
        %v2438 = vpop.f32.mrf.mxu0
        %v2439 = vadd.f32 %v1818, %v2438
        %v2440 = vpop.f32.mrf.mxu0
        %v2441 = vadd.f32 %v1822, %v2440
        %2442 = vmatprep.mubr.bf16.mxu0 %v1706
        %2443 = vmatmul.mubr.bf16.gmra.mxu0 %v1705
        %v2444 = vpop.f32.mrf.mxu0
        %v2445 = vadd.f32 %v1818, %v2444
        %v2446 = vpop.f32.mrf.mxu0
        %v2447 = vadd.f32 %v1822, %v2446
        %v2448 = vpop.f32.mrf.mxu0
        %v2449 = vadd.f32 %v1818, %v2448
        %v2450 = vpop.f32.mrf.mxu0
        %v2451 = vadd.f32 %v1822, %v2450
        %2452 = vmatprep.mubr.bf16.mxu0 %v1708
        %2453 = vmatmul.mubr.bf16.gmra.mxu0 %v1707
        %v2454 = vpop.f32.mrf.mxu0
        %v2455 = vadd.f32 %v1818, %v2454
        %v2456 = vpop.f32.mrf.mxu0
        %v2457 = vadd.f32 %v1822, %v2456
        %v2458 = vpop.f32.mrf.mxu0
        %v2459 = vadd.f32 %v1818, %v2458
        %v2460 = vpop.f32.mrf.mxu0
        %v2461 = vadd.f32 %v1822, %v2460
        %2462 = vdwg.mxu0
        %2463 = vmatprep.subr.bf16.mxu0 %v2172
        %2464 = vmatpush1.bf16.msra.mxu0 %v2171
        %2465 = vmatprep.subr.bf16.mxu0 %v2166
        %2466 = vmatpush1.bf16.msra.mxu0 %v2165
        %2467 = vmatprep.subr.bf16.mxu0 %v2160
        %2468 = vmatpush1.bf16.msra.mxu0 %v2159
        %2469 = vmatprep.subr.bf16.mxu0 %v2154
        %2470 = vmatpush1.bf16.msra.mxu0 %v2153
        %2471 = vmatprep.subr.bf16.mxu0 %v2148
        %2472 = vmatpush1.bf16.msra.mxu0 %v2147
        %2473 = vmatprep.subr.bf16.mxu0 %v2142
        %2474 = vmatpush1.bf16.msra.mxu0 %v2141
        %2475 = vmatprep.subr.bf16.mxu0 %v2136
        %2476 = vmatpush1.bf16.msra.mxu0 %v2135
        %2477 = vmatprep.subr.bf16.mxu0 %v2130
        %2478 = vmatpush1.bf16.msra.mxu0 %v2129
        %2479 = vmatprep.subr.bf16.mxu0 %v2220
        %2480 = vmatpush2.bf16.msra.mxu0 %v2219
        %2481 = vmatprep.subr.bf16.mxu0 %v2214
        %2482 = vmatpush2.bf16.msra.mxu0 %v2213
        %2483 = vmatprep.subr.bf16.mxu0 %v2208
        %2484 = vmatpush2.bf16.msra.mxu0 %v2207
        %2485 = vmatprep.subr.bf16.mxu0 %v2202
        %2486 = vmatpush2.bf16.msra.mxu0 %v2201
        %2487 = vmatprep.subr.bf16.mxu0 %v2196
        %2488 = vmatpush2.bf16.msra.mxu0 %v2195
        %2489 = vmatprep.subr.bf16.mxu0 %v2190
        %2490 = vmatpush2.bf16.msra.mxu0 %v2189
        %2491 = vmatprep.subr.bf16.mxu0 %v2184
        %2492 = vmatpush2.bf16.msra.mxu0 %v2183
        %2493 = vmatprep.subr.bf16.mxu0 %v2178
        %2494 = vmatpush2.bf16.msra.mxu0 %v2177
        %2495 = vmatprep.mubr.bf16.mxu0 %v1702
        %2496 = vmatmul.mubr.bf16.gmra.mxu0 %v1701
        %v2497 = vpop.f32.mrf.mxu0
        %v2498 = vadd.f32 %v1826, %v2497
        %v2499 = vpop.f32.mrf.mxu0
        %v2500 = vadd.f32 %v1830, %v2499
        %v2501 = vpop.f32.mrf.mxu0
        %v2502 = vadd.f32 %v1826, %v2501
        %v2503 = vpop.f32.mrf.mxu0
        %v2504 = vadd.f32 %v1830, %v2503
        %2505 = vmatprep.mubr.bf16.mxu0 %v1704
        %2506 = vmatmul.mubr.bf16.gmra.mxu0 %v1703
        %v2507 = vpop.f32.mrf.mxu0
        %v2508 = vadd.f32 %v1826, %v2507
        %v2509 = vpop.f32.mrf.mxu0
        %v2510 = vadd.f32 %v1830, %v2509
        %v2511 = vpop.f32.mrf.mxu0
        %v2512 = vadd.f32 %v1826, %v2511
        %v2513 = vpop.f32.mrf.mxu0
        %v2514 = vadd.f32 %v1830, %v2513
        %2515 = vmatprep.mubr.bf16.mxu0 %v1706
        %2516 = vmatmul.mubr.bf16.gmra.mxu0 %v1705
        %v2517 = vpop.f32.mrf.mxu0
        %v2518 = vadd.f32 %v1826, %v2517
        %v2519 = vpop.f32.mrf.mxu0
        %v2520 = vadd.f32 %v1830, %v2519
        %v2521 = vpop.f32.mrf.mxu0
        %v2522 = vadd.f32 %v1826, %v2521
        %v2523 = vpop.f32.mrf.mxu0
        %v2524 = vadd.f32 %v1830, %v2523
        %2525 = vmatprep.mubr.bf16.mxu0 %v1708
        %2526 = vmatmul.mubr.bf16.gmra.mxu0 %v1707
        %v2527 = vpop.f32.mrf.mxu0
        %v2528 = vadd.f32 %v1826, %v2527
        %v2529 = vpop.f32.mrf.mxu0
        %v2530 = vadd.f32 %v1830, %v2529
        %v2531 = vpop.f32.mrf.mxu0
        %v2532 = vadd.f32 %v1826, %v2531
        %v2533 = vpop.f32.mrf.mxu0
        %v2534 = vadd.f32 %v1830, %v2533
        %2535 = vdwg.mxu0
        %v2536 = vlaneseq
        %v2537 = vand.u32 %v2536, 127
        %vm2538 = vcmp.lt.s32.totalorder %v2537, 17
        %v2539 = vpack.c.bf16 %v2356, %v2352
        %v2540 = vpack.c.bf16 %v2366, %v2362
        %v2541 = vpack.c.bf16 %v2376, %v2372
        %v2542 = vpack.c.bf16 %v2386, %v2382
        %v2543 = vpack.c.bf16 %v2429, %v2425
        %v2544 = vpack.c.bf16 %v2439, %v2435
        %v2545 = vpack.c.bf16 %v2449, %v2445
        %v2546 = vpack.c.bf16 %v2459, %v2455
        %v2547 = vpack.c.bf16 %v2502, %v2498
        %v2548 = vpack.c.bf16 %v2512, %v2508
        %v2549 = vpack.c.bf16 %v2522, %v2518
        %v2550 = vpack.c.bf16 %v2532, %v2528
        %2551 = vmatprep.subr.bf16.mxu0 0
        %2552 = vmatpush1.bf16.xpose.msra.mxu0 0
        %2553 = vmatprep.subr.bf16.mxu0 0
        %2554 = vmatpush1.bf16.xpose.msra.mxu0 0
        %2555 = vmatprep.subr.bf16.mxu0 0
        %2556 = vmatpush1.bf16.xpose.msra.mxu0 0
        %2557 = vmatprep.subr.bf16.mxu0 0
        %2558 = vmatpush1.bf16.xpose.msra.mxu0 0
        %2559 = vmatprep.subr.bf16.mxu0 0
        %2560 = vmatpush1.bf16.xpose.msra.mxu0 0
        %2561 = vmatprep.subr.bf16.mxu0 0
        %2562 = vmatpush1.bf16.xpose.msra.mxu0 0
        %2563 = vmatprep.subr.bf16.mxu0 0
        %2564 = vmatpush1.bf16.xpose.msra.mxu0 %v2544
        %2565 = vmatprep.subr.bf16.mxu0 0
        %2566 = vmatpush1.bf16.xpose.msra.mxu0 %v2543
        %2567 = vmatprep.subr.bf16.mxu0 0
        %2568 = vmatpush2.bf16.xpose.msra.mxu0 0
        %2569 = vmatprep.subr.bf16.mxu0 0
        %2570 = vmatpush2.bf16.xpose.msra.mxu0 0
        %2571 = vmatprep.subr.bf16.mxu0 0
        %2572 = vmatpush2.bf16.xpose.msra.mxu0 0
        %2573 = vmatprep.subr.bf16.mxu0 0
        %2574 = vmatpush2.bf16.xpose.msra.mxu0 0
        %2575 = vmatprep.subr.bf16.mxu0 0
        %2576 = vmatpush2.bf16.xpose.msra.mxu0 0
        %2577 = vmatprep.subr.bf16.mxu0 0
        %2578 = vmatpush2.bf16.xpose.msra.mxu0 0
        %2579 = vmatprep.subr.bf16.mxu0 0
        %2580 = vmatpush2.bf16.xpose.msra.mxu0 0
        %2581 = vmatprep.subr.bf16.mxu0 0
        %2582 = vmatpush2.bf16.xpose.msra.mxu0 0
        %2583 = vmatprep.mubr.bf16.mxu0 0
        %2584 = vmatmul.mubr.bf16.gmra.mxu0 %v2539
        %v2585 = vpop.f32.mrf.mxu0
        %v2586 = vadd.f32 0.0, %v2585
        %v2587 = vpop.f32.mrf.mxu0
        %v2588 = vpop.f32.mrf.mxu0
        %v2589 = vadd.f32 0.0, %v2588
        %v2590 = vpop.f32.mrf.mxu0
        %2591 = vmatprep.mubr.bf16.mxu0 0
        %2592 = vmatmul.mubr.bf16.gmra.mxu0 %v2540
        %v2593 = vpop.f32.mrf.mxu0
        %v2594 = vadd.f32 0.0, %v2593
        %v2595 = vpop.f32.mrf.mxu0
        %v2596 = vpop.f32.mrf.mxu0
        %v2597 = vadd.f32 0.0, %v2596
        %v2598 = vpop.f32.mrf.mxu0
        %2599 = vdwg.mxu0
        %2600 = vmatprep.subr.bf16.mxu0 0
        %2601 = vmatpush1.bf16.xpose.msra.mxu0 0
        %2602 = vmatprep.subr.bf16.mxu0 0
        %2603 = vmatpush1.bf16.xpose.msra.mxu0 0
        %2604 = vmatprep.subr.bf16.mxu0 0
        %2605 = vmatpush1.bf16.xpose.msra.mxu0 0
        %2606 = vmatprep.subr.bf16.mxu0 0
        %2607 = vmatpush1.bf16.xpose.msra.mxu0 0
        %2608 = vmatprep.subr.bf16.mxu0 0
        %2609 = vmatpush1.bf16.xpose.msra.mxu0 0
        %2610 = vmatprep.subr.bf16.mxu0 0
        %2611 = vmatpush1.bf16.xpose.msra.mxu0 0
        %2612 = vmatprep.subr.bf16.mxu0 0
        %2613 = vmatpush1.bf16.xpose.msra.mxu0 %v2546
        %2614 = vmatprep.subr.bf16.mxu0 0
        %2615 = vmatpush1.bf16.xpose.msra.mxu0 %v2545
        %2616 = vmatprep.subr.bf16.mxu0 0
        %2617 = vmatpush2.bf16.xpose.msra.mxu0 0
        %2618 = vmatprep.subr.bf16.mxu0 0
        %2619 = vmatpush2.bf16.xpose.msra.mxu0 0
        %2620 = vmatprep.subr.bf16.mxu0 0
        %2621 = vmatpush2.bf16.xpose.msra.mxu0 0
        %2622 = vmatprep.subr.bf16.mxu0 0
        %2623 = vmatpush2.bf16.xpose.msra.mxu0 0
        %2624 = vmatprep.subr.bf16.mxu0 0
        %2625 = vmatpush2.bf16.xpose.msra.mxu0 0
        %2626 = vmatprep.subr.bf16.mxu0 0
        %2627 = vmatpush2.bf16.xpose.msra.mxu0 0
        %2628 = vmatprep.subr.bf16.mxu0 0
        %2629 = vmatpush2.bf16.xpose.msra.mxu0 0
        %2630 = vmatprep.subr.bf16.mxu0 0
        %2631 = vmatpush2.bf16.xpose.msra.mxu0 0
        %2632 = vmatprep.mubr.bf16.mxu0 0
        %2633 = vmatmul.mubr.bf16.gmra.mxu0 %v2541
        %v2634 = vpop.f32.mrf.mxu0
        %v2635 = vadd.f32 0.0, %v2634
        %v2636 = vpop.f32.mrf.mxu0
        %v2637 = vpop.f32.mrf.mxu0
        %v2638 = vadd.f32 0.0, %v2637
        %v2639 = vpop.f32.mrf.mxu0
        %2640 = vmatprep.mubr.bf16.mxu0 0
        %2641 = vmatmul.mubr.bf16.gmra.mxu0 %v2542
        %v2642 = vpop.f32.mrf.mxu0
        %v2643 = vadd.f32 0.0, %v2642
        %v2644 = vpop.f32.mrf.mxu0
        %v2645 = vpop.f32.mrf.mxu0
        %v2646 = vadd.f32 0.0, %v2645
        %v2647 = vpop.f32.mrf.mxu0
        %2648 = vdwg.mxu0
        %v2649 = vsel %vm2538, 1, 0
        %vm2650 = vcmp.eq.s32.totalorder %v2649, 1
        %v2651 = vsel %vm2650, %v2586, -1e+30
        %v2652 = vsel %vm2650, %v2589, -1e+30
        %v2653 = vsel %vm2650, %v2594, -1e+30
        %v2654 = vsel %vm2650, %v2597, -1e+30
        %v2655 = vsel %vm2650, %v2635, -1e+30
        %v2656 = vsel %vm2650, %v2638, -1e+30
        %v2657 = vsel %vm2650, %v2643, -1e+30
        %v2658 = vsel %vm2650, %v2646, -1e+30
        %vm2659 = vcmask 261120
        %v2660 = vsel %vm2659, %v2651, -inf
        %2661 = vmax.xlane.f32.xlu0 %v2660
        %v2662 = vpop.xlane.xlu0 %2661
        %v2663 = vsel %vm2659, %v2652, -inf
        %2664 = vmax.xlane.f32.xlu0 %v2663
        %v2665 = vpop.xlane.xlu0 %2664
        %v2666 = vsel %vm2659, %v2653, -inf
        %2667 = vmax.xlane.f32.xlu0 %v2666
        %v2668 = vpop.xlane.xlu0 %2667
        %v2669 = vsel %vm2659, %v2654, -inf
        %2670 = vmax.xlane.f32.xlu0 %v2669
        %v2671 = vpop.xlane.xlu0 %2670
        %v2672 = vsel %vm2659, %v2655, -inf
        %2673 = vmax.xlane.f32.xlu0 %v2672
        %v2674 = vpop.xlane.xlu0 %2673
        %v2675 = vsel %vm2659, %v2656, -inf
        %2676 = vmax.xlane.f32.xlu0 %v2675
        %v2677 = vpop.xlane.xlu0 %2676
        %v2678 = vsel %vm2659, %v2657, -inf
        %2679 = vmax.xlane.f32.xlu0 %v2678
        %v2680 = vpop.xlane.xlu0 %2679
        %v2681 = vsel %vm2659, %v2658, -inf
        %2682 = vmax.xlane.f32.xlu0 %v2681
        %v2683 = vpop.xlane.xlu0 %2682
        %v2684 = vsub.f32 %v2651, %v2662
        %v2685 = vsub.f32 %v2652, %v2665
        %v2686 = vsub.f32 %v2653, %v2668
        %v2687 = vsub.f32 %v2654, %v2671
        %v2688 = vsub.f32 %v2655, %v2674
        %v2689 = vsub.f32 %v2656, %v2677
        %v2690 = vsub.f32 %v2657, %v2680
        %v2691 = vsub.f32 %v2658, %v2683
        %v2692 = vmul.f32 %v2684, 1.442695
        %v2693 = vpow.pop %v2692
        %v2694 = vmul.f32 %v2685, 1.442695
        %v2695 = vpow.pop %v2694
        %v2696 = vmul.f32 %v2686, 1.442695
        %v2697 = vpow.pop %v2696
        %v2698 = vmul.f32 %v2687, 1.442695
        %v2699 = vpow.pop %v2698
        %v2700 = vmul.f32 %v2688, 1.442695
        %v2701 = vpow.pop %v2700
        %v2702 = vmul.f32 %v2689, 1.442695
        %v2703 = vpow.pop %v2702
        %v2704 = vmul.f32 %v2690, 1.442695
        %v2705 = vpow.pop %v2704
        %v2706 = vmul.f32 %v2691, 1.442695
        %v2707 = vpow.pop %v2706
        %v2708 = vsel %vm2659, %v2693, 0.0
        %2709 = vadd.xlane.f32.xlu0 %v2708
        %v2710 = vpop.xlane.xlu0 %2709
        %v2711 = vsel %vm2659, %v2695, 0.0
        %2712 = vadd.xlane.f32.xlu0 %v2711
        %v2713 = vpop.xlane.xlu0 %2712
        %v2714 = vsel %vm2659, %v2697, 0.0
        %2715 = vadd.xlane.f32.xlu0 %v2714
        %v2716 = vpop.xlane.xlu0 %2715
        %v2717 = vsel %vm2659, %v2699, 0.0
        %2718 = vadd.xlane.f32.xlu0 %v2717
        %v2719 = vpop.xlane.xlu0 %2718
        %v2720 = vsel %vm2659, %v2701, 0.0
        %2721 = vadd.xlane.f32.xlu0 %v2720
        %v2722 = vpop.xlane.xlu0 %2721
        %v2723 = vsel %vm2659, %v2703, 0.0
        %2724 = vadd.xlane.f32.xlu0 %v2723
        %v2725 = vpop.xlane.xlu0 %2724
        %v2726 = vsel %vm2659, %v2705, 0.0
        %2727 = vadd.xlane.f32.xlu0 %v2726
        %v2728 = vpop.xlane.xlu0 %2727
        %v2729 = vsel %vm2659, %v2707, 0.0
        %2730 = vadd.xlane.f32.xlu0 %v2729
        %v2731 = vpop.xlane.xlu0 %2730
        %v2732 = vrcp.pop %v2710
        %v2733 = vrcp.pop %v2713
        %v2734 = vrcp.pop %v2716
        %v2735 = vrcp.pop %v2719
        %v2736 = vrcp.pop %v2722
        %v2737 = vrcp.pop %v2725
        %v2738 = vrcp.pop %v2728
        %v2739 = vrcp.pop %v2731
        %v2740 = vmul.f32 %v2693, %v2732
        %v2741 = vmul.f32 %v2695, %v2733
        %v2742 = vmul.f32 %v2697, %v2734
        %v2743 = vmul.f32 %v2699, %v2735
        %v2744 = vmul.f32 %v2701, %v2736
        %v2745 = vmul.f32 %v2703, %v2737
        %v2746 = vmul.f32 %v2705, %v2738
        %v2747 = vmul.f32 %v2707, %v2739
        %v2748 = vpack.c.bf16 %v2741, %v2740
        %v2749 = vpack.c.bf16 %v2743, %v2742
        %v2750 = vpack.c.bf16 %v2745, %v2744
        %v2751 = vpack.c.bf16 %v2747, %v2746
        %v2753 = vsel %vm2659, %v2748, 0
        %v2756 = vsel %vm2659, %v2749, 0
        %2758 = vmatprep.subr.bf16.mxu0 0
        %2759 = vmatpush1.bf16.msra.mxu0 0
        %2760 = vmatprep.subr.bf16.mxu0 0
        %2761 = vmatpush1.bf16.msra.mxu0 0
        %2762 = vmatprep.subr.bf16.mxu0 0
        %2763 = vmatpush1.bf16.msra.mxu0 0
        %2764 = vmatprep.subr.bf16.mxu0 0
        %2765 = vmatpush1.bf16.msra.mxu0 0
        %2766 = vmatprep.subr.bf16.mxu0 0
        %2767 = vmatpush1.bf16.msra.mxu0 0
        %2768 = vmatprep.subr.bf16.mxu0 0
        %2769 = vmatpush1.bf16.msra.mxu0 0
        %2770 = vmatprep.subr.bf16.mxu0 0
        %2771 = vmatpush1.bf16.msra.mxu0 %v2548
        %2772 = vmatprep.subr.bf16.mxu0 0
        %2773 = vmatpush1.bf16.msra.mxu0 %v2547
        %2774 = vmatprep.subr.bf16.mxu0 0
        %2775 = vmatpush2.bf16.msra.mxu0 0
        %2776 = vmatprep.subr.bf16.mxu0 0
        %2777 = vmatpush2.bf16.msra.mxu0 0
        %2778 = vmatprep.subr.bf16.mxu0 0
        %2779 = vmatpush2.bf16.msra.mxu0 0
        %2780 = vmatprep.subr.bf16.mxu0 0
        %2781 = vmatpush2.bf16.msra.mxu0 0
        %2782 = vmatprep.subr.bf16.mxu0 0
        %2783 = vmatpush2.bf16.msra.mxu0 0
        %2784 = vmatprep.subr.bf16.mxu0 0
        %2785 = vmatpush2.bf16.msra.mxu0 0
        %2786 = vmatprep.subr.bf16.mxu0 0
        %2787 = vmatpush2.bf16.msra.mxu0 0
        %2788 = vmatprep.subr.bf16.mxu0 0
        %2789 = vmatpush2.bf16.msra.mxu0 0
        %2790 = vmatprep.mubr.bf16.mxu0 0
        %2791 = vmatmul.mubr.bf16.gmra.mxu0 %v2753
        %v2792 = vpop.f32.mrf.mxu0
        %v2793 = vadd.f32 0.0, %v2792
        %v2794 = vpop.f32.mrf.mxu0
        %v2795 = vpop.f32.mrf.mxu0
        %v2796 = vadd.f32 0.0, %v2795
        %v2797 = vpop.f32.mrf.mxu0
        %2798 = vmatprep.mubr.bf16.mxu0 0
        %2799 = vmatmul.mubr.bf16.gmra.mxu0 %v2756
        %v2800 = vpop.f32.mrf.mxu0
        %v2801 = vadd.f32 0.0, %v2800
        %v2802 = vpop.f32.mrf.mxu0
        %v2803 = vpop.f32.mrf.mxu0
        %v2804 = vadd.f32 0.0, %v2803
        %v2805 = vpop.f32.mrf.mxu0
        %2806 = vdwg.mxu0
        %v2808 = vsel %vm2659, %v2750, 0
        %v2811 = vsel %vm2659, %v2751, 0
        %2813 = vmatprep.subr.bf16.mxu0 0
        %2814 = vmatpush1.bf16.msra.mxu0 0
        %2815 = vmatprep.subr.bf16.mxu0 0
        %2816 = vmatpush1.bf16.msra.mxu0 0
        %2817 = vmatprep.subr.bf16.mxu0 0
        %2818 = vmatpush1.bf16.msra.mxu0 0
        %2819 = vmatprep.subr.bf16.mxu0 0
        %2820 = vmatpush1.bf16.msra.mxu0 0
        %2821 = vmatprep.subr.bf16.mxu0 0
        %2822 = vmatpush1.bf16.msra.mxu0 0
        %2823 = vmatprep.subr.bf16.mxu0 0
        %2824 = vmatpush1.bf16.msra.mxu0 0
        %2825 = vmatprep.subr.bf16.mxu0 0
        %2826 = vmatpush1.bf16.msra.mxu0 %v2550
        %2827 = vmatprep.subr.bf16.mxu0 0
        %2828 = vmatpush1.bf16.msra.mxu0 %v2549
        %2829 = vmatprep.subr.bf16.mxu0 0
        %2830 = vmatpush2.bf16.msra.mxu0 0
        %2831 = vmatprep.subr.bf16.mxu0 0
        %2832 = vmatpush2.bf16.msra.mxu0 0
        %2833 = vmatprep.subr.bf16.mxu0 0
        %2834 = vmatpush2.bf16.msra.mxu0 0
        %2835 = vmatprep.subr.bf16.mxu0 0
        %2836 = vmatpush2.bf16.msra.mxu0 0
        %2837 = vmatprep.subr.bf16.mxu0 0
        %2838 = vmatpush2.bf16.msra.mxu0 0
        %2839 = vmatprep.subr.bf16.mxu0 0
        %2840 = vmatpush2.bf16.msra.mxu0 0
        %2841 = vmatprep.subr.bf16.mxu0 0
        %2842 = vmatpush2.bf16.msra.mxu0 0
        %2843 = vmatprep.subr.bf16.mxu0 0
        %2844 = vmatpush2.bf16.msra.mxu0 0
        %2845 = vmatprep.mubr.bf16.mxu0 0
        %2846 = vmatmul.mubr.bf16.gmra.mxu0 %v2808
        %v2847 = vpop.f32.mrf.mxu0
        %v2848 = vadd.f32 0.0, %v2847
        %v2849 = vpop.f32.mrf.mxu0
        %v2850 = vpop.f32.mrf.mxu0
        %v2851 = vadd.f32 0.0, %v2850
        %v2852 = vpop.f32.mrf.mxu0
        %2853 = vmatprep.mubr.bf16.mxu0 0
        %2854 = vmatmul.mubr.bf16.gmra.mxu0 %v2811
        %v2855 = vpop.f32.mrf.mxu0
        %v2856 = vadd.f32 0.0, %v2855
        %v2857 = vpop.f32.mrf.mxu0
        %v2858 = vpop.f32.mrf.mxu0
        %v2859 = vadd.f32 0.0, %v2858
        %v2860 = vpop.f32.mrf.mxu0
        %2861 = vdwg.mxu0
        %v2862 = vpack.c.bf16 %v2796, %v2793
        %v2863 = vpack.c.bf16 %v2804, %v2801
        %v2864 = vpack.c.bf16 %v2851, %v2848
        %v2865 = vpack.c.bf16 %v2859, %v2856
        %v2870 = vunpack.c.l.b16 %v2862
        %v2871 = vunpack.c.h.b16 %v2862
        %v2872 = vunpack.c.l.b16 %v2863
        %v2873 = vunpack.c.h.b16 %v2863
        %v2874 = vunpack.c.l.b16 %v2864
        %v2875 = vunpack.c.h.b16 %v2864
        %v2876 = vunpack.c.l.b16 %v2865
        %v2877 = vunpack.c.h.b16 %v2865
        %v2878 = vpack.c.b16 %v2870, %v2870
        %v2879 = vpack.c.b16 %v2871, %v2871
        %v2880 = vpack.c.b16 %v2872, %v2872
        %v2881 = vpack.c.b16 %v2873, %v2873
        %v2882 = vpack.c.b16 %v2874, %v2874
        %v2883 = vpack.c.b16 %v2875, %v2875
        %v2884 = vpack.c.b16 %v2876, %v2876
        %v2885 = vpack.c.b16 %v2877, %v2877
        %2894 = vst [vmem:[#allocation3] sm:$0xf] %v2878
        %2895 = vst [vmem:[#allocation3 + $0x8] sm:$0xf] %v2879
        %2896 = vst [vmem:[#allocation3 + $0x10] sm:$0xf] %v2880
        %2897 = vst [vmem:[#allocation3 + $0x18] sm:$0xf] %v2881
        %2898 = vst [vmem:[#allocation3 + $0x20] sm:$0xf] %v2882
        %2899 = vst [vmem:[#allocation3 + $0x28] sm:$0xf] %v2883
        %2900 = vst [vmem:[#allocation3 + $0x30] sm:$0xf] %v2884
        %2901 = vst [vmem:[#allocation3 + $0x38] sm:$0xf] %v2885
        %v2902 = vpack.c.bf16 %v2358, %v2354
        %v2903 = vpack.c.bf16 %v2368, %v2364
        %v2904 = vpack.c.bf16 %v2378, %v2374
        %v2905 = vpack.c.bf16 %v2388, %v2384
        %v2906 = vpack.c.bf16 %v2431, %v2427
        %v2907 = vpack.c.bf16 %v2441, %v2437
        %v2908 = vpack.c.bf16 %v2451, %v2447
        %v2909 = vpack.c.bf16 %v2461, %v2457
        %v2910 = vpack.c.bf16 %v2504, %v2500
        %v2911 = vpack.c.bf16 %v2514, %v2510
        %v2912 = vpack.c.bf16 %v2524, %v2520
        %v2913 = vpack.c.bf16 %v2534, %v2530
        %2914 = vmatprep.subr.bf16.mxu0 0
        %2915 = vmatpush1.bf16.xpose.msra.mxu0 0
        %2916 = vmatprep.subr.bf16.mxu0 0
        %2917 = vmatpush1.bf16.xpose.msra.mxu0 0
        %2918 = vmatprep.subr.bf16.mxu0 0
        %2919 = vmatpush1.bf16.xpose.msra.mxu0 0
        %2920 = vmatprep.subr.bf16.mxu0 0
        %2921 = vmatpush1.bf16.xpose.msra.mxu0 0
        %2922 = vmatprep.subr.bf16.mxu0 0
        %2923 = vmatpush1.bf16.xpose.msra.mxu0 0
        %2924 = vmatprep.subr.bf16.mxu0 0
        %2925 = vmatpush1.bf16.xpose.msra.mxu0 0
        %2926 = vmatprep.subr.bf16.mxu0 0
        %2927 = vmatpush1.bf16.xpose.msra.mxu0 %v2907
        %2928 = vmatprep.subr.bf16.mxu0 0
        %2929 = vmatpush1.bf16.xpose.msra.mxu0 %v2906
        %2930 = vmatprep.subr.bf16.mxu0 0
        %2931 = vmatpush2.bf16.xpose.msra.mxu0 0
        %2932 = vmatprep.subr.bf16.mxu0 0
        %2933 = vmatpush2.bf16.xpose.msra.mxu0 0
        %2934 = vmatprep.subr.bf16.mxu0 0
        %2935 = vmatpush2.bf16.xpose.msra.mxu0 0
        %2936 = vmatprep.subr.bf16.mxu0 0
        %2937 = vmatpush2.bf16.xpose.msra.mxu0 0
        %2938 = vmatprep.subr.bf16.mxu0 0
        %2939 = vmatpush2.bf16.xpose.msra.mxu0 0
        %2940 = vmatprep.subr.bf16.mxu0 0
        %2941 = vmatpush2.bf16.xpose.msra.mxu0 0
        %2942 = vmatprep.subr.bf16.mxu0 0
        %2943 = vmatpush2.bf16.xpose.msra.mxu0 0
        %2944 = vmatprep.subr.bf16.mxu0 0
        %2945 = vmatpush2.bf16.xpose.msra.mxu0 0
        %2946 = vmatprep.mubr.bf16.mxu0 0
        %2947 = vmatmul.mubr.bf16.gmra.mxu0 %v2902
        %v2948 = vpop.f32.mrf.mxu0
        %v2949 = vadd.f32 0.0, %v2948
        %v2950 = vpop.f32.mrf.mxu0
        %v2951 = vpop.f32.mrf.mxu0
        %v2952 = vadd.f32 0.0, %v2951
        %v2953 = vpop.f32.mrf.mxu0
        %2954 = vmatprep.mubr.bf16.mxu0 0
        %2955 = vmatmul.mubr.bf16.gmra.mxu0 %v2903
        %v2956 = vpop.f32.mrf.mxu0
        %v2957 = vadd.f32 0.0, %v2956
        %v2958 = vpop.f32.mrf.mxu0
        %v2959 = vpop.f32.mrf.mxu0
        %v2960 = vadd.f32 0.0, %v2959
        %v2961 = vpop.f32.mrf.mxu0
        %2962 = vdwg.mxu0
        %2963 = vmatprep.subr.bf16.mxu0 0
        %2964 = vmatpush1.bf16.xpose.msra.mxu0 0
        %2965 = vmatprep.subr.bf16.mxu0 0
        %2966 = vmatpush1.bf16.xpose.msra.mxu0 0
        %2967 = vmatprep.subr.bf16.mxu0 0
        %2968 = vmatpush1.bf16.xpose.msra.mxu0 0
        %2969 = vmatprep.subr.bf16.mxu0 0
        %2970 = vmatpush1.bf16.xpose.msra.mxu0 0
        %2971 = vmatprep.subr.bf16.mxu0 0
        %2972 = vmatpush1.bf16.xpose.msra.mxu0 0
        %2973 = vmatprep.subr.bf16.mxu0 0
        %2974 = vmatpush1.bf16.xpose.msra.mxu0 0
        %2975 = vmatprep.subr.bf16.mxu0 0
        %2976 = vmatpush1.bf16.xpose.msra.mxu0 %v2909
        %2977 = vmatprep.subr.bf16.mxu0 0
        %2978 = vmatpush1.bf16.xpose.msra.mxu0 %v2908
        %2979 = vmatprep.subr.bf16.mxu0 0
        %2980 = vmatpush2.bf16.xpose.msra.mxu0 0
        %2981 = vmatprep.subr.bf16.mxu0 0
        %2982 = vmatpush2.bf16.xpose.msra.mxu0 0
        %2983 = vmatprep.subr.bf16.mxu0 0
        %2984 = vmatpush2.bf16.xpose.msra.mxu0 0
        %2985 = vmatprep.subr.bf16.mxu0 0
        %2986 = vmatpush2.bf16.xpose.msra.mxu0 0
        %2987 = vmatprep.subr.bf16.mxu0 0
        %2988 = vmatpush2.bf16.xpose.msra.mxu0 0
        %2989 = vmatprep.subr.bf16.mxu0 0
        %2990 = vmatpush2.bf16.xpose.msra.mxu0 0
        %2991 = vmatprep.subr.bf16.mxu0 0
        %2992 = vmatpush2.bf16.xpose.msra.mxu0 0
        %2993 = vmatprep.subr.bf16.mxu0 0
        %2994 = vmatpush2.bf16.xpose.msra.mxu0 0
        %2995 = vmatprep.mubr.bf16.mxu0 0
        %2996 = vmatmul.mubr.bf16.gmra.mxu0 %v2904
        %v2997 = vpop.f32.mrf.mxu0
        %v2998 = vadd.f32 0.0, %v2997
        %v2999 = vpop.f32.mrf.mxu0
        %v3000 = vpop.f32.mrf.mxu0
        %v3001 = vadd.f32 0.0, %v3000
        %v3002 = vpop.f32.mrf.mxu0
        %3003 = vmatprep.mubr.bf16.mxu0 0
        %3004 = vmatmul.mubr.bf16.gmra.mxu0 %v2905
        %v3005 = vpop.f32.mrf.mxu0
        %v3006 = vadd.f32 0.0, %v3005
        %v3007 = vpop.f32.mrf.mxu0
        %v3008 = vpop.f32.mrf.mxu0
        %v3009 = vadd.f32 0.0, %v3008
        %v3010 = vpop.f32.mrf.mxu0
        %3011 = vdwg.mxu0
        %v3012 = vsel %vm2650, %v2949, -1e+30
        %v3013 = vsel %vm2650, %v2952, -1e+30
        %v3014 = vsel %vm2650, %v2957, -1e+30
        %v3015 = vsel %vm2650, %v2960, -1e+30
        %v3016 = vsel %vm2650, %v2998, -1e+30
        %v3017 = vsel %vm2650, %v3001, -1e+30
        %v3018 = vsel %vm2650, %v3006, -1e+30
        %v3019 = vsel %vm2650, %v3009, -1e+30
        %v3020 = vsel %vm2659, %v3012, -inf
        %3021 = vmax.xlane.f32.xlu0 %v3020
        %v3022 = vpop.xlane.xlu0 %3021
        %v3023 = vsel %vm2659, %v3013, -inf
        %3024 = vmax.xlane.f32.xlu0 %v3023
        %v3025 = vpop.xlane.xlu0 %3024
        %v3026 = vsel %vm2659, %v3014, -inf
        %3027 = vmax.xlane.f32.xlu0 %v3026
        %v3028 = vpop.xlane.xlu0 %3027
        %v3029 = vsel %vm2659, %v3015, -inf
        %3030 = vmax.xlane.f32.xlu0 %v3029
        %v3031 = vpop.xlane.xlu0 %3030
        %v3032 = vsel %vm2659, %v3016, -inf
        %3033 = vmax.xlane.f32.xlu0 %v3032
        %v3034 = vpop.xlane.xlu0 %3033
        %v3035 = vsel %vm2659, %v3017, -inf
        %3036 = vmax.xlane.f32.xlu0 %v3035
        %v3037 = vpop.xlane.xlu0 %3036
        %v3038 = vsel %vm2659, %v3018, -inf
        %3039 = vmax.xlane.f32.xlu0 %v3038
        %v3040 = vpop.xlane.xlu0 %3039
        %v3041 = vsel %vm2659, %v3019, -inf
        %3042 = vmax.xlane.f32.xlu0 %v3041
        %v3043 = vpop.xlane.xlu0 %3042
        %v3044 = vsub.f32 %v3012, %v3022
        %v3045 = vsub.f32 %v3013, %v3025
        %v3046 = vsub.f32 %v3014, %v3028
        %v3047 = vsub.f32 %v3015, %v3031
        %v3048 = vsub.f32 %v3016, %v3034
        %v3049 = vsub.f32 %v3017, %v3037
        %v3050 = vsub.f32 %v3018, %v3040
        %v3051 = vsub.f32 %v3019, %v3043
        %v3052 = vmul.f32 %v3044, 1.442695
        %v3053 = vpow.pop %v3052
        %v3054 = vmul.f32 %v3045, 1.442695
        %v3055 = vpow.pop %v3054
        %v3056 = vmul.f32 %v3046, 1.442695
        %v3057 = vpow.pop %v3056
        %v3058 = vmul.f32 %v3047, 1.442695
        %v3059 = vpow.pop %v3058
        %v3060 = vmul.f32 %v3048, 1.442695
        %v3061 = vpow.pop %v3060
        %v3062 = vmul.f32 %v3049, 1.442695
        %v3063 = vpow.pop %v3062
        %v3064 = vmul.f32 %v3050, 1.442695
        %v3065 = vpow.pop %v3064
        %v3066 = vmul.f32 %v3051, 1.442695
        %v3067 = vpow.pop %v3066
        %v3068 = vsel %vm2659, %v3053, 0.0
        %3069 = vadd.xlane.f32.xlu0 %v3068
        %v3070 = vpop.xlane.xlu0 %3069
        %v3071 = vsel %vm2659, %v3055, 0.0
        %3072 = vadd.xlane.f32.xlu0 %v3071
        %v3073 = vpop.xlane.xlu0 %3072
        %v3074 = vsel %vm2659, %v3057, 0.0
        %3075 = vadd.xlane.f32.xlu0 %v3074
        %v3076 = vpop.xlane.xlu0 %3075
        %v3077 = vsel %vm2659, %v3059, 0.0
        %3078 = vadd.xlane.f32.xlu0 %v3077
        %v3079 = vpop.xlane.xlu0 %3078
        %v3080 = vsel %vm2659, %v3061, 0.0
        %3081 = vadd.xlane.f32.xlu0 %v3080
        %v3082 = vpop.xlane.xlu0 %3081
        %v3083 = vsel %vm2659, %v3063, 0.0
        %3084 = vadd.xlane.f32.xlu0 %v3083
        %v3085 = vpop.xlane.xlu0 %3084
        %v3086 = vsel %vm2659, %v3065, 0.0
        %3087 = vadd.xlane.f32.xlu0 %v3086
        %v3088 = vpop.xlane.xlu0 %3087
        %v3089 = vsel %vm2659, %v3067, 0.0
        %3090 = vadd.xlane.f32.xlu0 %v3089
        %v3091 = vpop.xlane.xlu0 %3090
        %v3092 = vrcp.pop %v3070
        %v3093 = vrcp.pop %v3073
        %v3094 = vrcp.pop %v3076
        %v3095 = vrcp.pop %v3079
        %v3096 = vrcp.pop %v3082
        %v3097 = vrcp.pop %v3085
        %v3098 = vrcp.pop %v3088
        %v3099 = vrcp.pop %v3091
        %v3100 = vmul.f32 %v3053, %v3092
        %v3101 = vmul.f32 %v3055, %v3093
        %v3102 = vmul.f32 %v3057, %v3094
        %v3103 = vmul.f32 %v3059, %v3095
        %v3104 = vmul.f32 %v3061, %v3096
        %v3105 = vmul.f32 %v3063, %v3097
        %v3106 = vmul.f32 %v3065, %v3098
        %v3107 = vmul.f32 %v3067, %v3099
        %v3108 = vpack.c.bf16 %v3101, %v3100
        %v3109 = vpack.c.bf16 %v3103, %v3102
        %v3110 = vpack.c.bf16 %v3105, %v3104
        %v3111 = vpack.c.bf16 %v3107, %v3106
        %v3113 = vsel %vm2659, %v3108, 0
        %v3116 = vsel %vm2659, %v3109, 0
        %3118 = vmatprep.subr.bf16.mxu0 0
        %3119 = vmatpush1.bf16.msra.mxu0 0
        %3120 = vmatprep.subr.bf16.mxu0 0
        %3121 = vmatpush1.bf16.msra.mxu0 0
        %3122 = vmatprep.subr.bf16.mxu0 0
        %3123 = vmatpush1.bf16.msra.mxu0 0
        %3124 = vmatprep.subr.bf16.mxu0 0
        %3125 = vmatpush1.bf16.msra.mxu0 0
        %3126 = vmatprep.subr.bf16.mxu0 0
        %3127 = vmatpush1.bf16.msra.mxu0 0
        %3128 = vmatprep.subr.bf16.mxu0 0
        %3129 = vmatpush1.bf16.msra.mxu0 0
        %3130 = vmatprep.subr.bf16.mxu0 0
        %3131 = vmatpush1.bf16.msra.mxu0 %v2911
        %3132 = vmatprep.subr.bf16.mxu0 0
        %3133 = vmatpush1.bf16.msra.mxu0 %v2910
        %3134 = vmatprep.subr.bf16.mxu0 0
        %3135 = vmatpush2.bf16.msra.mxu0 0
        %3136 = vmatprep.subr.bf16.mxu0 0
        %3137 = vmatpush2.bf16.msra.mxu0 0
        %3138 = vmatprep.subr.bf16.mxu0 0
        %3139 = vmatpush2.bf16.msra.mxu0 0
        %3140 = vmatprep.subr.bf16.mxu0 0
        %3141 = vmatpush2.bf16.msra.mxu0 0
        %3142 = vmatprep.subr.bf16.mxu0 0
        %3143 = vmatpush2.bf16.msra.mxu0 0
        %3144 = vmatprep.subr.bf16.mxu0 0
        %3145 = vmatpush2.bf16.msra.mxu0 0
        %3146 = vmatprep.subr.bf16.mxu0 0
        %3147 = vmatpush2.bf16.msra.mxu0 0
        %3148 = vmatprep.subr.bf16.mxu0 0
        %3149 = vmatpush2.bf16.msra.mxu0 0
        %3150 = vmatprep.mubr.bf16.mxu0 0
        %3151 = vmatmul.mubr.bf16.gmra.mxu0 %v3113
        %v3152 = vpop.f32.mrf.mxu0
        %v3153 = vadd.f32 0.0, %v3152
        %v3154 = vpop.f32.mrf.mxu0
        %v3155 = vpop.f32.mrf.mxu0
        %v3156 = vadd.f32 0.0, %v3155
        %v3157 = vpop.f32.mrf.mxu0
        %3158 = vmatprep.mubr.bf16.mxu0 0
        %3159 = vmatmul.mubr.bf16.gmra.mxu0 %v3116
        %v3160 = vpop.f32.mrf.mxu0
        %v3161 = vadd.f32 0.0, %v3160
        %v3162 = vpop.f32.mrf.mxu0
        %v3163 = vpop.f32.mrf.mxu0
        %v3164 = vadd.f32 0.0, %v3163
        %v3165 = vpop.f32.mrf.mxu0
        %3166 = vdwg.mxu0
        %v3168 = vsel %vm2659, %v3110, 0
        %v3171 = vsel %vm2659, %v3111, 0
        %3173 = vmatprep.subr.bf16.mxu0 0
        %3174 = vmatpush1.bf16.msra.mxu0 0
        %3175 = vmatprep.subr.bf16.mxu0 0
        %3176 = vmatpush1.bf16.msra.mxu0 0
        %3177 = vmatprep.subr.bf16.mxu0 0
        %3178 = vmatpush1.bf16.msra.mxu0 0
        %3179 = vmatprep.subr.bf16.mxu0 0
        %3180 = vmatpush1.bf16.msra.mxu0 0
        %3181 = vmatprep.subr.bf16.mxu0 0
        %3182 = vmatpush1.bf16.msra.mxu0 0
        %3183 = vmatprep.subr.bf16.mxu0 0
        %3184 = vmatpush1.bf16.msra.mxu0 0
        %3185 = vmatprep.subr.bf16.mxu0 0
        %3186 = vmatpush1.bf16.msra.mxu0 %v2913
        %3187 = vmatprep.subr.bf16.mxu0 0
        %3188 = vmatpush1.bf16.msra.mxu0 %v2912
        %3189 = vmatprep.subr.bf16.mxu0 0
        %3190 = vmatpush2.bf16.msra.mxu0 0
        %3191 = vmatprep.subr.bf16.mxu0 0
        %3192 = vmatpush2.bf16.msra.mxu0 0
        %3193 = vmatprep.subr.bf16.mxu0 0
        %3194 = vmatpush2.bf16.msra.mxu0 0
        %3195 = vmatprep.subr.bf16.mxu0 0
        %3196 = vmatpush2.bf16.msra.mxu0 0
        %3197 = vmatprep.subr.bf16.mxu0 0
        %3198 = vmatpush2.bf16.msra.mxu0 0
        %3199 = vmatprep.subr.bf16.mxu0 0
        %3200 = vmatpush2.bf16.msra.mxu0 0
        %3201 = vmatprep.subr.bf16.mxu0 0
        %3202 = vmatpush2.bf16.msra.mxu0 0
        %3203 = vmatprep.subr.bf16.mxu0 0
        %3204 = vmatpush2.bf16.msra.mxu0 0
        %3205 = vmatprep.mubr.bf16.mxu0 0
        %3206 = vmatmul.mubr.bf16.gmra.mxu0 %v3168
        %v3207 = vpop.f32.mrf.mxu0
        %v3208 = vadd.f32 0.0, %v3207
        %v3209 = vpop.f32.mrf.mxu0
        %v3210 = vpop.f32.mrf.mxu0
        %v3211 = vadd.f32 0.0, %v3210
        %v3212 = vpop.f32.mrf.mxu0
        %3213 = vmatprep.mubr.bf16.mxu0 0
        %3214 = vmatmul.mubr.bf16.gmra.mxu0 %v3171
        %v3215 = vpop.f32.mrf.mxu0
        %v3216 = vadd.f32 0.0, %v3215
        %v3217 = vpop.f32.mrf.mxu0
        %v3218 = vpop.f32.mrf.mxu0
        %v3219 = vadd.f32 0.0, %v3218
        %v3220 = vpop.f32.mrf.mxu0
        %3221 = vdwg.mxu0
        %v3222 = vpack.c.bf16 %v3156, %v3153
        %v3223 = vpack.c.bf16 %v3164, %v3161
        %v3224 = vpack.c.bf16 %v3211, %v3208
        %v3225 = vpack.c.bf16 %v3219, %v3216
        %v3230 = vunpack.c.l.b16 %v3222
        %v3231 = vunpack.c.h.b16 %v3222
        %v3232 = vunpack.c.l.b16 %v3223
        %v3233 = vunpack.c.h.b16 %v3223
        %v3234 = vunpack.c.l.b16 %v3224
        %v3235 = vunpack.c.h.b16 %v3224
        %v3236 = vunpack.c.l.b16 %v3225
        %v3237 = vunpack.c.h.b16 %v3225
        %v3238 = vpack.c.b16 %v3230, %v3230
        %v3239 = vpack.c.b16 %v3231, %v3231
        %v3240 = vpack.c.b16 %v3232, %v3232
        %v3241 = vpack.c.b16 %v3233, %v3233
        %v3242 = vpack.c.b16 %v3234, %v3234
        %v3243 = vpack.c.b16 %v3235, %v3235
        %v3244 = vpack.c.b16 %v3236, %v3236
        %v3245 = vpack.c.b16 %v3237, %v3237
        %3254 = vst [vmem:[#allocation3 + $0x4] sm:$0xf] %v3238
        %3255 = vst [vmem:[#allocation3 + $0xc] sm:$0xf] %v3239
        %3256 = vst [vmem:[#allocation3 + $0x14] sm:$0xf] %v3240
        %3257 = vst [vmem:[#allocation3 + $0x1c] sm:$0xf] %v3241
        %3258 = vst [vmem:[#allocation3 + $0x24] sm:$0xf] %v3242
        %3259 = vst [vmem:[#allocation3 + $0x2c] sm:$0xf] %v3243
        %3260 = vst [vmem:[#allocation3 + $0x34] sm:$0xf] %v3244
        %3261 = vst [vmem:[#allocation3 + $0x3c] sm:$0xf] %v3245
        %v3262 = vld [vmem:[#allocation3] sm:$0xff]
        %v3263 = vld [vmem:[#allocation3 + $0x8] sm:$0xff]
        %v3264 = vld [vmem:[#allocation3 + $0x10] sm:$0xff]
        %v3265 = vld [vmem:[#allocation3 + $0x18] sm:$0xff]
        %v3266 = vld [vmem:[#allocation3 + $0x20] sm:$0xff]
        %v3267 = vld [vmem:[#allocation3 + $0x28] sm:$0xff]
        %v3268 = vld [vmem:[#allocation3 + $0x30] sm:$0xff]
        %v3269 = vld [vmem:[#allocation3 + $0x38] sm:$0xff]
        %v3270 = vld [vmem:[%s943] sm:$0xff]
        %v3271 = vld [vmem:[%s943 + $0x8] sm:$0xff]
        %v3272 = vld [vmem:[%s943 + $0x10] sm:$0xff]
        %v3273 = vld [vmem:[%s943 + $0x18] sm:$0xff]
        %v3274 = vld [vmem:[%s943 + $0x20] sm:$0xff]
        %v3275 = vld [vmem:[%s943 + $0x28] sm:$0xff]
        %v3276 = vld [vmem:[%s943 + $0x30] sm:$0xff]
        %v3277 = vld [vmem:[%s943 + $0x38] sm:$0xff]
        %v3278 = vld [vmem:[%s943 + $0x40] sm:$0xff]
        %v3279 = vld [vmem:[%s943 + $0x48] sm:$0xff]
        %v3280 = vld [vmem:[%s943 + $0x50] sm:$0xff]
        %v3281 = vld [vmem:[%s943 + $0x58] sm:$0xff]
        %v3282 = vld [vmem:[%s943 + $0x60] sm:$0xff]
        %v3283 = vld [vmem:[%s943 + $0x68] sm:$0xff]
        %v3284 = vld [vmem:[%s943 + $0x70] sm:$0xff]
        %v3285 = vld [vmem:[%s943 + $0x78] sm:$0xff]
        %v3286 = vld [vmem:[%s943 + $0x80] sm:$0xff]
        %v3287 = vld [vmem:[%s943 + $0x88] sm:$0xff]
        %v3288 = vld [vmem:[%s943 + $0x90] sm:$0xff]
        %v3289 = vld [vmem:[%s943 + $0x98] sm:$0xff]
        %v3290 = vld [vmem:[%s943 + $0xa0] sm:$0xff]
        %v3291 = vld [vmem:[%s943 + $0xa8] sm:$0xff]
        %v3292 = vld [vmem:[%s943 + $0xb0] sm:$0xff]
        %v3293 = vld [vmem:[%s943 + $0xb8] sm:$0xff]
        %v3294 = vld [vmem:[%s943 + $0xc0] sm:$0xff]
        %v3295 = vld [vmem:[%s943 + $0xc8] sm:$0xff]
        %v3296 = vld [vmem:[%s943 + $0xd0] sm:$0xff]
        %v3297 = vld [vmem:[%s943 + $0xd8] sm:$0xff]
        %v3298 = vld [vmem:[%s943 + $0xe0] sm:$0xff]
        %v3299 = vld [vmem:[%s943 + $0xe8] sm:$0xff]
        %v3300 = vld [vmem:[%s943 + $0xf0] sm:$0xff]
        %v3301 = vld [vmem:[%s943 + $0xf8] sm:$0xff]
        %v3310 = vunpack.c.l.b16 %v3262
        %v3311 = vunpack.c.h.b16 %v3262
        %v3312 = vunpack.c.l.b16 %v3263
        %v3313 = vunpack.c.h.b16 %v3263
        %v3314 = vunpack.c.l.b16 %v3264
        %v3315 = vunpack.c.h.b16 %v3264
        %v3316 = vunpack.c.l.b16 %v3265
        %v3317 = vunpack.c.h.b16 %v3265
        %v3318 = vunpack.c.l.b16 %v3266
        %v3319 = vunpack.c.h.b16 %v3266
        %v3320 = vunpack.c.l.b16 %v3267
        %v3321 = vunpack.c.h.b16 %v3267
        %v3322 = vunpack.c.l.b16 %v3268
        %v3323 = vunpack.c.h.b16 %v3268
        %v3324 = vunpack.c.l.b16 %v3269
        %v3325 = vunpack.c.h.b16 %v3269
        %v3326 = vpack.c.b16 %v3312, %v3310
        %v3327 = vpack.c.b16 %v3313, %v3311
        %v3328 = vpack.c.b16 %v3316, %v3314
        %v3329 = vpack.c.b16 %v3317, %v3315
        %v3330 = vpack.c.b16 %v3320, %v3318
        %v3331 = vpack.c.b16 %v3321, %v3319
        %v3332 = vpack.c.b16 %v3324, %v3322
        %v3333 = vpack.c.b16 %v3325, %v3323
        %v3374 = vunpack.c.l.b16 %v3270
        %v3375 = vunpack.c.h.b16 %v3270
        %v3376 = vunpack.c.l.b16 %v3271
        %v3377 = vunpack.c.h.b16 %v3271
        %v3378 = vunpack.c.l.b16 %v3272
        %v3379 = vunpack.c.h.b16 %v3272
        %v3380 = vunpack.c.l.b16 %v3273
        %v3381 = vunpack.c.h.b16 %v3273
        %v3382 = vunpack.c.l.b16 %v3274
        %v3383 = vunpack.c.h.b16 %v3274
        %v3384 = vunpack.c.l.b16 %v3275
        %v3385 = vunpack.c.h.b16 %v3275
        %v3386 = vunpack.c.l.b16 %v3276
        %v3387 = vunpack.c.h.b16 %v3276
        %v3388 = vunpack.c.l.b16 %v3277
        %v3389 = vunpack.c.h.b16 %v3277
        %v3390 = vunpack.c.l.b16 %v3278
        %v3391 = vunpack.c.h.b16 %v3278
        %v3392 = vunpack.c.l.b16 %v3279
        %v3393 = vunpack.c.h.b16 %v3279
        %v3394 = vunpack.c.l.b16 %v3280
        %v3395 = vunpack.c.h.b16 %v3280
        %v3396 = vunpack.c.l.b16 %v3281
        %v3397 = vunpack.c.h.b16 %v3281
        %v3398 = vunpack.c.l.b16 %v3282
        %v3399 = vunpack.c.h.b16 %v3282
        %v3400 = vunpack.c.l.b16 %v3283
        %v3401 = vunpack.c.h.b16 %v3283
        %v3402 = vunpack.c.l.b16 %v3284
        %v3403 = vunpack.c.h.b16 %v3284
        %v3404 = vunpack.c.l.b16 %v3285
        %v3405 = vunpack.c.h.b16 %v3285
        %v3406 = vunpack.c.l.b16 %v3286
        %v3407 = vunpack.c.h.b16 %v3286
        %v3408 = vunpack.c.l.b16 %v3287
        %v3409 = vunpack.c.h.b16 %v3287
        %v3410 = vunpack.c.l.b16 %v3288
        %v3411 = vunpack.c.h.b16 %v3288
        %v3412 = vunpack.c.l.b16 %v3289
        %v3413 = vunpack.c.h.b16 %v3289
        %v3414 = vunpack.c.l.b16 %v3290
        %v3415 = vunpack.c.h.b16 %v3290
        %v3416 = vunpack.c.l.b16 %v3291
        %v3417 = vunpack.c.h.b16 %v3291
        %v3418 = vunpack.c.l.b16 %v3292
        %v3419 = vunpack.c.h.b16 %v3292
        %v3420 = vunpack.c.l.b16 %v3293
        %v3421 = vunpack.c.h.b16 %v3293
        %v3422 = vunpack.c.l.b16 %v3294
        %v3423 = vunpack.c.h.b16 %v3294
        %v3424 = vunpack.c.l.b16 %v3295
        %v3425 = vunpack.c.h.b16 %v3295
        %v3426 = vunpack.c.l.b16 %v3296
        %v3427 = vunpack.c.h.b16 %v3296
        %v3428 = vunpack.c.l.b16 %v3297
        %v3429 = vunpack.c.h.b16 %v3297
        %v3430 = vunpack.c.l.b16 %v3298
        %v3431 = vunpack.c.h.b16 %v3298
        %v3432 = vunpack.c.l.b16 %v3299
        %v3433 = vunpack.c.h.b16 %v3299
        %v3434 = vunpack.c.l.b16 %v3300
        %v3435 = vunpack.c.h.b16 %v3300
        %v3436 = vunpack.c.l.b16 %v3301
        %v3437 = vunpack.c.h.b16 %v3301
        %v3438 = vpack.c.b16 %v3376, %v3374
        %v3439 = vpack.c.b16 %v3377, %v3375
        %v3440 = vpack.c.b16 %v3380, %v3378
        %v3441 = vpack.c.b16 %v3381, %v3379
        %v3442 = vpack.c.b16 %v3384, %v3382
        %v3443 = vpack.c.b16 %v3385, %v3383
        %v3444 = vpack.c.b16 %v3388, %v3386
        %v3445 = vpack.c.b16 %v3389, %v3387
        %v3446 = vpack.c.b16 %v3392, %v3390
        %v3447 = vpack.c.b16 %v3393, %v3391
        %v3448 = vpack.c.b16 %v3396, %v3394
        %v3449 = vpack.c.b16 %v3397, %v3395
        %v3450 = vpack.c.b16 %v3400, %v3398
        %v3451 = vpack.c.b16 %v3401, %v3399
        %v3452 = vpack.c.b16 %v3404, %v3402
        %v3453 = vpack.c.b16 %v3405, %v3403
        %v3454 = vpack.c.b16 %v3408, %v3406
        %v3455 = vpack.c.b16 %v3409, %v3407
        %v3456 = vpack.c.b16 %v3412, %v3410
        %v3457 = vpack.c.b16 %v3413, %v3411
        %v3458 = vpack.c.b16 %v3416, %v3414
        %v3459 = vpack.c.b16 %v3417, %v3415
        %v3460 = vpack.c.b16 %v3420, %v3418
        %v3461 = vpack.c.b16 %v3421, %v3419
        %v3462 = vpack.c.b16 %v3424, %v3422
        %v3463 = vpack.c.b16 %v3425, %v3423
        %v3464 = vpack.c.b16 %v3428, %v3426
        %v3465 = vpack.c.b16 %v3429, %v3427
        %v3466 = vpack.c.b16 %v3432, %v3430
        %v3467 = vpack.c.b16 %v3433, %v3431
        %v3468 = vpack.c.b16 %v3436, %v3434
        %v3469 = vpack.c.b16 %v3437, %v3435
        %3502 = vmatprep.subr.bf16.mxu0 %v3453
        %3503 = vmatpush1.bf16.msra.mxu0 %v3452
        %3504 = vmatprep.subr.bf16.mxu0 %v3451
        %3505 = vmatpush1.bf16.msra.mxu0 %v3450
        %3506 = vmatprep.subr.bf16.mxu0 %v3449
        %3507 = vmatpush1.bf16.msra.mxu0 %v3448
        %3508 = vmatprep.subr.bf16.mxu0 %v3447
        %3509 = vmatpush1.bf16.msra.mxu0 %v3446
        %3510 = vmatprep.subr.bf16.mxu0 %v3445
        %3511 = vmatpush1.bf16.msra.mxu0 %v3444
        %3512 = vmatprep.subr.bf16.mxu0 %v3443
        %3513 = vmatpush1.bf16.msra.mxu0 %v3442
        %3514 = vmatprep.subr.bf16.mxu0 %v3441
        %3515 = vmatpush1.bf16.msra.mxu0 %v3440
        %3516 = vmatprep.subr.bf16.mxu0 %v3439
        %3517 = vmatpush1.bf16.msra.mxu0 %v3438
        %3518 = vmatprep.subr.bf16.mxu0 %v3469
        %3519 = vmatpush2.bf16.msra.mxu0 %v3468
        %3520 = vmatprep.subr.bf16.mxu0 %v3467
        %3521 = vmatpush2.bf16.msra.mxu0 %v3466
        %3522 = vmatprep.subr.bf16.mxu0 %v3465
        %3523 = vmatpush2.bf16.msra.mxu0 %v3464
        %3524 = vmatprep.subr.bf16.mxu0 %v3463
        %3525 = vmatpush2.bf16.msra.mxu0 %v3462
        %3526 = vmatprep.subr.bf16.mxu0 %v3461
        %3527 = vmatpush2.bf16.msra.mxu0 %v3460
        %3528 = vmatprep.subr.bf16.mxu0 %v3459
        %3529 = vmatpush2.bf16.msra.mxu0 %v3458
        %3530 = vmatprep.subr.bf16.mxu0 %v3457
        %3531 = vmatpush2.bf16.msra.mxu0 %v3456
        %3532 = vmatprep.subr.bf16.mxu0 %v3455
        %3533 = vmatpush2.bf16.msra.mxu0 %v3454
        %3534 = vmatprep.mubr.bf16.mxu0 %v3327
        %3535 = vmatmul.mubr.bf16.gmra.mxu0 %v3326
        %v3536 = vpop.f32.mrf.mxu0
        %v3537 = vadd.f32 0.0, %v3536
        %v3538 = vpop.f32.mrf.mxu0
        %v3539 = vadd.f32 0.0, %v3538
        %v3540 = vpop.f32.mrf.mxu0
        %v3541 = vadd.f32 0.0, %v3540
        %v3542 = vpop.f32.mrf.mxu0
        %v3543 = vadd.f32 0.0, %v3542
        %3544 = vmatprep.mubr.bf16.mxu0 %v3329
        %3545 = vmatmul.mubr.bf16.gmra.mxu0 %v3328
        %v3546 = vpop.f32.mrf.mxu0
        %v3547 = vadd.f32 0.0, %v3546
        %v3548 = vpop.f32.mrf.mxu0
        %v3549 = vadd.f32 0.0, %v3548
        %v3550 = vpop.f32.mrf.mxu0
        %v3551 = vadd.f32 0.0, %v3550
        %v3552 = vpop.f32.mrf.mxu0
        %v3553 = vadd.f32 0.0, %v3552
        %3554 = vmatprep.mubr.bf16.mxu0 %v3331
        %3555 = vmatmul.mubr.bf16.gmra.mxu0 %v3330
        %v3556 = vpop.f32.mrf.mxu0
        %v3557 = vadd.f32 0.0, %v3556
        %v3558 = vpop.f32.mrf.mxu0
        %v3559 = vadd.f32 0.0, %v3558
        %v3560 = vpop.f32.mrf.mxu0
        %v3561 = vadd.f32 0.0, %v3560
        %v3562 = vpop.f32.mrf.mxu0
        %v3563 = vadd.f32 0.0, %v3562
        %3564 = vmatprep.mubr.bf16.mxu0 %v3333
        %3565 = vmatmul.mubr.bf16.gmra.mxu0 %v3332
        %v3566 = vpop.f32.mrf.mxu0
        %v3567 = vadd.f32 0.0, %v3566
        %v3568 = vpop.f32.mrf.mxu0
        %v3569 = vadd.f32 0.0, %v3568
        %v3570 = vpop.f32.mrf.mxu0
        %v3571 = vadd.f32 0.0, %v3570
        %v3572 = vpop.f32.mrf.mxu0
        %v3573 = vadd.f32 0.0, %v3572
        %3574 = vdwg.mxu0
        %v3575 = vadd.f32 %v1500, %v3537
        %v3576 = vadd.f32 %v1501, %v3539
        %v3577 = vadd.f32 %v1502, %v3541
        %v3578 = vadd.f32 %v1503, %v3543
        %v3579 = vadd.f32 %v1504, %v3547
        %v3580 = vadd.f32 %v1505, %v3549
        %v3581 = vadd.f32 %v1506, %v3551
        %v3582 = vadd.f32 %v1507, %v3553
        %v3583 = vadd.f32 %v1508, %v3557
        %v3584 = vadd.f32 %v1509, %v3559
        %v3585 = vadd.f32 %v1510, %v3561
        %v3586 = vadd.f32 %v1511, %v3563
        %v3587 = vadd.f32 %v1512, %v3567
        %v3588 = vadd.f32 %v1513, %v3569
        %v3589 = vadd.f32 %v1514, %v3571
        %v3590 = vadd.f32 %v1515, %v3573
        %v3591 = vld [vmem:[%s952] sm:$0x3]
        %v3593 = vlaneseq
        %v3594 = vshrl.u32 %v3593, 7
        %v3595 = vsub.s32 0, %v3594
        %v3596 = vrot.slane %v3591, %v3595
        %v3597 = vlaneseq
        %v3598 = vshrl.u32 %v3597, 7
        %v3599 = vsub.s32 1, %v3598
        %v3600 = vrot.slane %v3591, %v3599
        %v3603 = vadd.f32 %v3575, %v3596
        %v3604 = vadd.f32 %v3576, %v3600
        %v3605 = vadd.f32 %v3577, %v3596
        %v3606 = vadd.f32 %v3578, %v3600
        %v3607 = vadd.f32 %v3579, %v3596
        %v3608 = vadd.f32 %v3580, %v3600
        %v3609 = vadd.f32 %v3581, %v3596
        %v3610 = vadd.f32 %v3582, %v3600
        %v3611 = vadd.f32 %v3583, %v3596
        %v3612 = vadd.f32 %v3584, %v3600
        %v3613 = vadd.f32 %v3585, %v3596
        %v3614 = vadd.f32 %v3586, %v3600
        %v3615 = vadd.f32 %v3587, %v3596
        %v3616 = vadd.f32 %v3588, %v3600
        %v3617 = vadd.f32 %v3589, %v3596
        %v3618 = vadd.f32 %v3590, %v3600
        %v3619 = vld [vmem:[%s961] sm:$0x3]
        %v3620 = vld [vmem:[%s970] sm:$0x3]
        %v3621 = vadd.f32 %v3603, %v3604
        %3622 = vadd.xlane.f32.xlu0 %v3621
        %v3623 = vpop.xlane.xlu0 %3622
        %v3624 = vadd.f32 %v3605, %v3606
        %3625 = vadd.xlane.f32.xlu0 %v3624
        %v3626 = vpop.xlane.xlu0 %3625
        %v3627 = vadd.f32 %v3607, %v3608
        %3628 = vadd.xlane.f32.xlu0 %v3627
        %v3629 = vpop.xlane.xlu0 %3628
        %v3630 = vadd.f32 %v3609, %v3610
        %3631 = vadd.xlane.f32.xlu0 %v3630
        %v3632 = vpop.xlane.xlu0 %3631
        %v3633 = vadd.f32 %v3611, %v3612
        %3634 = vadd.xlane.f32.xlu0 %v3633
        %v3635 = vpop.xlane.xlu0 %3634
        %v3636 = vadd.f32 %v3613, %v3614
        %3637 = vadd.xlane.f32.xlu0 %v3636
        %v3638 = vpop.xlane.xlu0 %3637
        %v3639 = vadd.f32 %v3615, %v3616
        %3640 = vadd.xlane.f32.xlu0 %v3639
        %v3641 = vpop.xlane.xlu0 %3640
        %v3642 = vadd.f32 %v3617, %v3618
        %3643 = vadd.xlane.f32.xlu0 %v3642
        %v3644 = vpop.xlane.xlu0 %3643
        %v3645 = vmul.f32 %v3623, %v1542
        %v3646 = vmul.f32 %v3626, %v1542
        %v3647 = vmul.f32 %v3629, %v1542
        %v3648 = vmul.f32 %v3632, %v1542
        %v3649 = vmul.f32 %v3635, %v1542
        %v3650 = vmul.f32 %v3638, %v1542
        %v3651 = vmul.f32 %v3641, %v1542
        %v3652 = vmul.f32 %v3644, %v1542
        %v3653 = vsub.f32 %v3603, %v3645
        %v3654 = vsub.f32 %v3604, %v3645
        %v3655 = vsub.f32 %v3605, %v3646
        %v3656 = vsub.f32 %v3606, %v3646
        %v3657 = vsub.f32 %v3607, %v3647
        %v3658 = vsub.f32 %v3608, %v3647
        %v3659 = vsub.f32 %v3609, %v3648
        %v3660 = vsub.f32 %v3610, %v3648
        %v3661 = vsub.f32 %v3611, %v3649
        %v3662 = vsub.f32 %v3612, %v3649
        %v3663 = vsub.f32 %v3613, %v3650
        %v3664 = vsub.f32 %v3614, %v3650
        %v3665 = vsub.f32 %v3615, %v3651
        %v3666 = vsub.f32 %v3616, %v3651
        %v3667 = vsub.f32 %v3617, %v3652
        %v3668 = vsub.f32 %v3618, %v3652
        %v3669 = vmul.f32 %v3653, %v3653
        %v3670 = vmul.f32 %v3654, %v3654
        %v3671 = vmul.f32 %v3655, %v3655
        %v3672 = vmul.f32 %v3656, %v3656
        %v3673 = vmul.f32 %v3657, %v3657
        %v3674 = vmul.f32 %v3658, %v3658
        %v3675 = vmul.f32 %v3659, %v3659
        %v3676 = vmul.f32 %v3660, %v3660
        %v3677 = vmul.f32 %v3661, %v3661
        %v3678 = vmul.f32 %v3662, %v3662
        %v3679 = vmul.f32 %v3663, %v3663
        %v3680 = vmul.f32 %v3664, %v3664
        %v3681 = vmul.f32 %v3665, %v3665
        %v3682 = vmul.f32 %v3666, %v3666
        %v3683 = vmul.f32 %v3667, %v3667
        %v3684 = vmul.f32 %v3668, %v3668
        %v3685 = vadd.f32 %v3669, %v3670
        %3686 = vadd.xlane.f32.xlu0 %v3685
        %v3687 = vpop.xlane.xlu0 %3686
        %v3688 = vadd.f32 %v3671, %v3672
        %3689 = vadd.xlane.f32.xlu0 %v3688
        %v3690 = vpop.xlane.xlu0 %3689
        %v3691 = vadd.f32 %v3673, %v3674
        %3692 = vadd.xlane.f32.xlu0 %v3691
        %v3693 = vpop.xlane.xlu0 %3692
        %v3694 = vadd.f32 %v3675, %v3676
        %3695 = vadd.xlane.f32.xlu0 %v3694
        %v3696 = vpop.xlane.xlu0 %3695
        %v3697 = vadd.f32 %v3677, %v3678
        %3698 = vadd.xlane.f32.xlu0 %v3697
        %v3699 = vpop.xlane.xlu0 %3698
        %v3700 = vadd.f32 %v3679, %v3680
        %3701 = vadd.xlane.f32.xlu0 %v3700
        %v3702 = vpop.xlane.xlu0 %3701
        %v3703 = vadd.f32 %v3681, %v3682
        %3704 = vadd.xlane.f32.xlu0 %v3703
        %v3705 = vpop.xlane.xlu0 %3704
        %v3706 = vadd.f32 %v3683, %v3684
        %3707 = vadd.xlane.f32.xlu0 %v3706
        %v3708 = vpop.xlane.xlu0 %3707
        %v3709 = vmul.f32 %v3687, %v1542
        %v3710 = vmul.f32 %v3690, %v1542
        %v3711 = vmul.f32 %v3693, %v1542
        %v3712 = vmul.f32 %v3696, %v1542
        %v3713 = vmul.f32 %v3699, %v1542
        %v3714 = vmul.f32 %v3702, %v1542
        %v3715 = vmul.f32 %v3705, %v1542
        %v3716 = vmul.f32 %v3708, %v1542
        %v3717 = vadd.f32 %v3709, 1e-05
        %v3718 = vadd.f32 %v3710, 1e-05
        %v3719 = vadd.f32 %v3711, 1e-05
        %v3720 = vadd.f32 %v3712, 1e-05
        %v3721 = vadd.f32 %v3713, 1e-05
        %v3722 = vadd.f32 %v3714, 1e-05
        %v3723 = vadd.f32 %v3715, 1e-05
        %v3724 = vadd.f32 %v3716, 1e-05
        %v3725 = vrsqrt.pop %v3717
        %v3726 = vrsqrt.pop %v3718
        %v3727 = vrsqrt.pop %v3719
        %v3728 = vrsqrt.pop %v3720
        %v3729 = vrsqrt.pop %v3721
        %v3730 = vrsqrt.pop %v3722
        %v3731 = vrsqrt.pop %v3723
        %v3732 = vrsqrt.pop %v3724
        %v3733 = vmul.f32 %v3653, %v3725
        %v3734 = vmul.f32 %v3654, %v3725
        %v3735 = vmul.f32 %v3655, %v3726
        %v3736 = vmul.f32 %v3656, %v3726
        %v3737 = vmul.f32 %v3657, %v3727
        %v3738 = vmul.f32 %v3658, %v3727
        %v3739 = vmul.f32 %v3659, %v3728
        %v3740 = vmul.f32 %v3660, %v3728
        %v3741 = vmul.f32 %v3661, %v3729
        %v3742 = vmul.f32 %v3662, %v3729
        %v3743 = vmul.f32 %v3663, %v3730
        %v3744 = vmul.f32 %v3664, %v3730
        %v3745 = vmul.f32 %v3665, %v3731
        %v3746 = vmul.f32 %v3666, %v3731
        %v3747 = vmul.f32 %v3667, %v3732
        %v3748 = vmul.f32 %v3668, %v3732
        %v3750 = vlaneseq
        %v3751 = vshrl.u32 %v3750, 7
        %v3752 = vsub.s32 0, %v3751
        %v3753 = vrot.slane %v3619, %v3752
        %v3754 = vlaneseq
        %v3755 = vshrl.u32 %v3754, 7
        %v3756 = vsub.s32 1, %v3755
        %v3757 = vrot.slane %v3619, %v3756
        %v3760 = vmul.f32 %v3733, %v3753
        %v3761 = vmul.f32 %v3734, %v3757
        %v3762 = vmul.f32 %v3735, %v3753
        %v3763 = vmul.f32 %v3736, %v3757
        %v3764 = vmul.f32 %v3737, %v3753
        %v3765 = vmul.f32 %v3738, %v3757
        %v3766 = vmul.f32 %v3739, %v3753
        %v3767 = vmul.f32 %v3740, %v3757
        %v3768 = vmul.f32 %v3741, %v3753
        %v3769 = vmul.f32 %v3742, %v3757
        %v3770 = vmul.f32 %v3743, %v3753
        %v3771 = vmul.f32 %v3744, %v3757
        %v3772 = vmul.f32 %v3745, %v3753
        %v3773 = vmul.f32 %v3746, %v3757
        %v3774 = vmul.f32 %v3747, %v3753
        %v3775 = vmul.f32 %v3748, %v3757
        %v3777 = vlaneseq
        %v3778 = vshrl.u32 %v3777, 7
        %v3779 = vsub.s32 0, %v3778
        %v3780 = vrot.slane %v3620, %v3779
        %v3781 = vlaneseq
        %v3782 = vshrl.u32 %v3781, 7
        %v3783 = vsub.s32 1, %v3782
        %v3784 = vrot.slane %v3620, %v3783
        %v3787 = vadd.f32 %v3760, %v3780
        %v3788 = vadd.f32 %v3761, %v3784
        %v3789 = vadd.f32 %v3762, %v3780
        %v3790 = vadd.f32 %v3763, %v3784
        %v3791 = vadd.f32 %v3764, %v3780
        %v3792 = vadd.f32 %v3765, %v3784
        %v3793 = vadd.f32 %v3766, %v3780
        %v3794 = vadd.f32 %v3767, %v3784
        %v3795 = vadd.f32 %v3768, %v3780
        %v3796 = vadd.f32 %v3769, %v3784
        %v3797 = vadd.f32 %v3770, %v3780
        %v3798 = vadd.f32 %v3771, %v3784
        %v3799 = vadd.f32 %v3772, %v3780
        %v3800 = vadd.f32 %v3773, %v3784
        %v3801 = vadd.f32 %v3774, %v3780
        %v3802 = vadd.f32 %v3775, %v3784
        %v3803 = vpack.c.bf16 %v3789, %v3787
        %v3804 = vpack.c.bf16 %v3790, %v3788
        %v3805 = vpack.c.bf16 %v3793, %v3791
        %v3806 = vpack.c.bf16 %v3794, %v3792
        %v3807 = vpack.c.bf16 %v3797, %v3795
        %v3808 = vpack.c.bf16 %v3798, %v3796
        %v3809 = vpack.c.bf16 %v3801, %v3799
        %v3810 = vpack.c.bf16 %v3802, %v3800
        %v3811 = vld [vmem:[%s979] sm:$0xff]
        %v3812 = vld [vmem:[%s979 + $0x8] sm:$0xff]
        %v3813 = vld [vmem:[%s979 + $0x10] sm:$0xff]
        %v3814 = vld [vmem:[%s979 + $0x18] sm:$0xff]
        %v3815 = vld [vmem:[%s979 + $0x20] sm:$0xff]
        %v3816 = vld [vmem:[%s979 + $0x28] sm:$0xff]
        %v3817 = vld [vmem:[%s979 + $0x30] sm:$0xff]
        %v3818 = vld [vmem:[%s979 + $0x38] sm:$0xff]
        %v3819 = vld [vmem:[%s979 + $0x40] sm:$0xff]
        %v3820 = vld [vmem:[%s979 + $0x48] sm:$0xff]
        %v3821 = vld [vmem:[%s979 + $0x50] sm:$0xff]
        %v3822 = vld [vmem:[%s979 + $0x58] sm:$0xff]
        %v3823 = vld [vmem:[%s979 + $0x60] sm:$0xff]
        %v3824 = vld [vmem:[%s979 + $0x68] sm:$0xff]
        %v3825 = vld [vmem:[%s979 + $0x70] sm:$0xff]
        %v3826 = vld [vmem:[%s979 + $0x78] sm:$0xff]
        %v3827 = vld [vmem:[%s979 + $0x80] sm:$0xff]
        %v3828 = vld [vmem:[%s979 + $0x88] sm:$0xff]
        %v3829 = vld [vmem:[%s979 + $0x90] sm:$0xff]
        %v3830 = vld [vmem:[%s979 + $0x98] sm:$0xff]
        %v3831 = vld [vmem:[%s979 + $0xa0] sm:$0xff]
        %v3832 = vld [vmem:[%s979 + $0xa8] sm:$0xff]
        %v3833 = vld [vmem:[%s979 + $0xb0] sm:$0xff]
        %v3834 = vld [vmem:[%s979 + $0xb8] sm:$0xff]
        %v3835 = vld [vmem:[%s979 + $0xc0] sm:$0xff]
        %v3836 = vld [vmem:[%s979 + $0xc8] sm:$0xff]
        %v3837 = vld [vmem:[%s979 + $0xd0] sm:$0xff]
        %v3838 = vld [vmem:[%s979 + $0xd8] sm:$0xff]
        %v3839 = vld [vmem:[%s979 + $0xe0] sm:$0xff]
        %v3840 = vld [vmem:[%s979 + $0xe8] sm:$0xff]
        %v3841 = vld [vmem:[%s979 + $0xf0] sm:$0xff]
        %v3842 = vld [vmem:[%s979 + $0xf8] sm:$0xff]
        %v3843 = vld [vmem:[%s979 + $0x100] sm:$0xff]
        %v3844 = vld [vmem:[%s979 + $0x108] sm:$0xff]
        %v3845 = vld [vmem:[%s979 + $0x110] sm:$0xff]
        %v3846 = vld [vmem:[%s979 + $0x118] sm:$0xff]
        %v3847 = vld [vmem:[%s979 + $0x120] sm:$0xff]
        %v3848 = vld [vmem:[%s979 + $0x128] sm:$0xff]
        %v3849 = vld [vmem:[%s979 + $0x130] sm:$0xff]
        %v3850 = vld [vmem:[%s979 + $0x138] sm:$0xff]
        %v3851 = vld [vmem:[%s979 + $0x140] sm:$0xff]
        %v3852 = vld [vmem:[%s979 + $0x148] sm:$0xff]
        %v3853 = vld [vmem:[%s979 + $0x150] sm:$0xff]
        %v3854 = vld [vmem:[%s979 + $0x158] sm:$0xff]
        %v3855 = vld [vmem:[%s979 + $0x160] sm:$0xff]
        %v3856 = vld [vmem:[%s979 + $0x168] sm:$0xff]
        %v3857 = vld [vmem:[%s979 + $0x170] sm:$0xff]
        %v3858 = vld [vmem:[%s979 + $0x178] sm:$0xff]
        %v3859 = vld [vmem:[%s979 + $0x180] sm:$0xff]
        %v3860 = vld [vmem:[%s979 + $0x188] sm:$0xff]
        %v3861 = vld [vmem:[%s979 + $0x190] sm:$0xff]
        %v3862 = vld [vmem:[%s979 + $0x198] sm:$0xff]
        %v3863 = vld [vmem:[%s979 + $0x1a0] sm:$0xff]
        %v3864 = vld [vmem:[%s979 + $0x1a8] sm:$0xff]
        %v3865 = vld [vmem:[%s979 + $0x1b0] sm:$0xff]
        %v3866 = vld [vmem:[%s979 + $0x1b8] sm:$0xff]
        %v3867 = vld [vmem:[%s979 + $0x1c0] sm:$0xff]
        %v3868 = vld [vmem:[%s979 + $0x1c8] sm:$0xff]
        %v3869 = vld [vmem:[%s979 + $0x1d0] sm:$0xff]
        %v3870 = vld [vmem:[%s979 + $0x1d8] sm:$0xff]
        %v3871 = vld [vmem:[%s979 + $0x1e0] sm:$0xff]
        %v3872 = vld [vmem:[%s979 + $0x1e8] sm:$0xff]
        %v3873 = vld [vmem:[%s979 + $0x1f0] sm:$0xff]
        %v3874 = vld [vmem:[%s979 + $0x1f8] sm:$0xff]
        %v3875 = vld [vmem:[%s1114] sm:$0xf]
        %v3877 = vlaneseq
        %v3878 = vshrl.u32 %v3877, 7
        %v3879 = vsub.s32 0, %v3878
        %v3880 = vrot.slane %v3875, %v3879
        %v3881 = vlaneseq
        %v3882 = vshrl.u32 %v3881, 7
        %v3883 = vsub.s32 1, %v3882
        %v3884 = vrot.slane %v3875, %v3883
        %v3885 = vlaneseq
        %v3886 = vshrl.u32 %v3885, 7
        %v3887 = vsub.s32 2, %v3886
        %v3888 = vrot.slane %v3875, %v3887
        %v3889 = vlaneseq
        %v3890 = vshrl.u32 %v3889, 7
        %v3891 = vsub.s32 3, %v3890
        %v3892 = vrot.slane %v3875, %v3891
        %v3961 = vunpack.c.l.b16 %v3811
        %v3962 = vunpack.c.h.b16 %v3811
        %v3963 = vunpack.c.l.b16 %v3812
        %v3964 = vunpack.c.h.b16 %v3812
        %v3965 = vunpack.c.l.b16 %v3813
        %v3966 = vunpack.c.h.b16 %v3813
        %v3967 = vunpack.c.l.b16 %v3814
        %v3968 = vunpack.c.h.b16 %v3814
        %v3969 = vunpack.c.l.b16 %v3815
        %v3970 = vunpack.c.h.b16 %v3815
        %v3971 = vunpack.c.l.b16 %v3816
        %v3972 = vunpack.c.h.b16 %v3816
        %v3973 = vunpack.c.l.b16 %v3817
        %v3974 = vunpack.c.h.b16 %v3817
        %v3975 = vunpack.c.l.b16 %v3818
        %v3976 = vunpack.c.h.b16 %v3818
        %v3977 = vunpack.c.l.b16 %v3819
        %v3978 = vunpack.c.h.b16 %v3819
        %v3979 = vunpack.c.l.b16 %v3820
        %v3980 = vunpack.c.h.b16 %v3820
        %v3981 = vunpack.c.l.b16 %v3821
        %v3982 = vunpack.c.h.b16 %v3821
        %v3983 = vunpack.c.l.b16 %v3822
        %v3984 = vunpack.c.h.b16 %v3822
        %v3985 = vunpack.c.l.b16 %v3823
        %v3986 = vunpack.c.h.b16 %v3823
        %v3987 = vunpack.c.l.b16 %v3824
        %v3988 = vunpack.c.h.b16 %v3824
        %v3989 = vunpack.c.l.b16 %v3825
        %v3990 = vunpack.c.h.b16 %v3825
        %v3991 = vunpack.c.l.b16 %v3826
        %v3992 = vunpack.c.h.b16 %v3826
        %v3993 = vunpack.c.l.b16 %v3827
        %v3994 = vunpack.c.h.b16 %v3827
        %v3995 = vunpack.c.l.b16 %v3828
        %v3996 = vunpack.c.h.b16 %v3828
        %v3997 = vunpack.c.l.b16 %v3829
        %v3998 = vunpack.c.h.b16 %v3829
        %v3999 = vunpack.c.l.b16 %v3830
        %v4000 = vunpack.c.h.b16 %v3830
        %v4001 = vunpack.c.l.b16 %v3831
        %v4002 = vunpack.c.h.b16 %v3831
        %v4003 = vunpack.c.l.b16 %v3832
        %v4004 = vunpack.c.h.b16 %v3832
        %v4005 = vunpack.c.l.b16 %v3833
        %v4006 = vunpack.c.h.b16 %v3833
        %v4007 = vunpack.c.l.b16 %v3834
        %v4008 = vunpack.c.h.b16 %v3834
        %v4009 = vunpack.c.l.b16 %v3835
        %v4010 = vunpack.c.h.b16 %v3835
        %v4011 = vunpack.c.l.b16 %v3836
        %v4012 = vunpack.c.h.b16 %v3836
        %v4013 = vunpack.c.l.b16 %v3837
        %v4014 = vunpack.c.h.b16 %v3837
        %v4015 = vunpack.c.l.b16 %v3838
        %v4016 = vunpack.c.h.b16 %v3838
        %v4017 = vunpack.c.l.b16 %v3839
        %v4018 = vunpack.c.h.b16 %v3839
        %v4019 = vunpack.c.l.b16 %v3840
        %v4020 = vunpack.c.h.b16 %v3840
        %v4021 = vunpack.c.l.b16 %v3841
        %v4022 = vunpack.c.h.b16 %v3841
        %v4023 = vunpack.c.l.b16 %v3842
        %v4024 = vunpack.c.h.b16 %v3842
        %v4025 = vunpack.c.l.b16 %v3843
        %v4026 = vunpack.c.h.b16 %v3843
        %v4027 = vunpack.c.l.b16 %v3844
        %v4028 = vunpack.c.h.b16 %v3844
        %v4029 = vunpack.c.l.b16 %v3845
        %v4030 = vunpack.c.h.b16 %v3845
        %v4031 = vunpack.c.l.b16 %v3846
        %v4032 = vunpack.c.h.b16 %v3846
        %v4033 = vunpack.c.l.b16 %v3847
        %v4034 = vunpack.c.h.b16 %v3847
        %v4035 = vunpack.c.l.b16 %v3848
        %v4036 = vunpack.c.h.b16 %v3848
        %v4037 = vunpack.c.l.b16 %v3849
        %v4038 = vunpack.c.h.b16 %v3849
        %v4039 = vunpack.c.l.b16 %v3850
        %v4040 = vunpack.c.h.b16 %v3850
        %v4041 = vunpack.c.l.b16 %v3851
        %v4042 = vunpack.c.h.b16 %v3851
        %v4043 = vunpack.c.l.b16 %v3852
        %v4044 = vunpack.c.h.b16 %v3852
        %v4045 = vunpack.c.l.b16 %v3853
        %v4046 = vunpack.c.h.b16 %v3853
        %v4047 = vunpack.c.l.b16 %v3854
        %v4048 = vunpack.c.h.b16 %v3854
        %v4049 = vunpack.c.l.b16 %v3855
        %v4050 = vunpack.c.h.b16 %v3855
        %v4051 = vunpack.c.l.b16 %v3856
        %v4052 = vunpack.c.h.b16 %v3856
        %v4053 = vunpack.c.l.b16 %v3857
        %v4054 = vunpack.c.h.b16 %v3857
        %v4055 = vunpack.c.l.b16 %v3858
        %v4056 = vunpack.c.h.b16 %v3858
        %v4057 = vunpack.c.l.b16 %v3859
        %v4058 = vunpack.c.h.b16 %v3859
        %v4059 = vunpack.c.l.b16 %v3860
        %v4060 = vunpack.c.h.b16 %v3860
        %v4061 = vunpack.c.l.b16 %v3861
        %v4062 = vunpack.c.h.b16 %v3861
        %v4063 = vunpack.c.l.b16 %v3862
        %v4064 = vunpack.c.h.b16 %v3862
        %v4065 = vunpack.c.l.b16 %v3863
        %v4066 = vunpack.c.h.b16 %v3863
        %v4067 = vunpack.c.l.b16 %v3864
        %v4068 = vunpack.c.h.b16 %v3864
        %v4069 = vunpack.c.l.b16 %v3865
        %v4070 = vunpack.c.h.b16 %v3865
        %v4071 = vunpack.c.l.b16 %v3866
        %v4072 = vunpack.c.h.b16 %v3866
        %v4073 = vunpack.c.l.b16 %v3867
        %v4074 = vunpack.c.h.b16 %v3867
        %v4075 = vunpack.c.l.b16 %v3868
        %v4076 = vunpack.c.h.b16 %v3868
        %v4077 = vunpack.c.l.b16 %v3869
        %v4078 = vunpack.c.h.b16 %v3869
        %v4079 = vunpack.c.l.b16 %v3870
        %v4080 = vunpack.c.h.b16 %v3870
        %v4081 = vunpack.c.l.b16 %v3871
        %v4082 = vunpack.c.h.b16 %v3871
        %v4083 = vunpack.c.l.b16 %v3872
        %v4084 = vunpack.c.h.b16 %v3872
        %v4085 = vunpack.c.l.b16 %v3873
        %v4086 = vunpack.c.h.b16 %v3873
        %v4087 = vunpack.c.l.b16 %v3874
        %v4088 = vunpack.c.h.b16 %v3874
        %v4089 = vpack.c.b16 %v3965, %v3961
        %v4090 = vpack.c.b16 %v3966, %v3962
        %v4091 = vpack.c.b16 %v3967, %v3963
        %v4092 = vpack.c.b16 %v3968, %v3964
        %v4093 = vpack.c.b16 %v3973, %v3969
        %v4094 = vpack.c.b16 %v3974, %v3970
        %v4095 = vpack.c.b16 %v3975, %v3971
        %v4096 = vpack.c.b16 %v3976, %v3972
        %v4097 = vpack.c.b16 %v3981, %v3977
        %v4098 = vpack.c.b16 %v3982, %v3978
        %v4099 = vpack.c.b16 %v3983, %v3979
        %v4100 = vpack.c.b16 %v3984, %v3980
        %v4101 = vpack.c.b16 %v3989, %v3985
        %v4102 = vpack.c.b16 %v3990, %v3986
        %v4103 = vpack.c.b16 %v3991, %v3987
        %v4104 = vpack.c.b16 %v3992, %v3988
        %v4105 = vpack.c.b16 %v3997, %v3993
        %v4106 = vpack.c.b16 %v3998, %v3994
        %v4107 = vpack.c.b16 %v3999, %v3995
        %v4108 = vpack.c.b16 %v4000, %v3996
        %v4109 = vpack.c.b16 %v4005, %v4001
        %v4110 = vpack.c.b16 %v4006, %v4002
        %v4111 = vpack.c.b16 %v4007, %v4003
        %v4112 = vpack.c.b16 %v4008, %v4004
        %v4113 = vpack.c.b16 %v4013, %v4009
        %v4114 = vpack.c.b16 %v4014, %v4010
        %v4115 = vpack.c.b16 %v4015, %v4011
        %v4116 = vpack.c.b16 %v4016, %v4012
        %v4117 = vpack.c.b16 %v4021, %v4017
        %v4118 = vpack.c.b16 %v4022, %v4018
        %v4119 = vpack.c.b16 %v4023, %v4019
        %v4120 = vpack.c.b16 %v4024, %v4020
        %v4121 = vpack.c.b16 %v4029, %v4025
        %v4122 = vpack.c.b16 %v4030, %v4026
        %v4123 = vpack.c.b16 %v4031, %v4027
        %v4124 = vpack.c.b16 %v4032, %v4028
        %v4125 = vpack.c.b16 %v4037, %v4033
        %v4126 = vpack.c.b16 %v4038, %v4034
        %v4127 = vpack.c.b16 %v4039, %v4035
        %v4128 = vpack.c.b16 %v4040, %v4036
        %v4129 = vpack.c.b16 %v4045, %v4041
        %v4130 = vpack.c.b16 %v4046, %v4042
        %v4131 = vpack.c.b16 %v4047, %v4043
        %v4132 = vpack.c.b16 %v4048, %v4044
        %v4133 = vpack.c.b16 %v4053, %v4049
        %v4134 = vpack.c.b16 %v4054, %v4050
        %v4135 = vpack.c.b16 %v4055, %v4051
        %v4136 = vpack.c.b16 %v4056, %v4052
        %v4137 = vpack.c.b16 %v4061, %v4057
        %v4138 = vpack.c.b16 %v4062, %v4058
        %v4139 = vpack.c.b16 %v4063, %v4059
        %v4140 = vpack.c.b16 %v4064, %v4060
        %v4141 = vpack.c.b16 %v4069, %v4065
        %v4142 = vpack.c.b16 %v4070, %v4066
        %v4143 = vpack.c.b16 %v4071, %v4067
        %v4144 = vpack.c.b16 %v4072, %v4068
        %v4145 = vpack.c.b16 %v4077, %v4073
        %v4146 = vpack.c.b16 %v4078, %v4074
        %v4147 = vpack.c.b16 %v4079, %v4075
        %v4148 = vpack.c.b16 %v4080, %v4076
        %v4149 = vpack.c.b16 %v4085, %v4081
        %v4150 = vpack.c.b16 %v4086, %v4082
        %v4151 = vpack.c.b16 %v4087, %v4083
        %v4152 = vpack.c.b16 %v4088, %v4084
        %4217 = vmatprep.subr.bf16.mxu0 %v4118
        %4218 = vmatpush1.bf16.msra.mxu0 %v4117
        %4219 = vmatprep.subr.bf16.mxu0 %v4114
        %4220 = vmatpush1.bf16.msra.mxu0 %v4113
        %4221 = vmatprep.subr.bf16.mxu0 %v4110
        %4222 = vmatpush1.bf16.msra.mxu0 %v4109
        %4223 = vmatprep.subr.bf16.mxu0 %v4106
        %4224 = vmatpush1.bf16.msra.mxu0 %v4105
        %4225 = vmatprep.subr.bf16.mxu0 %v4102
        %4226 = vmatpush1.bf16.msra.mxu0 %v4101
        %4227 = vmatprep.subr.bf16.mxu0 %v4098
        %4228 = vmatpush1.bf16.msra.mxu0 %v4097
        %4229 = vmatprep.subr.bf16.mxu0 %v4094
        %4230 = vmatpush1.bf16.msra.mxu0 %v4093
        %4231 = vmatprep.subr.bf16.mxu0 %v4090
        %4232 = vmatpush1.bf16.msra.mxu0 %v4089
        %4233 = vmatprep.subr.bf16.mxu0 %v4150
        %4234 = vmatpush2.bf16.msra.mxu0 %v4149
        %4235 = vmatprep.subr.bf16.mxu0 %v4146
        %4236 = vmatpush2.bf16.msra.mxu0 %v4145
        %4237 = vmatprep.subr.bf16.mxu0 %v4142
        %4238 = vmatpush2.bf16.msra.mxu0 %v4141
        %4239 = vmatprep.subr.bf16.mxu0 %v4138
        %4240 = vmatpush2.bf16.msra.mxu0 %v4137
        %4241 = vmatprep.subr.bf16.mxu0 %v4134
        %4242 = vmatpush2.bf16.msra.mxu0 %v4133
        %4243 = vmatprep.subr.bf16.mxu0 %v4130
        %4244 = vmatpush2.bf16.msra.mxu0 %v4129
        %4245 = vmatprep.subr.bf16.mxu0 %v4126
        %4246 = vmatpush2.bf16.msra.mxu0 %v4125
        %4247 = vmatprep.subr.bf16.mxu0 %v4122
        %4248 = vmatpush2.bf16.msra.mxu0 %v4121
        %4249 = vmatprep.mubr.bf16.mxu0 %v3804
        %4250 = vmatmul.mubr.bf16.gmra.mxu0 %v3803
        %v4251 = vpop.f32.mrf.mxu0
        %v4252 = vadd.f32 %v3880, %v4251
        %v4253 = vpop.f32.mrf.mxu0
        %v4254 = vadd.f32 %v3884, %v4253
        %v4255 = vpop.f32.mrf.mxu0
        %v4256 = vadd.f32 %v3880, %v4255
        %v4257 = vpop.f32.mrf.mxu0
        %v4258 = vadd.f32 %v3884, %v4257
        %4259 = vmatprep.mubr.bf16.mxu0 %v3806
        %4260 = vmatmul.mubr.bf16.gmra.mxu0 %v3805
        %v4261 = vpop.f32.mrf.mxu0
        %v4262 = vadd.f32 %v3880, %v4261
        %v4263 = vpop.f32.mrf.mxu0
        %v4264 = vadd.f32 %v3884, %v4263
        %v4265 = vpop.f32.mrf.mxu0
        %v4266 = vadd.f32 %v3880, %v4265
        %v4267 = vpop.f32.mrf.mxu0
        %v4268 = vadd.f32 %v3884, %v4267
        %4269 = vmatprep.mubr.bf16.mxu0 %v3808
        %4270 = vmatmul.mubr.bf16.gmra.mxu0 %v3807
        %v4271 = vpop.f32.mrf.mxu0
        %v4272 = vadd.f32 %v3880, %v4271
        %v4273 = vpop.f32.mrf.mxu0
        %v4274 = vadd.f32 %v3884, %v4273
        %v4275 = vpop.f32.mrf.mxu0
        %v4276 = vadd.f32 %v3880, %v4275
        %v4277 = vpop.f32.mrf.mxu0
        %v4278 = vadd.f32 %v3884, %v4277
        %4279 = vmatprep.mubr.bf16.mxu0 %v3810
        %4280 = vmatmul.mubr.bf16.gmra.mxu0 %v3809
        %v4281 = vpop.f32.mrf.mxu0
        %v4282 = vadd.f32 %v3880, %v4281
        %v4283 = vpop.f32.mrf.mxu0
        %v4284 = vadd.f32 %v3884, %v4283
        %v4285 = vpop.f32.mrf.mxu0
        %v4286 = vadd.f32 %v3880, %v4285
        %v4287 = vpop.f32.mrf.mxu0
        %v4288 = vadd.f32 %v3884, %v4287
        %4289 = vdwg.mxu0
        %4290 = vmatprep.subr.bf16.mxu0 %v4120
        %4291 = vmatpush1.bf16.msra.mxu0 %v4119
        %4292 = vmatprep.subr.bf16.mxu0 %v4116
        %4293 = vmatpush1.bf16.msra.mxu0 %v4115
        %4294 = vmatprep.subr.bf16.mxu0 %v4112
        %4295 = vmatpush1.bf16.msra.mxu0 %v4111
        %4296 = vmatprep.subr.bf16.mxu0 %v4108
        %4297 = vmatpush1.bf16.msra.mxu0 %v4107
        %4298 = vmatprep.subr.bf16.mxu0 %v4104
        %4299 = vmatpush1.bf16.msra.mxu0 %v4103
        %4300 = vmatprep.subr.bf16.mxu0 %v4100
        %4301 = vmatpush1.bf16.msra.mxu0 %v4099
        %4302 = vmatprep.subr.bf16.mxu0 %v4096
        %4303 = vmatpush1.bf16.msra.mxu0 %v4095
        %4304 = vmatprep.subr.bf16.mxu0 %v4092
        %4305 = vmatpush1.bf16.msra.mxu0 %v4091
        %4306 = vmatprep.subr.bf16.mxu0 %v4152
        %4307 = vmatpush2.bf16.msra.mxu0 %v4151
        %4308 = vmatprep.subr.bf16.mxu0 %v4148
        %4309 = vmatpush2.bf16.msra.mxu0 %v4147
        %4310 = vmatprep.subr.bf16.mxu0 %v4144
        %4311 = vmatpush2.bf16.msra.mxu0 %v4143
        %4312 = vmatprep.subr.bf16.mxu0 %v4140
        %4313 = vmatpush2.bf16.msra.mxu0 %v4139
        %4314 = vmatprep.subr.bf16.mxu0 %v4136
        %4315 = vmatpush2.bf16.msra.mxu0 %v4135
        %4316 = vmatprep.subr.bf16.mxu0 %v4132
        %4317 = vmatpush2.bf16.msra.mxu0 %v4131
        %4318 = vmatprep.subr.bf16.mxu0 %v4128
        %4319 = vmatpush2.bf16.msra.mxu0 %v4127
        %4320 = vmatprep.subr.bf16.mxu0 %v4124
        %4321 = vmatpush2.bf16.msra.mxu0 %v4123
        %4322 = vmatprep.mubr.bf16.mxu0 %v3804
        %4323 = vmatmul.mubr.bf16.gmra.mxu0 %v3803
        %v4324 = vpop.f32.mrf.mxu0
        %v4325 = vadd.f32 %v3888, %v4324
        %v4326 = vpop.f32.mrf.mxu0
        %v4327 = vadd.f32 %v3892, %v4326
        %v4328 = vpop.f32.mrf.mxu0
        %v4329 = vadd.f32 %v3888, %v4328
        %v4330 = vpop.f32.mrf.mxu0
        %v4331 = vadd.f32 %v3892, %v4330
        %4332 = vmatprep.mubr.bf16.mxu0 %v3806
        %4333 = vmatmul.mubr.bf16.gmra.mxu0 %v3805
        %v4334 = vpop.f32.mrf.mxu0
        %v4335 = vadd.f32 %v3888, %v4334
        %v4336 = vpop.f32.mrf.mxu0
        %v4337 = vadd.f32 %v3892, %v4336
        %v4338 = vpop.f32.mrf.mxu0
        %v4339 = vadd.f32 %v3888, %v4338
        %v4340 = vpop.f32.mrf.mxu0
        %v4341 = vadd.f32 %v3892, %v4340
        %4342 = vmatprep.mubr.bf16.mxu0 %v3808
        %4343 = vmatmul.mubr.bf16.gmra.mxu0 %v3807
        %v4344 = vpop.f32.mrf.mxu0
        %v4345 = vadd.f32 %v3888, %v4344
        %v4346 = vpop.f32.mrf.mxu0
        %v4347 = vadd.f32 %v3892, %v4346
        %v4348 = vpop.f32.mrf.mxu0
        %v4349 = vadd.f32 %v3888, %v4348
        %v4350 = vpop.f32.mrf.mxu0
        %v4351 = vadd.f32 %v3892, %v4350
        %4352 = vmatprep.mubr.bf16.mxu0 %v3810
        %4353 = vmatmul.mubr.bf16.gmra.mxu0 %v3809
        %v4354 = vpop.f32.mrf.mxu0
        %v4355 = vadd.f32 %v3888, %v4354
        %v4356 = vpop.f32.mrf.mxu0
        %v4357 = vadd.f32 %v3892, %v4356
        %v4358 = vpop.f32.mrf.mxu0
        %v4359 = vadd.f32 %v3888, %v4358
        %v4360 = vpop.f32.mrf.mxu0
        %v4361 = vadd.f32 %v3892, %v4360
        %4362 = vdwg.mxu0
        %v4363 = vmul.f32 %v4252, 0.5
        %v4364 = vmul.f32 %v4254, 0.5
        %v4365 = vmul.f32 %v4325, 0.5
        %v4366 = vmul.f32 %v4327, 0.5
        %v4367 = vmul.f32 %v4256, 0.5
        %v4368 = vmul.f32 %v4258, 0.5
        %v4369 = vmul.f32 %v4329, 0.5
        %v4370 = vmul.f32 %v4331, 0.5
        %v4371 = vmul.f32 %v4262, 0.5
        %v4372 = vmul.f32 %v4264, 0.5
        %v4373 = vmul.f32 %v4335, 0.5
        %v4374 = vmul.f32 %v4337, 0.5
        %v4375 = vmul.f32 %v4266, 0.5
        %v4376 = vmul.f32 %v4268, 0.5
        %v4377 = vmul.f32 %v4339, 0.5
        %v4378 = vmul.f32 %v4341, 0.5
        %v4379 = vmul.f32 %v4272, 0.5
        %v4380 = vmul.f32 %v4274, 0.5
        %v4381 = vmul.f32 %v4345, 0.5
        %v4382 = vmul.f32 %v4347, 0.5
        %v4383 = vmul.f32 %v4276, 0.5
        %v4384 = vmul.f32 %v4278, 0.5
        %v4385 = vmul.f32 %v4349, 0.5
        %v4386 = vmul.f32 %v4351, 0.5
        %v4387 = vmul.f32 %v4282, 0.5
        %v4388 = vmul.f32 %v4284, 0.5
        %v4389 = vmul.f32 %v4355, 0.5
        %v4390 = vmul.f32 %v4357, 0.5
        %v4391 = vmul.f32 %v4286, 0.5
        %v4392 = vmul.f32 %v4288, 0.5
        %v4393 = vmul.f32 %v4359, 0.5
        %v4394 = vmul.f32 %v4361, 0.5
        %v4395 = vrcp.pop 1.4142135
        %v4396 = vmul.f32 %v4252, %v4395
        %v4397 = vmul.f32 %v4254, %v4395
        %v4398 = vmul.f32 %v4325, %v4395
        %v4399 = vmul.f32 %v4327, %v4395
        %v4400 = vmul.f32 %v4256, %v4395
        %v4401 = vmul.f32 %v4258, %v4395
        %v4402 = vmul.f32 %v4329, %v4395
        %v4403 = vmul.f32 %v4331, %v4395
        %v4404 = vmul.f32 %v4262, %v4395
        %v4405 = vmul.f32 %v4264, %v4395
        %v4406 = vmul.f32 %v4335, %v4395
        %v4407 = vmul.f32 %v4337, %v4395
        %v4408 = vmul.f32 %v4266, %v4395
        %v4409 = vmul.f32 %v4268, %v4395
        %v4410 = vmul.f32 %v4339, %v4395
        %v4411 = vmul.f32 %v4341, %v4395
        %v4412 = vmul.f32 %v4272, %v4395
        %v4413 = vmul.f32 %v4274, %v4395
        %v4414 = vmul.f32 %v4345, %v4395
        %v4415 = vmul.f32 %v4347, %v4395
        %v4416 = vmul.f32 %v4276, %v4395
        %v4417 = vmul.f32 %v4278, %v4395
        %v4418 = vmul.f32 %v4349, %v4395
        %v4419 = vmul.f32 %v4351, %v4395
        %v4420 = vmul.f32 %v4282, %v4395
        %v4421 = vmul.f32 %v4284, %v4395
        %v4422 = vmul.f32 %v4355, %v4395
        %v4423 = vmul.f32 %v4357, %v4395
        %v4424 = vmul.f32 %v4286, %v4395
        %v4425 = vmul.f32 %v4288, %v4395
        %v4426 = vmul.f32 %v4359, %v4395
        %v4427 = vmul.f32 %v4361, %v4395
        %v4428 = verf.f32.pop %v4396
        %v4429 = verf.f32.pop %v4397
        %v4430 = verf.f32.pop %v4398
        %v4431 = verf.f32.pop %v4399
        %v4432 = verf.f32.pop %v4400
        %v4433 = verf.f32.pop %v4401
        %v4434 = verf.f32.pop %v4402
        %v4435 = verf.f32.pop %v4403
        %v4436 = verf.f32.pop %v4404
        %v4437 = verf.f32.pop %v4405
        %v4438 = verf.f32.pop %v4406
        %v4439 = verf.f32.pop %v4407
        %v4440 = verf.f32.pop %v4408
        %v4441 = verf.f32.pop %v4409
        %v4442 = verf.f32.pop %v4410
        %v4443 = verf.f32.pop %v4411
        %v4444 = verf.f32.pop %v4412
        %v4445 = verf.f32.pop %v4413
        %v4446 = verf.f32.pop %v4414
        %v4447 = verf.f32.pop %v4415
        %v4448 = verf.f32.pop %v4416
        %v4449 = verf.f32.pop %v4417
        %v4450 = verf.f32.pop %v4418
        %v4451 = verf.f32.pop %v4419
        %v4452 = verf.f32.pop %v4420
        %v4453 = verf.f32.pop %v4421
        %v4454 = verf.f32.pop %v4422
        %v4455 = verf.f32.pop %v4423
        %v4456 = verf.f32.pop %v4424
        %v4457 = verf.f32.pop %v4425
        %v4458 = verf.f32.pop %v4426
        %v4459 = verf.f32.pop %v4427
        %v4460 = vadd.f32 %v4428, 1.0
        %v4461 = vadd.f32 %v4429, 1.0
        %v4462 = vadd.f32 %v4430, 1.0
        %v4463 = vadd.f32 %v4431, 1.0
        %v4464 = vadd.f32 %v4432, 1.0
        %v4465 = vadd.f32 %v4433, 1.0
        %v4466 = vadd.f32 %v4434, 1.0
        %v4467 = vadd.f32 %v4435, 1.0
        %v4468 = vadd.f32 %v4436, 1.0
        %v4469 = vadd.f32 %v4437, 1.0
        %v4470 = vadd.f32 %v4438, 1.0
        %v4471 = vadd.f32 %v4439, 1.0
        %v4472 = vadd.f32 %v4440, 1.0
        %v4473 = vadd.f32 %v4441, 1.0
        %v4474 = vadd.f32 %v4442, 1.0
        %v4475 = vadd.f32 %v4443, 1.0
        %v4476 = vadd.f32 %v4444, 1.0
        %v4477 = vadd.f32 %v4445, 1.0
        %v4478 = vadd.f32 %v4446, 1.0
        %v4479 = vadd.f32 %v4447, 1.0
        %v4480 = vadd.f32 %v4448, 1.0
        %v4481 = vadd.f32 %v4449, 1.0
        %v4482 = vadd.f32 %v4450, 1.0
        %v4483 = vadd.f32 %v4451, 1.0
        %v4484 = vadd.f32 %v4452, 1.0
        %v4485 = vadd.f32 %v4453, 1.0
        %v4486 = vadd.f32 %v4454, 1.0
        %v4487 = vadd.f32 %v4455, 1.0
        %v4488 = vadd.f32 %v4456, 1.0
        %v4489 = vadd.f32 %v4457, 1.0
        %v4490 = vadd.f32 %v4458, 1.0
        %v4491 = vadd.f32 %v4459, 1.0
        %v4492 = vmul.f32 %v4363, %v4460
        %v4493 = vmul.f32 %v4364, %v4461
        %v4494 = vmul.f32 %v4365, %v4462
        %v4495 = vmul.f32 %v4366, %v4463
        %v4496 = vmul.f32 %v4367, %v4464
        %v4497 = vmul.f32 %v4368, %v4465
        %v4498 = vmul.f32 %v4369, %v4466
        %v4499 = vmul.f32 %v4370, %v4467
        %v4500 = vmul.f32 %v4371, %v4468
        %v4501 = vmul.f32 %v4372, %v4469
        %v4502 = vmul.f32 %v4373, %v4470
        %v4503 = vmul.f32 %v4374, %v4471
        %v4504 = vmul.f32 %v4375, %v4472
        %v4505 = vmul.f32 %v4376, %v4473
        %v4506 = vmul.f32 %v4377, %v4474
        %v4507 = vmul.f32 %v4378, %v4475
        %v4508 = vmul.f32 %v4379, %v4476
        %v4509 = vmul.f32 %v4380, %v4477
        %v4510 = vmul.f32 %v4381, %v4478
        %v4511 = vmul.f32 %v4382, %v4479
        %v4512 = vmul.f32 %v4383, %v4480
        %v4513 = vmul.f32 %v4384, %v4481
        %v4514 = vmul.f32 %v4385, %v4482
        %v4515 = vmul.f32 %v4386, %v4483
        %v4516 = vmul.f32 %v4387, %v4484
        %v4517 = vmul.f32 %v4388, %v4485
        %v4518 = vmul.f32 %v4389, %v4486
        %v4519 = vmul.f32 %v4390, %v4487
        %v4520 = vmul.f32 %v4391, %v4488
        %v4521 = vmul.f32 %v4392, %v4489
        %v4522 = vmul.f32 %v4393, %v4490
        %v4523 = vmul.f32 %v4394, %v4491
        %v4524 = vpack.c.bf16 %v4496, %v4492
        %v4525 = vpack.c.bf16 %v4497, %v4493
        %v4526 = vpack.c.bf16 %v4498, %v4494
        %v4527 = vpack.c.bf16 %v4499, %v4495
        %v4528 = vpack.c.bf16 %v4504, %v4500
        %v4529 = vpack.c.bf16 %v4505, %v4501
        %v4530 = vpack.c.bf16 %v4506, %v4502
        %v4531 = vpack.c.bf16 %v4507, %v4503
        %v4532 = vpack.c.bf16 %v4512, %v4508
        %v4533 = vpack.c.bf16 %v4513, %v4509
        %v4534 = vpack.c.bf16 %v4514, %v4510
        %v4535 = vpack.c.bf16 %v4515, %v4511
        %v4536 = vpack.c.bf16 %v4520, %v4516
        %v4537 = vpack.c.bf16 %v4521, %v4517
        %v4538 = vpack.c.bf16 %v4522, %v4518
        %v4539 = vpack.c.bf16 %v4523, %v4519
        %v4540 = vld [vmem:[%s988] sm:$0xff]
        %v4541 = vld [vmem:[%s988 + $0x8] sm:$0xff]
        %v4542 = vld [vmem:[%s988 + $0x10] sm:$0xff]
        %v4543 = vld [vmem:[%s988 + $0x18] sm:$0xff]
        %v4544 = vld [vmem:[%s988 + $0x20] sm:$0xff]
        %v4545 = vld [vmem:[%s988 + $0x28] sm:$0xff]
        %v4546 = vld [vmem:[%s988 + $0x30] sm:$0xff]
        %v4547 = vld [vmem:[%s988 + $0x38] sm:$0xff]
        %v4548 = vld [vmem:[%s988 + $0x40] sm:$0xff]
        %v4549 = vld [vmem:[%s988 + $0x48] sm:$0xff]
        %v4550 = vld [vmem:[%s988 + $0x50] sm:$0xff]
        %v4551 = vld [vmem:[%s988 + $0x58] sm:$0xff]
        %v4552 = vld [vmem:[%s988 + $0x60] sm:$0xff]
        %v4553 = vld [vmem:[%s988 + $0x68] sm:$0xff]
        %v4554 = vld [vmem:[%s988 + $0x70] sm:$0xff]
        %v4555 = vld [vmem:[%s988 + $0x78] sm:$0xff]
        %v4556 = vld [vmem:[%s988 + $0x80] sm:$0xff]
        %v4557 = vld [vmem:[%s988 + $0x88] sm:$0xff]
        %v4558 = vld [vmem:[%s988 + $0x90] sm:$0xff]
        %v4559 = vld [vmem:[%s988 + $0x98] sm:$0xff]
        %v4560 = vld [vmem:[%s988 + $0xa0] sm:$0xff]
        %v4561 = vld [vmem:[%s988 + $0xa8] sm:$0xff]
        %v4562 = vld [vmem:[%s988 + $0xb0] sm:$0xff]
        %v4563 = vld [vmem:[%s988 + $0xb8] sm:$0xff]
        %v4564 = vld [vmem:[%s988 + $0xc0] sm:$0xff]
        %v4565 = vld [vmem:[%s988 + $0xc8] sm:$0xff]
        %v4566 = vld [vmem:[%s988 + $0xd0] sm:$0xff]
        %v4567 = vld [vmem:[%s988 + $0xd8] sm:$0xff]
        %v4568 = vld [vmem:[%s988 + $0xe0] sm:$0xff]
        %v4569 = vld [vmem:[%s988 + $0xe8] sm:$0xff]
        %v4570 = vld [vmem:[%s988 + $0xf0] sm:$0xff]
        %v4571 = vld [vmem:[%s988 + $0xf8] sm:$0xff]
        %v4572 = vld [vmem:[%s988 + $0x100] sm:$0xff]
        %v4573 = vld [vmem:[%s988 + $0x108] sm:$0xff]
        %v4574 = vld [vmem:[%s988 + $0x110] sm:$0xff]
        %v4575 = vld [vmem:[%s988 + $0x118] sm:$0xff]
        %v4576 = vld [vmem:[%s988 + $0x120] sm:$0xff]
        %v4577 = vld [vmem:[%s988 + $0x128] sm:$0xff]
        %v4578 = vld [vmem:[%s988 + $0x130] sm:$0xff]
        %v4579 = vld [vmem:[%s988 + $0x138] sm:$0xff]
        %v4580 = vld [vmem:[%s988 + $0x140] sm:$0xff]
        %v4581 = vld [vmem:[%s988 + $0x148] sm:$0xff]
        %v4582 = vld [vmem:[%s988 + $0x150] sm:$0xff]
        %v4583 = vld [vmem:[%s988 + $0x158] sm:$0xff]
        %v4584 = vld [vmem:[%s988 + $0x160] sm:$0xff]
        %v4585 = vld [vmem:[%s988 + $0x168] sm:$0xff]
        %v4586 = vld [vmem:[%s988 + $0x170] sm:$0xff]
        %v4587 = vld [vmem:[%s988 + $0x178] sm:$0xff]
        %v4588 = vld [vmem:[%s988 + $0x180] sm:$0xff]
        %v4589 = vld [vmem:[%s988 + $0x188] sm:$0xff]
        %v4590 = vld [vmem:[%s988 + $0x190] sm:$0xff]
        %v4591 = vld [vmem:[%s988 + $0x198] sm:$0xff]
        %v4592 = vld [vmem:[%s988 + $0x1a0] sm:$0xff]
        %v4593 = vld [vmem:[%s988 + $0x1a8] sm:$0xff]
        %v4594 = vld [vmem:[%s988 + $0x1b0] sm:$0xff]
        %v4595 = vld [vmem:[%s988 + $0x1b8] sm:$0xff]
        %v4596 = vld [vmem:[%s988 + $0x1c0] sm:$0xff]
        %v4597 = vld [vmem:[%s988 + $0x1c8] sm:$0xff]
        %v4598 = vld [vmem:[%s988 + $0x1d0] sm:$0xff]
        %v4599 = vld [vmem:[%s988 + $0x1d8] sm:$0xff]
        %v4600 = vld [vmem:[%s988 + $0x1e0] sm:$0xff]
        %v4601 = vld [vmem:[%s988 + $0x1e8] sm:$0xff]
        %v4602 = vld [vmem:[%s988 + $0x1f0] sm:$0xff]
        %v4603 = vld [vmem:[%s988 + $0x1f8] sm:$0xff]
        %v4668 = vunpack.c.l.b16 %v4540
        %v4669 = vunpack.c.h.b16 %v4540
        %v4670 = vunpack.c.l.b16 %v4541
        %v4671 = vunpack.c.h.b16 %v4541
        %v4672 = vunpack.c.l.b16 %v4542
        %v4673 = vunpack.c.h.b16 %v4542
        %v4674 = vunpack.c.l.b16 %v4543
        %v4675 = vunpack.c.h.b16 %v4543
        %v4676 = vunpack.c.l.b16 %v4544
        %v4677 = vunpack.c.h.b16 %v4544
        %v4678 = vunpack.c.l.b16 %v4545
        %v4679 = vunpack.c.h.b16 %v4545
        %v4680 = vunpack.c.l.b16 %v4546
        %v4681 = vunpack.c.h.b16 %v4546
        %v4682 = vunpack.c.l.b16 %v4547
        %v4683 = vunpack.c.h.b16 %v4547
        %v4684 = vunpack.c.l.b16 %v4548
        %v4685 = vunpack.c.h.b16 %v4548
        %v4686 = vunpack.c.l.b16 %v4549
        %v4687 = vunpack.c.h.b16 %v4549
        %v4688 = vunpack.c.l.b16 %v4550
        %v4689 = vunpack.c.h.b16 %v4550
        %v4690 = vunpack.c.l.b16 %v4551
        %v4691 = vunpack.c.h.b16 %v4551
        %v4692 = vunpack.c.l.b16 %v4552
        %v4693 = vunpack.c.h.b16 %v4552
        %v4694 = vunpack.c.l.b16 %v4553
        %v4695 = vunpack.c.h.b16 %v4553
        %v4696 = vunpack.c.l.b16 %v4554
        %v4697 = vunpack.c.h.b16 %v4554
        %v4698 = vunpack.c.l.b16 %v4555
        %v4699 = vunpack.c.h.b16 %v4555
        %v4700 = vunpack.c.l.b16 %v4556
        %v4701 = vunpack.c.h.b16 %v4556
        %v4702 = vunpack.c.l.b16 %v4557
        %v4703 = vunpack.c.h.b16 %v4557
        %v4704 = vunpack.c.l.b16 %v4558
        %v4705 = vunpack.c.h.b16 %v4558
        %v4706 = vunpack.c.l.b16 %v4559
        %v4707 = vunpack.c.h.b16 %v4559
        %v4708 = vunpack.c.l.b16 %v4560
        %v4709 = vunpack.c.h.b16 %v4560
        %v4710 = vunpack.c.l.b16 %v4561
        %v4711 = vunpack.c.h.b16 %v4561
        %v4712 = vunpack.c.l.b16 %v4562
        %v4713 = vunpack.c.h.b16 %v4562
        %v4714 = vunpack.c.l.b16 %v4563
        %v4715 = vunpack.c.h.b16 %v4563
        %v4716 = vunpack.c.l.b16 %v4564
        %v4717 = vunpack.c.h.b16 %v4564
        %v4718 = vunpack.c.l.b16 %v4565
        %v4719 = vunpack.c.h.b16 %v4565
        %v4720 = vunpack.c.l.b16 %v4566
        %v4721 = vunpack.c.h.b16 %v4566
        %v4722 = vunpack.c.l.b16 %v4567
        %v4723 = vunpack.c.h.b16 %v4567
        %v4724 = vunpack.c.l.b16 %v4568
        %v4725 = vunpack.c.h.b16 %v4568
        %v4726 = vunpack.c.l.b16 %v4569
        %v4727 = vunpack.c.h.b16 %v4569
        %v4728 = vunpack.c.l.b16 %v4570
        %v4729 = vunpack.c.h.b16 %v4570
        %v4730 = vunpack.c.l.b16 %v4571
        %v4731 = vunpack.c.h.b16 %v4571
        %v4732 = vunpack.c.l.b16 %v4572
        %v4733 = vunpack.c.h.b16 %v4572
        %v4734 = vunpack.c.l.b16 %v4573
        %v4735 = vunpack.c.h.b16 %v4573
        %v4736 = vunpack.c.l.b16 %v4574
        %v4737 = vunpack.c.h.b16 %v4574
        %v4738 = vunpack.c.l.b16 %v4575
        %v4739 = vunpack.c.h.b16 %v4575
        %v4740 = vunpack.c.l.b16 %v4576
        %v4741 = vunpack.c.h.b16 %v4576
        %v4742 = vunpack.c.l.b16 %v4577
        %v4743 = vunpack.c.h.b16 %v4577
        %v4744 = vunpack.c.l.b16 %v4578
        %v4745 = vunpack.c.h.b16 %v4578
        %v4746 = vunpack.c.l.b16 %v4579
        %v4747 = vunpack.c.h.b16 %v4579
        %v4748 = vunpack.c.l.b16 %v4580
        %v4749 = vunpack.c.h.b16 %v4580
        %v4750 = vunpack.c.l.b16 %v4581
        %v4751 = vunpack.c.h.b16 %v4581
        %v4752 = vunpack.c.l.b16 %v4582
        %v4753 = vunpack.c.h.b16 %v4582
        %v4754 = vunpack.c.l.b16 %v4583
        %v4755 = vunpack.c.h.b16 %v4583
        %v4756 = vunpack.c.l.b16 %v4584
        %v4757 = vunpack.c.h.b16 %v4584
        %v4758 = vunpack.c.l.b16 %v4585
        %v4759 = vunpack.c.h.b16 %v4585
        %v4760 = vunpack.c.l.b16 %v4586
        %v4761 = vunpack.c.h.b16 %v4586
        %v4762 = vunpack.c.l.b16 %v4587
        %v4763 = vunpack.c.h.b16 %v4587
        %v4764 = vunpack.c.l.b16 %v4588
        %v4765 = vunpack.c.h.b16 %v4588
        %v4766 = vunpack.c.l.b16 %v4589
        %v4767 = vunpack.c.h.b16 %v4589
        %v4768 = vunpack.c.l.b16 %v4590
        %v4769 = vunpack.c.h.b16 %v4590
        %v4770 = vunpack.c.l.b16 %v4591
        %v4771 = vunpack.c.h.b16 %v4591
        %v4772 = vunpack.c.l.b16 %v4592
        %v4773 = vunpack.c.h.b16 %v4592
        %v4774 = vunpack.c.l.b16 %v4593
        %v4775 = vunpack.c.h.b16 %v4593
        %v4776 = vunpack.c.l.b16 %v4594
        %v4777 = vunpack.c.h.b16 %v4594
        %v4778 = vunpack.c.l.b16 %v4595
        %v4779 = vunpack.c.h.b16 %v4595
        %v4780 = vunpack.c.l.b16 %v4596
        %v4781 = vunpack.c.h.b16 %v4596
        %v4782 = vunpack.c.l.b16 %v4597
        %v4783 = vunpack.c.h.b16 %v4597
        %v4784 = vunpack.c.l.b16 %v4598
        %v4785 = vunpack.c.h.b16 %v4598
        %v4786 = vunpack.c.l.b16 %v4599
        %v4787 = vunpack.c.h.b16 %v4599
        %v4788 = vunpack.c.l.b16 %v4600
        %v4789 = vunpack.c.h.b16 %v4600
        %v4790 = vunpack.c.l.b16 %v4601
        %v4791 = vunpack.c.h.b16 %v4601
        %v4792 = vunpack.c.l.b16 %v4602
        %v4793 = vunpack.c.h.b16 %v4602
        %v4794 = vunpack.c.l.b16 %v4603
        %v4795 = vunpack.c.h.b16 %v4603
        %v4796 = vpack.c.b16 %v4670, %v4668
        %v4797 = vpack.c.b16 %v4671, %v4669
        %v4798 = vpack.c.b16 %v4674, %v4672
        %v4799 = vpack.c.b16 %v4675, %v4673
        %v4800 = vpack.c.b16 %v4678, %v4676
        %v4801 = vpack.c.b16 %v4679, %v4677
        %v4802 = vpack.c.b16 %v4682, %v4680
        %v4803 = vpack.c.b16 %v4683, %v4681
        %v4804 = vpack.c.b16 %v4686, %v4684
        %v4805 = vpack.c.b16 %v4687, %v4685
        %v4806 = vpack.c.b16 %v4690, %v4688
        %v4807 = vpack.c.b16 %v4691, %v4689
        %v4808 = vpack.c.b16 %v4694, %v4692
        %v4809 = vpack.c.b16 %v4695, %v4693
        %v4810 = vpack.c.b16 %v4698, %v4696
        %v4811 = vpack.c.b16 %v4699, %v4697
        %v4812 = vpack.c.b16 %v4702, %v4700
        %v4813 = vpack.c.b16 %v4703, %v4701
        %v4814 = vpack.c.b16 %v4706, %v4704
        %v4815 = vpack.c.b16 %v4707, %v4705
        %v4816 = vpack.c.b16 %v4710, %v4708
        %v4817 = vpack.c.b16 %v4711, %v4709
        %v4818 = vpack.c.b16 %v4714, %v4712
        %v4819 = vpack.c.b16 %v4715, %v4713
        %v4820 = vpack.c.b16 %v4718, %v4716
        %v4821 = vpack.c.b16 %v4719, %v4717
        %v4822 = vpack.c.b16 %v4722, %v4720
        %v4823 = vpack.c.b16 %v4723, %v4721
        %v4824 = vpack.c.b16 %v4726, %v4724
        %v4825 = vpack.c.b16 %v4727, %v4725
        %v4826 = vpack.c.b16 %v4730, %v4728
        %v4827 = vpack.c.b16 %v4731, %v4729
        %v4828 = vpack.c.b16 %v4734, %v4732
        %v4829 = vpack.c.b16 %v4735, %v4733
        %v4830 = vpack.c.b16 %v4738, %v4736
        %v4831 = vpack.c.b16 %v4739, %v4737
        %v4832 = vpack.c.b16 %v4742, %v4740
        %v4833 = vpack.c.b16 %v4743, %v4741
        %v4834 = vpack.c.b16 %v4746, %v4744
        %v4835 = vpack.c.b16 %v4747, %v4745
        %v4836 = vpack.c.b16 %v4750, %v4748
        %v4837 = vpack.c.b16 %v4751, %v4749
        %v4838 = vpack.c.b16 %v4754, %v4752
        %v4839 = vpack.c.b16 %v4755, %v4753
        %v4840 = vpack.c.b16 %v4758, %v4756
        %v4841 = vpack.c.b16 %v4759, %v4757
        %v4842 = vpack.c.b16 %v4762, %v4760
        %v4843 = vpack.c.b16 %v4763, %v4761
        %v4844 = vpack.c.b16 %v4766, %v4764
        %v4845 = vpack.c.b16 %v4767, %v4765
        %v4846 = vpack.c.b16 %v4770, %v4768
        %v4847 = vpack.c.b16 %v4771, %v4769
        %v4848 = vpack.c.b16 %v4774, %v4772
        %v4849 = vpack.c.b16 %v4775, %v4773
        %v4850 = vpack.c.b16 %v4778, %v4776
        %v4851 = vpack.c.b16 %v4779, %v4777
        %v4852 = vpack.c.b16 %v4782, %v4780
        %v4853 = vpack.c.b16 %v4783, %v4781
        %v4854 = vpack.c.b16 %v4786, %v4784
        %v4855 = vpack.c.b16 %v4787, %v4785
        %v4856 = vpack.c.b16 %v4790, %v4788
        %v4857 = vpack.c.b16 %v4791, %v4789
        %v4858 = vpack.c.b16 %v4794, %v4792
        %v4859 = vpack.c.b16 %v4795, %v4793
        %4924 = vmatprep.subr.bf16.mxu0 %v4811
        %4925 = vmatpush1.bf16.msra.mxu0 %v4810
        %4926 = vmatprep.subr.bf16.mxu0 %v4809
        %4927 = vmatpush1.bf16.msra.mxu0 %v4808
        %4928 = vmatprep.subr.bf16.mxu0 %v4807
        %4929 = vmatpush1.bf16.msra.mxu0 %v4806
        %4930 = vmatprep.subr.bf16.mxu0 %v4805
        %4931 = vmatpush1.bf16.msra.mxu0 %v4804
        %4932 = vmatprep.subr.bf16.mxu0 %v4803
        %4933 = vmatpush1.bf16.msra.mxu0 %v4802
        %4934 = vmatprep.subr.bf16.mxu0 %v4801
        %4935 = vmatpush1.bf16.msra.mxu0 %v4800
        %4936 = vmatprep.subr.bf16.mxu0 %v4799
        %4937 = vmatpush1.bf16.msra.mxu0 %v4798
        %4938 = vmatprep.subr.bf16.mxu0 %v4797
        %4939 = vmatpush1.bf16.msra.mxu0 %v4796
        %4940 = vmatprep.subr.bf16.mxu0 %v4827
        %4941 = vmatpush2.bf16.msra.mxu0 %v4826
        %4942 = vmatprep.subr.bf16.mxu0 %v4825
        %4943 = vmatpush2.bf16.msra.mxu0 %v4824
        %4944 = vmatprep.subr.bf16.mxu0 %v4823
        %4945 = vmatpush2.bf16.msra.mxu0 %v4822
        %4946 = vmatprep.subr.bf16.mxu0 %v4821
        %4947 = vmatpush2.bf16.msra.mxu0 %v4820
        %4948 = vmatprep.subr.bf16.mxu0 %v4819
        %4949 = vmatpush2.bf16.msra.mxu0 %v4818
        %4950 = vmatprep.subr.bf16.mxu0 %v4817
        %4951 = vmatpush2.bf16.msra.mxu0 %v4816
        %4952 = vmatprep.subr.bf16.mxu0 %v4815
        %4953 = vmatpush2.bf16.msra.mxu0 %v4814
        %4954 = vmatprep.subr.bf16.mxu0 %v4813
        %4955 = vmatpush2.bf16.msra.mxu0 %v4812
        %4956 = vmatprep.mubr.bf16.mxu0 %v4525
        %4957 = vmatmul.mubr.bf16.gmra.mxu0 %v4524
        %v4958 = vpop.f32.mrf.mxu0
        %v4959 = vadd.f32 0.0, %v4958
        %v4960 = vpop.f32.mrf.mxu0
        %v4961 = vadd.f32 0.0, %v4960
        %v4962 = vpop.f32.mrf.mxu0
        %v4963 = vadd.f32 0.0, %v4962
        %v4964 = vpop.f32.mrf.mxu0
        %v4965 = vadd.f32 0.0, %v4964
        %4966 = vmatprep.mubr.bf16.mxu0 %v4529
        %4967 = vmatmul.mubr.bf16.gmra.mxu0 %v4528
        %v4968 = vpop.f32.mrf.mxu0
        %v4969 = vadd.f32 0.0, %v4968
        %v4970 = vpop.f32.mrf.mxu0
        %v4971 = vadd.f32 0.0, %v4970
        %v4972 = vpop.f32.mrf.mxu0
        %v4973 = vadd.f32 0.0, %v4972
        %v4974 = vpop.f32.mrf.mxu0
        %v4975 = vadd.f32 0.0, %v4974
        %4976 = vmatprep.mubr.bf16.mxu0 %v4533
        %4977 = vmatmul.mubr.bf16.gmra.mxu0 %v4532
        %v4978 = vpop.f32.mrf.mxu0
        %v4979 = vadd.f32 0.0, %v4978
        %v4980 = vpop.f32.mrf.mxu0
        %v4981 = vadd.f32 0.0, %v4980
        %v4982 = vpop.f32.mrf.mxu0
        %v4983 = vadd.f32 0.0, %v4982
        %v4984 = vpop.f32.mrf.mxu0
        %v4985 = vadd.f32 0.0, %v4984
        %4986 = vmatprep.mubr.bf16.mxu0 %v4537
        %4987 = vmatmul.mubr.bf16.gmra.mxu0 %v4536
        %v4988 = vpop.f32.mrf.mxu0
        %v4989 = vadd.f32 0.0, %v4988
        %v4990 = vpop.f32.mrf.mxu0
        %v4991 = vadd.f32 0.0, %v4990
        %v4992 = vpop.f32.mrf.mxu0
        %v4993 = vadd.f32 0.0, %v4992
        %v4994 = vpop.f32.mrf.mxu0
        %v4995 = vadd.f32 0.0, %v4994
        %4996 = vdwg.mxu0
        %4997 = vmatprep.subr.bf16.mxu0 %v4843
        %4998 = vmatpush1.bf16.msra.mxu0 %v4842
        %4999 = vmatprep.subr.bf16.mxu0 %v4841
        %5000 = vmatpush1.bf16.msra.mxu0 %v4840
        %5001 = vmatprep.subr.bf16.mxu0 %v4839
        %5002 = vmatpush1.bf16.msra.mxu0 %v4838
        %5003 = vmatprep.subr.bf16.mxu0 %v4837
        %5004 = vmatpush1.bf16.msra.mxu0 %v4836
        %5005 = vmatprep.subr.bf16.mxu0 %v4835
        %5006 = vmatpush1.bf16.msra.mxu0 %v4834
        %5007 = vmatprep.subr.bf16.mxu0 %v4833
        %5008 = vmatpush1.bf16.msra.mxu0 %v4832
        %5009 = vmatprep.subr.bf16.mxu0 %v4831
        %5010 = vmatpush1.bf16.msra.mxu0 %v4830
        %5011 = vmatprep.subr.bf16.mxu0 %v4829
        %5012 = vmatpush1.bf16.msra.mxu0 %v4828
        %5013 = vmatprep.subr.bf16.mxu0 %v4859
        %5014 = vmatpush2.bf16.msra.mxu0 %v4858
        %5015 = vmatprep.subr.bf16.mxu0 %v4857
        %5016 = vmatpush2.bf16.msra.mxu0 %v4856
        %5017 = vmatprep.subr.bf16.mxu0 %v4855
        %5018 = vmatpush2.bf16.msra.mxu0 %v4854
        %5019 = vmatprep.subr.bf16.mxu0 %v4853
        %5020 = vmatpush2.bf16.msra.mxu0 %v4852
        %5021 = vmatprep.subr.bf16.mxu0 %v4851
        %5022 = vmatpush2.bf16.msra.mxu0 %v4850
        %5023 = vmatprep.subr.bf16.mxu0 %v4849
        %5024 = vmatpush2.bf16.msra.mxu0 %v4848
        %5025 = vmatprep.subr.bf16.mxu0 %v4847
        %5026 = vmatpush2.bf16.msra.mxu0 %v4846
        %5027 = vmatprep.subr.bf16.mxu0 %v4845
        %5028 = vmatpush2.bf16.msra.mxu0 %v4844
        %5029 = vmatprep.mubr.bf16.mxu0 %v4527
        %5030 = vmatmul.mubr.bf16.gmra.mxu0 %v4526
        %v5031 = vpop.f32.mrf.mxu0
        %v5032 = vadd.f32 %v4959, %v5031
        %v5033 = vpop.f32.mrf.mxu0
        %v5034 = vadd.f32 %v4961, %v5033
        %v5035 = vpop.f32.mrf.mxu0
        %v5036 = vadd.f32 %v4963, %v5035
        %v5037 = vpop.f32.mrf.mxu0
        %v5038 = vadd.f32 %v4965, %v5037
        %5039 = vmatprep.mubr.bf16.mxu0 %v4531
        %5040 = vmatmul.mubr.bf16.gmra.mxu0 %v4530
        %v5041 = vpop.f32.mrf.mxu0
        %v5042 = vadd.f32 %v4969, %v5041
        %v5043 = vpop.f32.mrf.mxu0
        %v5044 = vadd.f32 %v4971, %v5043
        %v5045 = vpop.f32.mrf.mxu0
        %v5046 = vadd.f32 %v4973, %v5045
        %v5047 = vpop.f32.mrf.mxu0
        %v5048 = vadd.f32 %v4975, %v5047
        %5049 = vmatprep.mubr.bf16.mxu0 %v4535
        %5050 = vmatmul.mubr.bf16.gmra.mxu0 %v4534
        %v5051 = vpop.f32.mrf.mxu0
        %v5052 = vadd.f32 %v4979, %v5051
        %v5053 = vpop.f32.mrf.mxu0
        %v5054 = vadd.f32 %v4981, %v5053
        %v5055 = vpop.f32.mrf.mxu0
        %v5056 = vadd.f32 %v4983, %v5055
        %v5057 = vpop.f32.mrf.mxu0
        %v5058 = vadd.f32 %v4985, %v5057
        %5059 = vmatprep.mubr.bf16.mxu0 %v4539
        %5060 = vmatmul.mubr.bf16.gmra.mxu0 %v4538
        %v5061 = vpop.f32.mrf.mxu0
        %v5062 = vadd.f32 %v4989, %v5061
        %v5063 = vpop.f32.mrf.mxu0
        %v5064 = vadd.f32 %v4991, %v5063
        %v5065 = vpop.f32.mrf.mxu0
        %v5066 = vadd.f32 %v4993, %v5065
        %v5067 = vpop.f32.mrf.mxu0
        %v5068 = vadd.f32 %v4995, %v5067
        %5069 = vdwg.mxu0
        %v5070 = vadd.f32 %v3603, %v5032
        %v5071 = vadd.f32 %v3604, %v5034
        %v5072 = vadd.f32 %v3605, %v5036
        %v5073 = vadd.f32 %v3606, %v5038
        %v5074 = vadd.f32 %v3607, %v5042
        %v5075 = vadd.f32 %v3608, %v5044
        %v5076 = vadd.f32 %v3609, %v5046
        %v5077 = vadd.f32 %v3610, %v5048
        %v5078 = vadd.f32 %v3611, %v5052
        %v5079 = vadd.f32 %v3612, %v5054
        %v5080 = vadd.f32 %v3613, %v5056
        %v5081 = vadd.f32 %v3614, %v5058
        %v5082 = vadd.f32 %v3615, %v5062
        %v5083 = vadd.f32 %v3616, %v5064
        %v5084 = vadd.f32 %v3617, %v5066
        %v5085 = vadd.f32 %v3618, %v5068
        %v5086 = vld [vmem:[%s1118] sm:$0x3]
        %v5088 = vlaneseq
        %v5089 = vshrl.u32 %v5088, 7
        %v5090 = vsub.s32 0, %v5089
        %v5091 = vrot.slane %v5086, %v5090
        %v5092 = vlaneseq
        %v5093 = vshrl.u32 %v5092, 7
        %v5094 = vsub.s32 1, %v5093
        %v5095 = vrot.slane %v5086, %v5094
        %v5098 = vadd.f32 %v5070, %v5091
        %v5099 = vadd.f32 %v5071, %v5095
        %v5100 = vadd.f32 %v5072, %v5091
        %v5101 = vadd.f32 %v5073, %v5095
        %v5102 = vadd.f32 %v5074, %v5091
        %v5103 = vadd.f32 %v5075, %v5095
        %v5104 = vadd.f32 %v5076, %v5091
        %v5105 = vadd.f32 %v5077, %v5095
        %v5106 = vadd.f32 %v5078, %v5091
        %v5107 = vadd.f32 %v5079, %v5095
        %v5108 = vadd.f32 %v5080, %v5091
        %v5109 = vadd.f32 %v5081, %v5095
        %v5110 = vadd.f32 %v5082, %v5091
        %v5111 = vadd.f32 %v5083, %v5095
        %v5112 = vadd.f32 %v5084, %v5091
        %v5113 = vadd.f32 %v5085, %v5095
        %5114 = vst [vmem:[#allocation2] sm:$0xff] %v5098
        %5115 = vst [vmem:[#allocation2 + $0x8] sm:$0xff] %v5099
        %5116 = vst [vmem:[#allocation2 + $0x10] sm:$0xff] %v5100
        %5117 = vst [vmem:[#allocation2 + $0x18] sm:$0xff] %v5101
        %5118 = vst [vmem:[#allocation2 + $0x20] sm:$0xff] %v5102
        %5119 = vst [vmem:[#allocation2 + $0x28] sm:$0xff] %v5103
        %5120 = vst [vmem:[#allocation2 + $0x30] sm:$0xff] %v5104
        %5121 = vst [vmem:[#allocation2 + $0x38] sm:$0xff] %v5105
        %5122 = vst [vmem:[#allocation2 + $0x40] sm:$0xff] %v5106
        %5123 = vst [vmem:[#allocation2 + $0x48] sm:$0xff] %v5107
        %5124 = vst [vmem:[#allocation2 + $0x50] sm:$0xff] %v5108
        %5125 = vst [vmem:[#allocation2 + $0x58] sm:$0xff] %v5109
        %5126 = vst [vmem:[#allocation2 + $0x60] sm:$0xff] %v5110
        %5127 = vst [vmem:[#allocation2 + $0x68] sm:$0xff] %v5111
        %5128 = vst [vmem:[#allocation2 + $0x70] sm:$0xff] %v5112
        %5129 = vst [vmem:[#allocation2 + $0x78] sm:$0xff] %v5113
        %p5130 = scmp.eq.s32.totalorder %s59, 1
        // Predicated region
        $region165: #{tpu_custom_call.1} parent=99 // pred_check
          %p5131 = pneg %p5130
        $region166: #{tpu_custom_call.1} parent=99 // pred_check_branch
          %5133 = sbr.rel (%p5131) target = $region168
        $region167: #{tpu_custom_call.1} parent=99 // pred_region
          %v5134 = vld [vmem:[%s17] sm:$0x3]
          %v5135 = vld [vmem:[%s18] sm:$0x3]
          %v5140 = vrot.slane %v5106, 7
          %vm5141 = vcmask 1041409
          %v5142 = vsel %vm5141, %v5140, %v5098
          %v5143 = vrot.slane %v5107, 7
          %v5144 = vsel %vm5141, %v5143, %v5099
          %vm5147 = vcmask 1041408
          %v5148 = vsel %vm5147, %v5142, 0.0
          %v5149 = vsel %vm5147, %v5144, 0.0
          %v5150 = vadd.f32 %v5148, %v5149
          %5151 = vadd.xlane.f32.xlu0 %v5150
          %v5152 = vpop.xlane.xlu0 %5151
          %v5153 = vmul.f32 %v5152, %v1542
          %v5155 = vrot.slane %v5153, 1
          %v5158 = vsub.f32 %v5098, %v5153
          %v5159 = vsub.f32 %v5099, %v5153
          %v5160 = vsub.f32 %v5106, %v5155
          %v5161 = vsub.f32 %v5107, %v5155
          %v5162 = vmul.f32 %v5158, %v5158
          %v5163 = vmul.f32 %v5159, %v5159
          %v5164 = vmul.f32 %v5160, %v5160
          %v5165 = vmul.f32 %v5161, %v5161
          %v5170 = vrot.slane %v5164, 7
          %v5171 = vsel %vm5141, %v5170, %v5162
          %v5172 = vrot.slane %v5165, 7
          %v5173 = vsel %vm5141, %v5172, %v5163
          %v5176 = vsel %vm5147, %v5171, 0.0
          %v5177 = vsel %vm5147, %v5173, 0.0
          %v5178 = vadd.f32 %v5176, %v5177
          %5179 = vadd.xlane.f32.xlu0 %v5178
          %v5180 = vpop.xlane.xlu0 %5179
          %v5181 = vmul.f32 %v5180, %v1542
          %v5182 = vadd.f32 %v5181, 1e-05
          %v5183 = vrsqrt.pop %v5182
          %v5185 = vrot.slane %v5183, 1
          %v5188 = vmul.f32 %v5158, %v5183
          %v5189 = vmul.f32 %v5159, %v5183
          %v5190 = vmul.f32 %v5160, %v5185
          %v5191 = vmul.f32 %v5161, %v5185
          %v5193 = vlaneseq
          %v5194 = vshrl.u32 %v5193, 7
          %v5195 = vsub.s32 0, %v5194
          %v5196 = vrot.slane %v5134, %v5195
          %v5197 = vlaneseq
          %v5198 = vshrl.u32 %v5197, 7
          %v5199 = vsub.s32 1, %v5198
          %v5200 = vrot.slane %v5134, %v5199
          %v5203 = vmul.f32 %v5188, %v5196
          %v5204 = vmul.f32 %v5189, %v5200
          %v5205 = vmul.f32 %v5190, %v5196
          %v5206 = vmul.f32 %v5191, %v5200
          %v5208 = vlaneseq
          %v5209 = vshrl.u32 %v5208, 7
          %v5210 = vsub.s32 0, %v5209
          %v5211 = vrot.slane %v5135, %v5210
          %v5212 = vlaneseq
          %v5213 = vshrl.u32 %v5212, 7
          %v5214 = vsub.s32 1, %v5213
          %v5215 = vrot.slane %v5135, %v5214
          %v5218 = vadd.f32 %v5203, %v5211
          %v5219 = vadd.f32 %v5204, %v5215
          %v5220 = vadd.f32 %v5205, %v5211
          %v5221 = vadd.f32 %v5206, %v5215
          %v5222 = vpack.c.bf16 %v5218, %v5218
          %v5223 = vpack.c.bf16 %v5219, %v5219
          %v5224 = vpack.c.bf16 %v5220, %v5220
          %v5225 = vpack.c.bf16 %v5221, %v5221
          %v5226 = vld [vmem:[#allocation27] sm:$0xf]
          %v5227 = vld [vmem:[#allocation27 + $0x4] sm:$0xf]
          %v5228 = vld [vmem:[#allocation27 + $0x8] sm:$0xf]
          %v5229 = vld [vmem:[#allocation27 + $0xc] sm:$0xf]
          %v5230 = vld [vmem:[#allocation27 + $0x10] sm:$0xf]
          %v5231 = vld [vmem:[#allocation27 + $0x14] sm:$0xf]
          %v5232 = vld [vmem:[#allocation27 + $0x18] sm:$0xf]
          %v5233 = vld [vmem:[#allocation27 + $0x1c] sm:$0xf]
          %v5234 = vld [vmem:[#allocation27 + $0x20] sm:$0xf]
          %v5235 = vld [vmem:[#allocation27 + $0x24] sm:$0xf]
          %v5236 = vld [vmem:[#allocation27 + $0x28] sm:$0xf]
          %v5237 = vld [vmem:[#allocation27 + $0x2c] sm:$0xf]
          %v5238 = vld [vmem:[#allocation27 + $0x30] sm:$0xf]
          %v5239 = vld [vmem:[#allocation27 + $0x34] sm:$0xf]
          %v5240 = vld [vmem:[#allocation27 + $0x38] sm:$0xf]
          %v5241 = vld [vmem:[#allocation27 + $0x3c] sm:$0xf]
          %v5242 = vld [vmem:[#allocation27 + $0x40] sm:$0xf]
          %v5243 = vld [vmem:[#allocation27 + $0x44] sm:$0xf]
          %v5244 = vld [vmem:[#allocation27 + $0x48] sm:$0xf]
          %v5245 = vld [vmem:[#allocation27 + $0x4c] sm:$0xf]
          %v5246 = vld [vmem:[#allocation27 + $0x50] sm:$0xf]
          %v5247 = vld [vmem:[#allocation27 + $0x54] sm:$0xf]
          %v5248 = vld [vmem:[#allocation27 + $0x58] sm:$0xf]
          %v5249 = vld [vmem:[#allocation27 + $0x5c] sm:$0xf]
          %v5250 = vld [vmem:[#allocation27 + $0x60] sm:$0xf]
          %v5251 = vld [vmem:[#allocation27 + $0x64] sm:$0xf]
          %v5252 = vld [vmem:[#allocation27 + $0x68] sm:$0xf]
          %v5253 = vld [vmem:[#allocation27 + $0x6c] sm:$0xf]
          %v5254 = vld [vmem:[#allocation27 + $0x70] sm:$0xf]
          %v5255 = vld [vmem:[#allocation27 + $0x74] sm:$0xf]
          %v5256 = vld [vmem:[#allocation27 + $0x78] sm:$0xf]
          %v5257 = vld [vmem:[#allocation27 + $0x7c] sm:$0xf]
          %v5262 = vunpack.c.l.b16 %v5222
          %v5263 = vunpack.c.l.b16 %v5223
          %v5264 = vunpack.c.l.b16 %v5224
          %v5265 = vunpack.c.l.b16 %v5225
          %v5266 = vrot.slane %v5264, 7
          %v5267 = vsel %vm5141, %v5266, %v5262
          %v5268 = vrot.slane %v5265, 7
          %v5269 = vsel %vm5141, %v5268, %v5263
          %v5270 = vpack.c.b16 %v5267, %v5267
          %v5271 = vpack.c.b16 %v5269, %v5269
          %v5306 = vunpack.c.l.b16 %v5226
          %v5307 = vunpack.c.l.b16 %v5227
          %v5308 = vunpack.c.l.b16 %v5228
          %v5309 = vunpack.c.l.b16 %v5229
          %v5310 = vunpack.c.l.b16 %v5230
          %v5311 = vunpack.c.l.b16 %v5231
          %v5312 = vunpack.c.l.b16 %v5232
          %v5313 = vunpack.c.l.b16 %v5233
          %v5314 = vunpack.c.l.b16 %v5234
          %v5315 = vunpack.c.l.b16 %v5235
          %v5316 = vunpack.c.l.b16 %v5236
          %v5317 = vunpack.c.l.b16 %v5237
          %v5318 = vunpack.c.l.b16 %v5238
          %v5319 = vunpack.c.l.b16 %v5239
          %v5320 = vunpack.c.l.b16 %v5240
          %v5321 = vunpack.c.l.b16 %v5241
          %v5322 = vunpack.c.l.b16 %v5242
          %v5323 = vunpack.c.l.b16 %v5243
          %v5324 = vunpack.c.l.b16 %v5244
          %v5325 = vunpack.c.l.b16 %v5245
          %v5326 = vunpack.c.l.b16 %v5246
          %v5327 = vunpack.c.l.b16 %v5247
          %v5328 = vunpack.c.l.b16 %v5248
          %v5329 = vunpack.c.l.b16 %v5249
          %v5330 = vunpack.c.l.b16 %v5250
          %v5331 = vunpack.c.l.b16 %v5251
          %v5332 = vunpack.c.l.b16 %v5252
          %v5333 = vunpack.c.l.b16 %v5253
          %v5334 = vunpack.c.l.b16 %v5254
          %v5335 = vunpack.c.l.b16 %v5255
          %v5336 = vunpack.c.l.b16 %v5256
          %v5337 = vunpack.c.l.b16 %v5257
          %v5338 = vpack.c.b16 %v5307, %v5306
          %v5339 = vpack.c.b16 %v5309, %v5308
          %v5340 = vpack.c.b16 %v5311, %v5310
          %v5341 = vpack.c.b16 %v5313, %v5312
          %v5342 = vpack.c.b16 %v5315, %v5314
          %v5343 = vpack.c.b16 %v5317, %v5316
          %v5344 = vpack.c.b16 %v5319, %v5318
          %v5345 = vpack.c.b16 %v5321, %v5320
          %v5346 = vpack.c.b16 %v5323, %v5322
          %v5347 = vpack.c.b16 %v5325, %v5324
          %v5348 = vpack.c.b16 %v5327, %v5326
          %v5349 = vpack.c.b16 %v5329, %v5328
          %v5350 = vpack.c.b16 %v5331, %v5330
          %v5351 = vpack.c.b16 %v5333, %v5332
          %v5352 = vpack.c.b16 %v5335, %v5334
          %v5353 = vpack.c.b16 %v5337, %v5336
          %5370 = vmatprep.subr.bf16.mxu0 0
          %5371 = vmatpush1.bf16.msra.mxu0 %v5345
          %5372 = vmatprep.subr.bf16.mxu0 0
          %5373 = vmatpush1.bf16.msra.mxu0 %v5344
          %5374 = vmatprep.subr.bf16.mxu0 0
          %5375 = vmatpush1.bf16.msra.mxu0 %v5343
          %5376 = vmatprep.subr.bf16.mxu0 0
          %5377 = vmatpush1.bf16.msra.mxu0 %v5342
          %5378 = vmatprep.subr.bf16.mxu0 0
          %5379 = vmatpush1.bf16.msra.mxu0 %v5341
          %5380 = vmatprep.subr.bf16.mxu0 0
          %5381 = vmatpush1.bf16.msra.mxu0 %v5340
          %5382 = vmatprep.subr.bf16.mxu0 0
          %5383 = vmatpush1.bf16.msra.mxu0 %v5339
          %5384 = vmatprep.subr.bf16.mxu0 0
          %5385 = vmatpush1.bf16.msra.mxu0 %v5338
          %5386 = vmatprep.subr.bf16.mxu0 0
          %5387 = vmatpush2.bf16.msra.mxu0 %v5353
          %5388 = vmatprep.subr.bf16.mxu0 0
          %5389 = vmatpush2.bf16.msra.mxu0 %v5352
          %5390 = vmatprep.subr.bf16.mxu0 0
          %5391 = vmatpush2.bf16.msra.mxu0 %v5351
          %5392 = vmatprep.subr.bf16.mxu0 0
          %5393 = vmatpush2.bf16.msra.mxu0 %v5350
          %5394 = vmatprep.subr.bf16.mxu0 0
          %5395 = vmatpush2.bf16.msra.mxu0 %v5349
          %5396 = vmatprep.subr.bf16.mxu0 0
          %5397 = vmatpush2.bf16.msra.mxu0 %v5348
          %5398 = vmatprep.subr.bf16.mxu0 0
          %5399 = vmatpush2.bf16.msra.mxu0 %v5347
          %5400 = vmatprep.subr.bf16.mxu0 0
          %5401 = vmatpush2.bf16.msra.mxu0 %v5346
          %5402 = vmatprep.mubr.bf16.mxu0 %v5271
          %5403 = vmatmul.mubr.bf16.gmra.mxu0 %v5270
          %v5404 = vpop.f32.mrf.mxu0
          %v5405 = vadd.f32 0.0, %v5404
          %v5406 = vpop.f32.mrf.mxu0
          %v5407 = vpop.f32.mrf.mxu0
          %v5408 = vpop.f32.mrf.mxu0
          %5409 = vdwg.mxu0
          %v5412 = vunpack.c.l.s4 1966171168
          %v5413 = vunpack.c.0.s8 %v5412
          %v5414 = vlaneseq
          %v5415 = vshrl.u32 %v5414, 7
          %v5416 = vsub.s32 %v5413, %v5415
          %v5417 = vrot.slane %v5405, %v5416
          %v5418 = vcombine.high %v5417, %v5417
          %v5420 = vunpack.c.l.s4 1966171168
          %v5421 = vunpack.c.0.s8 %v5420
          %v5422 = vlaneseq
          %v5423 = vshrl.u32 %v5422, 7
          %v5424 = vsub.s32 %v5421, %v5423
          %v5425 = vrot.slane %v5417, %v5424
          %v5427 = vunpack.c.l.s4 1966171168
          %v5428 = vunpack.c.0.s8 %v5427
          %v5429 = vlaneseq
          %v5430 = vshrl.u32 %v5429, 7
          %v5431 = vsub.s32 %v5428, %v5430
          %v5432 = vrot.slane %v5418, %v5431
          %5435 = vst [vmem:[%s1105] sm:$0x1] %v5425
          %5436 = vst [vmem:[%s1105 + $0x1] sm:$0x1] %v5432
        $region168: #{tpu_custom_call.1} parent=99 // pred_fallthru
          _
        %s5437 = sand.u32 %s559, 1
        %s5438 = scalar_lea.sflag [#allocation6], %s5437
        %s5439 = sand.u32 %s559, 1
        %s5440 = smul.addr %s5439, 2
        %s5441 = scalar_lea.vmem [#allocation28], %s5440
        // Predicated region
        $region169: #{tpu_custom_call.1} parent=99 // pred_check
          %p5442 = pneg %p569
        $region170: #{tpu_custom_call.1} parent=99 // pred_check_branch
          %5444 = sbr.rel (%p5442) target = $region172
        $region171: #{tpu_custom_call.1} parent=99 // pred_region
          %s5445 = smul.u32 2, %s58
          %s5447 = ssub.s32 32, 32
          %5448 = vsyncadd %s5438, %s5447
          %s5449 = smul.addr %s5445, 16
          %s5450 = scalar_lea.hbm %s20, %s5449
          %s5451 = sshll.u32 %s5441, 4
          %s5452 = int_to_ptr.vmem [resolvable:$true] %s5451
          %5457 = dma.vmem_to_hbm [thread:$0]  %s5452, 32, %s5450, %s5438, 16, 16, 1
        $region172: #{tpu_custom_call.1} parent=99 // pred_fallthru
          _
      $region100: #{tpu_custom_call.1} parent=5 // pred_fallthru
        _
      %p5458 = scmp.le.s32.totalorder 2, %s49
      // Predicated region
      $region173: #{tpu_custom_call.1} parent=5 // pred_check
        %p5459 = pneg %p5458
      $region174: #{tpu_custom_call.1} parent=5 // pred_check_branch
        %5461 = sbr.rel (%p5459) target = $region176
      $region175: #{tpu_custom_call.1} parent=5 // pred_region
        %s5462 = ssub.s32 %s49, 2
        // Predicated region
        $region177: #{tpu_custom_call.1} parent=175 // pred_check
          %p5463 = pneg %p575
        $region178: #{tpu_custom_call.1} parent=175 // pred_check_branch
          %5465 = sbr.rel (%p5463) target = $region180
        $region179: #{tpu_custom_call.1} parent=175 // pred_region
          %s5466 = sand.u32 %s560, 1
          %s5467 = scalar_lea.sflag [#allocation6], %s5466
          %s5468 = sand.u32 %s560, 1
          %s5469 = smul.addr %s5468, 2
          %s5470 = scalar_lea.vmem [#allocation28], %s5469
          %5471 = dma.done %s5467, 32
        $region180: #{tpu_custom_call.1} parent=175 // pred_fallthru
          _
      $region176: #{tpu_custom_call.1} parent=5 // pred_fallthru
        _
    $region6: #{tpu_custom_call.1} parent=1 // loop_footer
      %s53 = sadd.s32 1, %s49
    $region7: #{tpu_custom_call.1} parent=1 // loop_footer_branch
      %48 = sbr.rel target = $region3
    $region8: #{tpu_custom_call.1} parent=1 // loop_exit
      _
    %5472 = vsyncpa [#allocation5], 1
    %s5473 = scalar_lea.sflag [#allocation5], 1
    %5474 = vsyncpa %s5473, 1
    %5475 = vsyncpa [#allocation8], 1
    %5476 = vsyncpa [#allocation11], 1
    %5477 = vsyncpa [#allocation14], 1
    %s5478 = scalar_lea.sflag [#allocation14], 1
    %5479 = vsyncpa %s5478, 1
    %5480 = vsyncpa [#allocation17], 1
    %s5481 = scalar_lea.sflag [#allocation17], 1
    %5482 = vsyncpa %s5481, 1
    %5483 = vsyncpa [#allocation20], 1
    %s5484 = scalar_lea.sflag [#allocation20], 1
    %5485 = vsyncpa %s5484, 1
    %5486 = vsyncpa [#allocation23], 1
    %s5487 = scalar_lea.sflag [#allocation23], 1
    %5488 = vsyncpa %s5487, 1
    %5489 = vsyncpa [#allocation26], 1
    %s5490 = scalar_lea.sflag [#allocation26], 1
    %5491 = vsyncpa %s5490, 1
    %5492 = vsyncpa [#allocation6], 1
    %s5493 = scalar_lea.sflag [#allocation6], 1
    %5494 = vsyncpa %s5493, 1

</llo_original>
